<compile_context>
chip_gen: v7x
topology: tpu7x:2x2x1
jax: 0.10.0
libtpu: 0.0.40
codegen_flags: <defaults>
</compile_context>

<pallas_src>
import functools

import jax
import jax.numpy as jnp
from jax.experimental import pallas as pl
from jax.experimental.pallas import tpu as pltpu

EPS = 1e-5
LANE = 128   # lane width: channel dims are padded to a multiple of this


def _rup(n, m):
    return ((n + m - 1) // m) * m


def _pick_row_tile(ho, wo, max_rows=512):
    """Largest divisor of `ho` whose (th*wo)-row tile stays <= max_rows rows and
    is sublane-aligned (or the whole image as fallback)."""
    start = min(ho, max(1, max_rows // max(wo, 1)))
    for th in range(start, 0, -1):
        if ho % th == 0 and (th == ho or (th * wo) % 8 == 0):
            return th
    return ho


def _pick_tm(m, c):
    """Row-tile for the elementwise pass: big (up to ~4 MiB bf16 per block)."""
    cap = max(8, (1 << 21) // max(c, 1))
    for tm in (1024, 512, 256, 128, 64, 32, 16, 8):
        if tm <= cap and m % tm == 0:
            return tm
    return m


# ---------------------------------------------------------------------------
# Pallas kernels
# ---------------------------------------------------------------------------
def make_conv_poly_kernel(taps, stride, th, wo, cin_p):
    """KxK strided conv on a polyphase input.  Taps are packed along the
    contraction dim into a VMEM patch scratch, then a single K = ntaps*cin_p
    MXU matmul produces the row tile.  Also emits per-tile BN (sum, sum_sq)."""

    def kernel(x_ref, w_ref, y_ref, st_ref, patch_ref):
        # x_ref    : (1, s*s, Hq, Wq, cin_p) bf16 (polyphase, spatially padded)
        # w_ref    : (ntaps*cin_p, cout_p)   bf16
        # y_ref    : (1, th*wo, cout_p)      bf16 raw conv output row-tile
        # st_ref   : (1, 1, 2, cout_p)       f32  [sum, sum_sq] partials
        # patch_ref: (th*wo, ntaps*cin_p)    bf16 in-kernel im2col scratch
        r = pl.program_id(1)
        h0 = r * th
        for t, (ky, kx) in enumerate(taps):
            phase = (ky % stride) * stride + (kx % stride)
            part = x_ref[0, phase,
                         pl.ds(h0 + ky // stride, th),
                         pl.ds(kx // stride, wo), :]
            patch_ref[:, t * cin_p:(t + 1) * cin_p] = part.reshape(th * wo, cin_p)
        acc = jnp.dot(patch_ref[...], w_ref[...],
                      preferred_element_type=jnp.float32)
        y_ref[0] = acc.astype(y_ref.dtype)
        s1 = jnp.sum(acc, axis=0, keepdims=True)
        s2 = jnp.sum(acc * acc, axis=0, keepdims=True)
        st_ref[...] = jnp.concatenate([s1, s2], axis=0).reshape(st_ref.shape)

    return kernel


def make_conv2_fused_kernel(th, ho, wo, cp):
    """3x3 stride-1 conv with a fused bn1+ReLU prologue.  On the first row tile
    of each image the (spatially zero-padded) raw conv1 output is normalized,
    ReLU'd, its pad border re-zeroed, and parked in a VMEM scratch reused by all
    row tiles of that image (the row-tile grid axis is 'arbitrary')."""

    def kernel(y1p_ref, a_ref, b_ref, w_ref, y_ref, st_ref, act_ref, patch_ref):
        r = pl.program_id(1)

        @pl.when(r == 0)
        def _():
            act = jnp.maximum(
                y1p_ref[0].astype(jnp.float32) * a_ref[...] + b_ref[...], 0.0)
            row = jax.lax.broadcasted_iota(jnp.int32, act.shape, 0)
            col = jax.lax.broadcasted_iota(jnp.int32, act.shape, 1)
            border = (row == 0) | (row == ho + 1) | (col == 0) | (col == wo + 1)
            act_ref[...] = jnp.where(border, 0.0, act).astype(act_ref.dtype)

        h0 = r * th
        for t in range(9):
            ky, kx = t // 3, t % 3
            part = act_ref[pl.ds(h0 + ky, th), pl.ds(kx, wo), :]
            patch_ref[:, t * cp:(t + 1) * cp] = part.reshape(th * wo, cp)
        acc = jnp.dot(patch_ref[...], w_ref[...],
                      preferred_element_type=jnp.float32)
        y_ref[0] = acc.astype(y_ref.dtype)
        s1 = jnp.sum(acc, axis=0, keepdims=True)
        s2 = jnp.sum(acc * acc, axis=0, keepdims=True)
        st_ref[...] = jnp.concatenate([s1, s2], axis=0).reshape(st_ref.shape)

    return kernel


def conv1x1_stats_kernel(x_ref, w_ref, y_ref, st_ref):
    """1x1 (projection shortcut) conv on an already stride-sliced input tile."""
    th, wo, cin_p = x_ref.shape[1], x_ref.shape[2], x_ref.shape[3]
    acc = jnp.dot(x_ref[0].reshape(th * wo, cin_p), w_ref[...],
                  preferred_element_type=jnp.float32)
    y_ref[0] = acc.astype(y_ref.dtype)
    s1 = jnp.sum(acc, axis=0, keepdims=True)
    s2 = jnp.sum(acc * acc, axis=0, keepdims=True)
    st_ref[...] = jnp.concatenate([s1, s2], axis=0).reshape(st_ref.shape)


def bn_add_relu_kernel(y_ref, a_ref, b_ref, r_ref, o_ref):
    # out = relu(y*a2 + b2 + residual)
    out = (y_ref[...].astype(jnp.float32) * a_ref[...] + b_ref[...]
           + r_ref[...].astype(jnp.float32))
    o_ref[...] = jnp.maximum(out, 0.0).astype(o_ref.dtype)


def bn_proj_add_relu_kernel(y_ref, a_ref, b_ref, ys_ref, as_ref, bs_ref, o_ref):
    # out = relu(y*a2 + b2 + (ysc*asc + bsc))
    main = y_ref[...].astype(jnp.float32) * a_ref[...] + b_ref[...]
    sc = ys_ref[...].astype(jnp.float32) * as_ref[...] + bs_ref[...]
    o_ref[...] = jnp.maximum(main + sc, 0.0).astype(o_ref.dtype)


# ---------------------------------------------------------------------------
# Host-side glue (layout only: pad / polyphase / weight reshape / tiny reductions)
# ---------------------------------------------------------------------------
def _poly_pad(x_nhwc, pad, stride):
    """Zero-pad spatially, then polyphase-split by `stride` so the conv kernel
    only ever needs unit-stride slices (one XLA relayout pass, bf16 in/out)."""
    n, h, w, c = x_nhwc.shape
    hp, wp = h + 2 * pad, w + 2 * pad
    eh, ew = (-hp) % stride, (-wp) % stride
    xp = jnp.pad(x_nhwc, ((0, 0), (pad, pad + eh), (pad, pad + ew), (0, 0)))
    hp, wp = hp + eh, wp + ew
    xq = xp.reshape(n, hp // stride, stride, wp // stride, stride, c)
    xq = jnp.transpose(xq, (0, 2, 4, 1, 3, 5))
    return xq.reshape(n, stride * stride, hp // stride, wp // stride, c)


def _w_flat(w_oihw, cin_p, cout_p):
    """(Cout,Cin,KH,KW) -> (KH*KW*cin_p, cout_p) bf16, tap-major / channel-minor
    (matches the in-kernel patch layout)."""
    cout, cin, kh, kw = w_oihw.shape
    wt = jnp.transpose(w_oihw, (2, 3, 1, 0))
    wt = jnp.pad(wt, ((0, 0), (0, 0), (0, cin_p - cin), (0, cout_p - cout)))
    return wt.reshape(kh * kw * cin_p, cout_p).astype(jnp.bfloat16)


def _bn_coeffs(stats, m_rows, gamma, beta, cout_p):
    """Fold per-tile (sum, sum_sq) partials into per-channel scale/shift."""
    s = jnp.sum(stats, axis=(0, 1))                              # (2, cout_p)
    mean = s[0] / m_rows
    var = jnp.maximum(s[1] / m_rows - mean * mean, 0.0)          # clamp cancellation
    g = jnp.pad(gamma, (0, cout_p - gamma.shape[0]))
    b = jnp.pad(beta, (0, cout_p - beta.shape[0]))
    a = g * jax.lax.rsqrt(var + EPS)
    return a.reshape(1, -1), (b - mean * a).reshape(1, -1)


def _conv_poly(x_nhwc_p, w_oihw, stride, pad, cout_p):
    """KxK strided conv (in-kernel im2col + merged-K matmul).  Returns the raw
    conv output (N, Ho*Wo, cout_p) bf16 and BN partials (N, R, 2, cout_p) f32."""
    n, h, w, cin_p = x_nhwc_p.shape
    _, _, kh, kw = w_oihw.shape
    ho = (h + 2 * pad - kh) // stride + 1
    wo = (w + 2 * pad - kw) // stride + 1
    th = _pick_row_tile(ho, wo)
    r_tiles = ho // th
    taps = [(ky, kx) for ky in range(kh) for kx in range(kw)]
    ntaps = len(taps)

    xq = _poly_pad(x_nhwc_p, pad, stride)          # (N, s*s, Hq, Wq, cin_p) bf16
    _, ss, hq, wq, _ = xq.shape
    wk = _w_flat(w_oihw, cin_p, cout_p)            # (ntaps*cin_p, cout_p) bf16

    y, st = pl.pallas_call(
        make_conv_poly_kernel(taps, stride, th, wo, cin_p),
        out_shape=(jax.ShapeDtypeStruct((n, ho * wo, cout_p), jnp.bfloat16),
                   jax.ShapeDtypeStruct((n, r_tiles, 2, cout_p), jnp.float32)),
        grid=(n, r_tiles),
        in_specs=[
            pl.BlockSpec((1, ss, hq, wq, cin_p), lambda i, j: (i, 0, 0, 0, 0)),
            pl.BlockSpec((ntaps * cin_p, cout_p), lambda i, j: (0, 0)),
        ],
        out_specs=(
            pl.BlockSpec((1, th * wo, cout_p), lambda i, j: (i, j, 0)),
            pl.BlockSpec((1, 1, 2, cout_p), lambda i, j: (i, j, 0, 0)),
        ),
        scratch_shapes=[pltpu.VMEM((th * wo, ntaps * cin_p), jnp.bfloat16)],
        compiler_params=pltpu.CompilerParams(
            dimension_semantics=("parallel", "parallel")),
    )(xq, wk)
    return y, st, ho, wo


def _conv2_fused(y1, a1, b1, w_oihw, n, ho, wo, cp):
    """conv2 (3x3, stride 1, pad 1) with bn1+ReLU fused into its prologue."""
    th = _pick_row_tile(ho, wo)
    r_tiles = ho // th
    y1p = jnp.pad(y1.reshape(n, ho, wo, cp),
                  ((0, 0), (1, 1), (1, 1), (0, 0)))              # bf16 pad pass
    wk = _w_flat(w_oihw, cp, cp)

    y2, st = pl.pallas_call(
        make_conv2_fused_kernel(th, ho, wo, cp),
        out_shape=(jax.ShapeDtypeStruct((n, ho * wo, cp), jnp.bfloat16),
                   jax.ShapeDtypeStruct((n, r_tiles, 2, cp), jnp.float32)),
        grid=(n, r_tiles),
        in_specs=[
            pl.BlockSpec((1, ho + 2, wo + 2, cp), lambda i, j: (i, 0, 0, 0)),
            pl.BlockSpec((1, cp), lambda i, j: (0, 0)),
            pl.BlockSpec((1, cp), lambda i, j: (0, 0)),
            pl.BlockSpec((9 * cp, cp), lambda i, j: (0, 0)),
        ],
        out_specs=(
            pl.BlockSpec((1, th * wo, cp), lambda i, j: (i, j, 0)),
            pl.BlockSpec((1, 1, 2, cp), lambda i, j: (i, j, 0, 0)),
        ),
        scratch_shapes=[pltpu.VMEM((ho + 2, wo + 2, cp), jnp.bfloat16),
                        pltpu.VMEM((th * wo, 9 * cp), jnp.bfloat16)],
        compiler_params=pltpu.CompilerParams(
            dimension_semantics=("parallel", "arbitrary")),
    )(y1p, a1, b1, wk)
    return y2, st


def _conv1x1_strided(x_nhwc_p, w_oihw, stride, cout_p):
    """Projection shortcut: 1x1 stride-s conv on a plain strided slice (only
    polyphase phase 0 -> stride^2 less input DMA than the generic path)."""
    xs = x_nhwc_p[:, ::stride, ::stride, :]
    n, ho, wo, cin_p = xs.shape
    th = _pick_row_tile(ho, wo)
    r_tiles = ho // th
    wk = _w_flat(w_oihw, cin_p, cout_p)            # (cin_p, cout_p)

    y, st = pl.pallas_call(
        conv1x1_stats_kernel,
        out_shape=(jax.ShapeDtypeStruct((n, ho * wo, cout_p), jnp.bfloat16),
                   jax.ShapeDtypeStruct((n, r_tiles, 2, cout_p), jnp.float32)),
        grid=(n, r_tiles),
        in_specs=[
            pl.BlockSpec((1, th, wo, cin_p), lambda i, j: (i, j, 0, 0)),
            pl.BlockSpec((cin_p, cout_p), lambda i, j: (0, 0)),
        ],
        out_specs=(
            pl.BlockSpec((1, th * wo, cout_p), lambda i, j: (i, j, 0)),
            pl.BlockSpec((1, 1, 2, cout_p), lambda i, j: (i, j, 0, 0)),
        ),
        compiler_params=pltpu.CompilerParams(
            dimension_semantics=("parallel", "parallel")),
    )(xs, wk)
    return y, st


def _ew_call(kernel, out_dtype, args, tiled, cp):
    """Row-tiled, lane-dense elementwise tail (BN apply / residual / ReLU).
    Folds 8 rows into the lane dim for wider lane-dense stores when possible."""
    m = args[0].shape[0]
    fold = 8 if m % 8 == 0 else 1
    me, ce = m // fold, cp * fold

    def prep(x, is_tiled):
        if is_tiled:
            return x.reshape(me, ce)
        return jnp.tile(x, (1, fold)) if fold > 1 else x

    args2 = [prep(x, t) for x, t in zip(args, tiled)]
    tm = _pick_tm(me, ce)
    in_specs = [
        pl.BlockSpec((tm, ce), lambda i: (i, 0)) if is_tiled
        else pl.BlockSpec((1, ce), lambda i: (0, 0))
        for is_tiled in tiled
    ]
    out = pl.pallas_call(
        kernel,
        out_shape=jax.ShapeDtypeStruct((me, ce), out_dtype),
        grid=(me // tm,),
        in_specs=in_specs,
        out_specs=pl.BlockSpec((tm, ce), lambda i: (i, 0)),
        compiler_params=pltpu.CompilerParams(dimension_semantics=("parallel",)),
    )(*args2)
    return out.reshape(m, cp)


# ---------------------------------------------------------------------------
# BasicBlock forward
# ---------------------------------------------------------------------------
@functools.partial(jax.jit, static_argnums=2)
def basic_block_forward(params, x_nchw, stride):
    n, cin = x_nchw.shape[0], x_nchw.shape[1]
    planes = params["w1_oihw"].shape[0]
    cin_p, cout_p = _rup(cin, LANE), _rup(planes, LANE)

    # One fused relayout: NCHW -> NHWC, lane-dense channel pad, bf16 cast.
    x_nhwc_p = jnp.pad(jnp.transpose(x_nchw, (0, 2, 3, 1)),
                       ((0, 0), (0, 0), (0, 0), (0, cin_p - cin))
                       ).astype(jnp.bfloat16)

    # conv1 (+ single-pass BN partials); bn1 coefficients from f32 accumulators.
    y1, st1, ho, wo = _conv_poly(x_nhwc_p, params["w1_oihw"], stride, 1, cout_p)
    m = n * ho * wo
    a1, b1 = _bn_coeffs(st1, m, params["g1"], params["b1"], cout_p)

    # conv2 with bn1+ReLU fused into its prologue (no out1 intermediate).
    y2, st2 = _conv2_fused(y1, a1, b1, params["w2_oihw"], n, ho, wo, cout_p)
    a2, b2 = _bn_coeffs(st2, m, params["g2"], params["b2"], cout_p)

    if stride != 1 or cin != planes:
        ysc, stsc = _conv1x1_strided(x_nhwc_p, params["ws_oihw"], stride, cout_p)
        asc, bsc = _bn_coeffs(stsc, m, params["gs"], params["bs"], cout_p)
        out = _ew_call(bn_proj_add_relu_kernel, jnp.bfloat16,
                       (y2.reshape(m, cout_p), a2, b2,
                        ysc.reshape(m, cout_p), asc, bsc),
                       (True, False, False, True, False, False), cout_p)
    else:
        resid = x_nhwc_p.reshape(m, cin_p)
        out = _ew_call(bn_add_relu_kernel, jnp.bfloat16,
                       (y2.reshape(m, cout_p), a2, b2, resid),
                       (True, False, False, True), cout_p)

    out = out.reshape(n, ho, wo, cout_p)[..., :planes]
    return jnp.transpose(out, (0, 3, 1, 2)).astype(jnp.float32)   # back to NCHW


# ---------------------------------------------------------------------------
# Parameter init + pure-JAX reference (for correctness check)
# ---------------------------------------------------------------------------
def init_params(key, in_planes, planes, stride):
    ks = jax.random.split(key, 6)

    def conv_init(k, shape):
        fan_in = shape[1] * shape[2] * shape[3]
        bound = 1.0 / jnp.sqrt(jnp.float32(fan_in))
        return jax.random.uniform(k, shape, jnp.float32, -bound, bound)

    def bn_init(k, c):
        g = 1.0 + 0.1 * jax.random.normal(k, (c,), jnp.float32)
        b = 0.1 * jax.random.normal(jax.random.fold_in(k, 1), (c,), jnp.float32)
        return g, b

    p = {}
    p["w1_oihw"] = conv_init(ks[0], (planes, in_planes, 3, 3))
    p["w2_oihw"] = conv_init(ks[1], (planes, planes, 3, 3))
    p["g1"], p["b1"] = bn_init(ks[2], planes)
    p["g2"], p["b2"] = bn_init(ks[3], planes)
    if stride != 1 or in_planes != planes:
        p["ws_oihw"] = conv_init(ks[4], (planes, in_planes, 1, 1))
        p["gs"], p["bs"] = bn_init(ks[5], planes)
    return p


def reference_forward(params, x_nchw, stride):
    def conv(x, w, s, pad):
        return jax.lax.conv_general_dilated(
            x, w, (s, s), ((pad, pad), (pad, pad)),
            dimension_numbers=("NCHW", "OIHW", "NCHW"),
            precision=jax.lax.Precision.HIGHEST)

    def bn(y, gamma, beta):
        mu = jnp.mean(y, axis=(0, 2, 3), keepdims=True)
        var = jnp.mean((y - mu) ** 2, axis=(0, 2, 3), keepdims=True)
        return (gamma.reshape(1, -1, 1, 1) * (y - mu) * jax.lax.rsqrt(var + EPS)
                + beta.reshape(1, -1, 1, 1))

    out = jax.nn.relu(bn(conv(x_nchw, params["w1_oihw"], stride, 1),
                         params["g1"], params["b1"]))
    out = bn(conv(out, params["w2_oihw"], 1, 1), params["g2"], params["b2"])
    if "ws_oihw" in params:
        sc = bn(conv(x_nchw, params["ws_oihw"], stride, 0), params["gs"], params["bs"])
    else:
        sc = x_nchw
    return jax.nn.relu(out + sc)


# ---------------------------------------------------------------------------
if __name__ == "__main__":
    key = jax.random.PRNGKey(0)
    keys = jax.random.split(key, 6)
    # bf16 MXU operands + bf16 intermediates (f32 accumulation / f32 BN stats)
    # vs a full-f32 reference -> loose tolerance.
    TOL = 1e-1

    # Case 1: projection shortcut (stride=2, channel change): (2,4,16,16)->(2,8,8,8)
    x = jax.random.normal(keys[0], (2, 4, 16, 16), jnp.float32)
    params = init_params(keys[1], 4, 8, 2)
    out = jax.block_until_ready(basic_block_forward(params, x, 2))
    ref = jax.block_until_ready(reference_forward(params, x, 2))
    assert out.shape == ref.shape == (2, 8, 8, 8), out.shape
    err = float(jnp.max(jnp.abs(out - ref)))
    assert jnp.allclose(out, ref, rtol=TOL, atol=TOL), err

    # Case 2: identity shortcut (stride=1, same channels): (2,8,16,16)->(2,8,16,16)
    x2 = jax.random.normal(keys[2], (2, 8, 16, 16), jnp.float32)
    params2 = init_params(keys[3], 8, 8, 1)
    out2 = jax.block_until_ready(basic_block_forward(params2, x2, 1))
    ref2 = jax.block_until_ready(reference_forward(params2, x2, 1))
    assert out2.shape == ref2.shape == (2, 8, 16, 16), out2.shape
    err2 = float(jnp.max(jnp.abs(out2 - ref2)))
    assert jnp.allclose(out2, ref2, rtol=TOL, atol=TOL), err2

    # Case 3: larger spatial extent so the row-tile grid axis has >1 step
    # (exercises the multi-tile conv path and the persistent bn1+ReLU scratch).
    x3 = jax.random.normal(keys[4], (2, 8, 24, 24), jnp.float32)
    params3 = init_params(keys[5], 8, 8, 1)
    out3 = jax.block_until_ready(basic_block_forward(params3, x3, 1))
    ref3 = jax.block_until_ready(reference_forward(params3, x3, 1))
    assert out3.shape == ref3.shape == (2, 8, 24, 24), out3.shape
    err3 = float(jnp.max(jnp.abs(out3 - ref3)))
    assert jnp.allclose(out3, ref3, rtol=TOL, atol=TOL), err3

    print("KERNEL_OK")
</pallas_src>

<mosaic_0001>
module attributes {stable_mosaic.version = 11 : i64} {
  func.func @kernel(%arg0: i32, %arg1: i32, %arg2: memref<1x4x9x9x128xbf16, #tpu.memory_space<vmem>>, %arg3: memref<1152x128xbf16, #tpu.memory_space<vmem>>, %arg4: memref<1x64x128xbf16, #tpu.memory_space<vmem>>, %arg5: memref<1x1x2x128xf32, #tpu.memory_space<vmem>>, %arg6: memref<64x1152xbf16, #tpu.memory_space<vmem>>) attributes {dimension_semantics = [#tpu.dimension_semantics<parallel>, #tpu.dimension_semantics<parallel>], iteration_bounds = array<i64: 2, 1>, scalar_prefetch = 0 : i64, scratch_operands = 1 : i64, tpu.core_type = #tpu.core_type<tc>, window_params = [{transform_indices = @transform_0, window_bounds = array<i64: 1, 4, 9, 9, 128>}, {pipeline_mode = #tpu.pipeline_mode<synchronous>, transform_indices = @transform_1, window_bounds = array<i64: 1152, 128>}, {transform_indices = @transform_2, window_bounds = array<i64: 1, 64, 128>}, {transform_indices = @transform_3, window_bounds = array<i64: 1, 1, 2, 128>}]} {
    %c8_i32 = arith.constant 8 : i32
    %0 = arith.muli %arg1, %c8_i32 : i32
    %c0_i32 = arith.constant 0 : i32
    %1 = arith.addi %0, %c0_i32 : i32
    %c0 = arith.constant 0 : index
    %c0_0 = arith.constant 0 : index
    %2 = arith.index_cast %1 : i32 to index
    %c0_1 = arith.constant 0 : index
    %c0_2 = arith.constant 0 : index
    %3 = vector.load %arg2[%c0, %c0_0, %2, %c0_1, %c0_2] : memref<1x4x9x9x128xbf16, #tpu.memory_space<vmem>>, vector<1x1x8x8x128xbf16>
    %4 = vector.shape_cast %3 : vector<1x1x8x8x128xbf16> to vector<8x8x128xbf16>
    %5 = vector.shape_cast %4 : vector<8x8x128xbf16> to vector<64x128xbf16>
    %c0_3 = arith.constant 0 : index
    %c0_4 = arith.constant 0 : index
    %6 = vector.load %arg6[%c0_3, %c0_4] : memref<64x1152xbf16, #tpu.memory_space<vmem>>, vector<64x128xbf16>
    tpu.vector_store %arg6[%c0_3, %c0_4], %5 {strides = array<i32>} : memref<64x1152xbf16, #tpu.memory_space<vmem>>, vector<64x128xbf16>,
    %c0_i32_5 = arith.constant 0 : i32
    %7 = arith.addi %0, %c0_i32_5 : i32
    %c0_6 = arith.constant 0 : index
    %c1 = arith.constant 1 : index
    %8 = arith.index_cast %7 : i32 to index
    %c0_7 = arith.constant 0 : index
    %c0_8 = arith.constant 0 : index
    %9 = vector.load %arg2[%c0_6, %c1, %8, %c0_7, %c0_8] : memref<1x4x9x9x128xbf16, #tpu.memory_space<vmem>>, vector<1x1x8x8x128xbf16>
    %10 = vector.shape_cast %9 : vector<1x1x8x8x128xbf16> to vector<8x8x128xbf16>
    %11 = vector.shape_cast %10 : vector<8x8x128xbf16> to vector<64x128xbf16>
    %c0_9 = arith.constant 0 : index
    %c128 = arith.constant 128 : index
    %12 = vector.load %arg6[%c0_9, %c128] : memref<64x1152xbf16, #tpu.memory_space<vmem>>, vector<64x128xbf16>
    tpu.vector_store %arg6[%c0_9, %c128], %11 {strides = array<i32>} : memref<64x1152xbf16, #tpu.memory_space<vmem>>, vector<64x128xbf16>,
    %c0_i32_10 = arith.constant 0 : i32
    %13 = arith.addi %0, %c0_i32_10 : i32
    %c0_11 = arith.constant 0 : index
    %c0_12 = arith.constant 0 : index
    %14 = arith.index_cast %13 : i32 to index
    %c1_13 = arith.constant 1 : index
    %c0_14 = arith.constant 0 : index
    %15 = vector.load %arg2[%c0_11, %c0_12, %14, %c1_13, %c0_14] : memref<1x4x9x9x128xbf16, #tpu.memory_space<vmem>>, vector<1x1x8x8x128xbf16>
    %16 = vector.shape_cast %15 : vector<1x1x8x8x128xbf16> to vector<8x8x128xbf16>
    %17 = vector.shape_cast %16 : vector<8x8x128xbf16> to vector<64x128xbf16>
    %c0_15 = arith.constant 0 : index
    %c256 = arith.constant 256 : index
    %18 = vector.load %arg6[%c0_15, %c256] : memref<64x1152xbf16, #tpu.memory_space<vmem>>, vector<64x128xbf16>
    tpu.vector_store %arg6[%c0_15, %c256], %17 {strides = array<i32>} : memref<64x1152xbf16, #tpu.memory_space<vmem>>, vector<64x128xbf16>,
    %c0_i32_16 = arith.constant 0 : i32
    %19 = arith.addi %0, %c0_i32_16 : i32
    %c0_17 = arith.constant 0 : index
    %c2 = arith.constant 2 : index
    %20 = arith.index_cast %19 : i32 to index
    %c0_18 = arith.constant 0 : index
    %c0_19 = arith.constant 0 : index
    %21 = vector.load %arg2[%c0_17, %c2, %20, %c0_18, %c0_19] : memref<1x4x9x9x128xbf16, #tpu.memory_space<vmem>>, vector<1x1x8x8x128xbf16>
    %22 = vector.shape_cast %21 : vector<1x1x8x8x128xbf16> to vector<8x8x128xbf16>
    %23 = vector.shape_cast %22 : vector<8x8x128xbf16> to vector<64x128xbf16>
    %c0_20 = arith.constant 0 : index
    %c384 = arith.constant 384 : index
    %24 = vector.load %arg6[%c0_20, %c384] : memref<64x1152xbf16, #tpu.memory_space<vmem>>, vector<64x128xbf16>
    tpu.vector_store %arg6[%c0_20, %c384], %23 {strides = array<i32>} : memref<64x1152xbf16, #tpu.memory_space<vmem>>, vector<64x128xbf16>,
    %c0_i32_21 = arith.constant 0 : i32
    %25 = arith.addi %0, %c0_i32_21 : i32
    %c0_22 = arith.constant 0 : index
    %c3 = arith.constant 3 : index
    %26 = arith.index_cast %25 : i32 to index
    %c0_23 = arith.constant 0 : index
    %c0_24 = arith.constant 0 : index
    %27 = vector.load %arg2[%c0_22, %c3, %26, %c0_23, %c0_24] : memref<1x4x9x9x128xbf16, #tpu.memory_space<vmem>>, vector<1x1x8x8x128xbf16>
    %28 = vector.shape_cast %27 : vector<1x1x8x8x128xbf16> to vector<8x8x128xbf16>
    %29 = vector.shape_cast %28 : vector<8x8x128xbf16> to vector<64x128xbf16>
    %c0_25 = arith.constant 0 : index
    %c512 = arith.constant 512 : index
    %30 = vector.load %arg6[%c0_25, %c512] : memref<64x1152xbf16, #tpu.memory_space<vmem>>, vector<64x128xbf16>
    tpu.vector_store %arg6[%c0_25, %c512], %29 {strides = array<i32>} : memref<64x1152xbf16, #tpu.memory_space<vmem>>, vector<64x128xbf16>,
    %c0_i32_26 = arith.constant 0 : i32
    %31 = arith.addi %0, %c0_i32_26 : i32
    %c0_27 = arith.constant 0 : index
    %c2_28 = arith.constant 2 : index
    %32 = arith.index_cast %31 : i32 to index
    %c1_29 = arith.constant 1 : index
    %c0_30 = arith.constant 0 : index
    %33 = vector.load %arg2[%c0_27, %c2_28, %32, %c1_29, %c0_30] : memref<1x4x9x9x128xbf16, #tpu.memory_space<vmem>>, vector<1x1x8x8x128xbf16>
    %34 = vector.shape_cast %33 : vector<1x1x8x8x128xbf16> to vector<8x8x128xbf16>
    %35 = vector.shape_cast %34 : vector<8x8x128xbf16> to vector<64x128xbf16>
    %c0_31 = arith.constant 0 : index
    %c640 = arith.constant 640 : index
    %36 = vector.load %arg6[%c0_31, %c640] : memref<64x1152xbf16, #tpu.memory_space<vmem>>, vector<64x128xbf16>
    tpu.vector_store %arg6[%c0_31, %c640], %35 {strides = array<i32>} : memref<64x1152xbf16, #tpu.memory_space<vmem>>, vector<64x128xbf16>,
    %c1_i32 = arith.constant 1 : i32
    %37 = arith.addi %0, %c1_i32 : i32
    %c0_32 = arith.constant 0 : index
    %c0_33 = arith.constant 0 : index
    %38 = arith.index_cast %37 : i32 to index
    %c0_34 = arith.constant 0 : index
    %c0_35 = arith.constant 0 : index
    %39 = vector.load %arg2[%c0_32, %c0_33, %38, %c0_34, %c0_35] : memref<1x4x9x9x128xbf16, #tpu.memory_space<vmem>>, vector<1x1x8x8x128xbf16>
    %40 = vector.shape_cast %39 : vector<1x1x8x8x128xbf16> to vector<8x8x128xbf16>
    %41 = vector.shape_cast %40 : vector<8x8x128xbf16> to vector<64x128xbf16>
    %c0_36 = arith.constant 0 : index
    %c768 = arith.constant 768 : index
    %42 = vector.load %arg6[%c0_36, %c768] : memref<64x1152xbf16, #tpu.memory_space<vmem>>, vector<64x128xbf16>
    tpu.vector_store %arg6[%c0_36, %c768], %41 {strides = array<i32>} : memref<64x1152xbf16, #tpu.memory_space<vmem>>, vector<64x128xbf16>,
    %c1_i32_37 = arith.constant 1 : i32
    %43 = arith.addi %0, %c1_i32_37 : i32
    %c0_38 = arith.constant 0 : index
    %c1_39 = arith.constant 1 : index
    %44 = arith.index_cast %43 : i32 to index
    %c0_40 = arith.constant 0 : index
    %c0_41 = arith.constant 0 : index
    %45 = vector.load %arg2[%c0_38, %c1_39, %44, %c0_40, %c0_41] : memref<1x4x9x9x128xbf16, #tpu.memory_space<vmem>>, vector<1x1x8x8x128xbf16>
    %46 = vector.shape_cast %45 : vector<1x1x8x8x128xbf16> to vector<8x8x128xbf16>
    %47 = vector.shape_cast %46 : vector<8x8x128xbf16> to vector<64x128xbf16>
    %c0_42 = arith.constant 0 : index
    %c896 = arith.constant 896 : index
    %48 = vector.load %arg6[%c0_42, %c896] : memref<64x1152xbf16, #tpu.memory_space<vmem>>, vector<64x128xbf16>
    tpu.vector_store %arg6[%c0_42, %c896], %47 {strides = array<i32>} : memref<64x1152xbf16, #tpu.memory_space<vmem>>, vector<64x128xbf16>,
    %c1_i32_43 = arith.constant 1 : i32
    %49 = arith.addi %0, %c1_i32_43 : i32
    %c0_44 = arith.constant 0 : index
    %c0_45 = arith.constant 0 : index
    %50 = arith.index_cast %49 : i32 to index
    %c1_46 = arith.constant 1 : index
    %c0_47 = arith.constant 0 : index
    %51 = vector.load %arg2[%c0_44, %c0_45, %50, %c1_46, %c0_47] : memref<1x4x9x9x128xbf16, #tpu.memory_space<vmem>>, vector<1x1x8x8x128xbf16>
    %52 = vector.shape_cast %51 : vector<1x1x8x8x128xbf16> to vector<8x8x128xbf16>
    %53 = vector.shape_cast %52 : vector<8x8x128xbf16> to vector<64x128xbf16>
    %c0_48 = arith.constant 0 : index
    %c1024 = arith.constant 1024 : index
    %54 = vector.load %arg6[%c0_48, %c1024] : memref<64x1152xbf16, #tpu.memory_space<vmem>>, vector<64x128xbf16>
    tpu.vector_store %arg6[%c0_48, %c1024], %53 {strides = array<i32>} : memref<64x1152xbf16, #tpu.memory_space<vmem>>, vector<64x128xbf16>,
    %c0_49 = arith.constant 0 : index
    %c0_50 = arith.constant 0 : index
    %55 = vector.load %arg6[%c0_49, %c0_50] : memref<64x1152xbf16, #tpu.memory_space<vmem>>, vector<64x1152xbf16>
    %c0_51 = arith.constant 0 : index
    %c0_52 = arith.constant 0 : index
    %56 = vector.load %arg3[%c0_51, %c0_52] : memref<1152x128xbf16, #tpu.memory_space<vmem>>, vector<1152x128xbf16>
    %cst = arith.constant dense<0.000000e+00> : vector<64x128xf32>
    %57 = tpu.matmul %55, %56, %cst {dimension_numbers = #tpu.dot_dimension_numbers<[1], [0], [0], [1], [0, 0, 1, 1], [], []>} : vector<64x1152xbf16>, vector<1152x128xbf16>, vector<64x128xf32> -> vector<64x128xf32>
    %58 = arith.truncf %57 : vector<64x128xf32> to vector<64x128xbf16>
    %c0_53 = arith.constant 0 : index
    %c0_54 = arith.constant 0 : index
    %c0_55 = arith.constant 0 : index
    %59 = vector.load %arg4[%c0_53, %c0_54, %c0_55] : memref<1x64x128xbf16, #tpu.memory_space<vmem>>, vector<1x64x128xbf16>
    %60 = vector.shape_cast %59 : vector<1x64x128xbf16> to vector<64x128xbf16>
    %61 = vector.shape_cast %58 : vector<64x128xbf16> to vector<1x64x128xbf16>
    tpu.vector_store %arg4[%c0_53, %c0_54, %c0_55], %61 {strides = array<i32>} : memref<1x64x128xbf16, #tpu.memory_space<vmem>>, vector<1x64x128xbf16>,
    %cst_56 = arith.constant dense<0.000000e+00> : vector<128xf32>
    %62 = vector.multi_reduction <add>, %57, %cst_56 [0] : vector<64x128xf32> to vector<128xf32>
    %63 = vector.shape_cast %62 : vector<128xf32> to vector<1x128xf32>
    %64 = arith.mulf %57, %57 : vector<64x128xf32>
    %cst_57 = arith.constant dense<0.000000e+00> : vector<128xf32>
    %65 = vector.multi_reduction <add>, %64, %cst_57 [0] : vector<64x128xf32> to vector<128xf32>
    %66 = vector.shape_cast %65 : vector<128xf32> to vector<1x128xf32>
    %67 = tpu.concatenate %63, %66 in 0 : vector<1x128xf32>, vector<1x128xf32> -> vector<2x128xf32>
    %68 = vector.shape_cast %67 : vector<2x128xf32> to vector<1x1x2x128xf32>
    %c0_58 = arith.constant 0 : index
    %c0_59 = arith.constant 0 : index
    %c0_60 = arith.constant 0 : index
    %c0_61 = arith.constant 0 : index
    %69 = vector.load %arg5[%c0_58, %c0_59, %c0_60, %c0_61] : memref<1x1x2x128xf32, #tpu.memory_space<vmem>>, vector<1x1x2x128xf32>
    tpu.vector_store %arg5[%c0_58, %c0_59, %c0_60, %c0_61], %68 {strides = array<i32>} : memref<1x1x2x128xf32, #tpu.memory_space<vmem>>, vector<1x1x2x128xf32>,
    return
  }
  func.func @transform_0(%arg0: i32, %arg1: i32) -> (i32, i32, i32, i32, i32) {
    %c0_i32 = arith.constant 0 : i32
    %c0_i32_0 = arith.constant 0 : i32
    %c0_i32_1 = arith.constant 0 : i32
    %c0_i32_2 = arith.constant 0 : i32
    %c0_i32_3 = arith.constant 0 : i32
    return %arg0, %c0_i32, %c0_i32_0, %c0_i32_1, %c0_i32_2 : i32, i32, i32, i32, i32
  }
  func.func @transform_1(%arg0: i32, %arg1: i32) -> (i32, i32) {
    %c0_i32 = arith.constant 0 : i32
    %c0_i32_0 = arith.constant 0 : i32
    %c0_i32_1 = arith.constant 0 : i32
    return %c0_i32, %c0_i32_0 : i32, i32
  }
  func.func @transform_2(%arg0: i32, %arg1: i32) -> (i32, i32, i32) {
    %c0_i32 = arith.constant 0 : i32
    %c0_i32_0 = arith.constant 0 : i32
    return %arg0, %arg1, %c0_i32 : i32, i32, i32
  }
  func.func @transform_3(%arg0: i32, %arg1: i32) -> (i32, i32, i32, i32) {
    %c0_i32 = arith.constant 0 : i32
    %c0_i32_0 = arith.constant 0 : i32
    %c0_i32_1 = arith.constant 0 : i32
    return %arg0, %arg1, %c0_i32, %c0_i32_0 : i32, i32, i32, i32
  }
}

module attributes {stable_mosaic.version = 11 : i64} {
  func.func @kernel(%arg0: i32, %arg1: i32, %arg2: memref<1x10x10x128xbf16, #tpu.memory_space<vmem>>, %arg3: memref<1x128xf32, #tpu.memory_space<vmem>>, %arg4: memref<1x128xf32, #tpu.memory_space<vmem>>, %arg5: memref<1152x128xbf16, #tpu.memory_space<vmem>>, %arg6: memref<1x64x128xbf16, #tpu.memory_space<vmem>>, %arg7: memref<1x1x2x128xf32, #tpu.memory_space<vmem>>, %arg8: memref<10x10x128xbf16, #tpu.memory_space<vmem>>, %arg9: memref<64x1152xbf16, #tpu.memory_space<vmem>>) attributes {dimension_semantics = [#tpu.dimension_semantics<parallel>, #tpu.dimension_semantics<arbitrary>], iteration_bounds = array<i64: 2, 1>, scalar_prefetch = 0 : i64, scratch_operands = 2 : i64, tpu.core_type = #tpu.core_type<tc>, window_params = [{transform_indices = @transform_0, window_bounds = array<i64: 1, 10, 10, 128>}, {pipeline_mode = #tpu.pipeline_mode<synchronous>, transform_indices = @transform_1, window_bounds = array<i64: 1, 128>}, {pipeline_mode = #tpu.pipeline_mode<synchronous>, transform_indices = @transform_2, window_bounds = array<i64: 1, 128>}, {pipeline_mode = #tpu.pipeline_mode<synchronous>, transform_indices = @transform_3, window_bounds = array<i64: 1152, 128>}, {transform_indices = @transform_4, window_bounds = array<i64: 1, 64, 128>}, {transform_indices = @transform_5, window_bounds = array<i64: 1, 1, 2, 128>}]} {
    %c0_i32 = arith.constant 0 : i32
    %0 = arith.cmpi eq, %arg1, %c0_i32 : i32
    %1 = arith.extui %0 : i1 to i32
    %c0_i32_0 = arith.constant 0 : i32
    %2 = arith.cmpi ne, %1, %c0_i32_0 : i32
    scf.if %2 {
      %c0_46 = arith.constant 0 : index
      %c0_47 = arith.constant 0 : index
      %c0_48 = arith.constant 0 : index
      %c0_49 = arith.constant 0 : index
      %64 = vector.load %arg2[%c0_46, %c0_47, %c0_48, %c0_49] : memref<1x10x10x128xbf16, #tpu.memory_space<vmem>>, vector<1x10x10x128xbf16>
      %65 = vector.shape_cast %64 : vector<1x10x10x128xbf16> to vector<10x10x128xbf16>
      %66 = arith.extf %65 : vector<10x10x128xbf16> to vector<10x10x128xf32>
      %c0_50 = arith.constant 0 : index
      %c0_51 = arith.constant 0 : index
      %67 = vector.load %arg3[%c0_50, %c0_51] : memref<1x128xf32, #tpu.memory_space<vmem>>, vector<1x128xf32>
      %68 = vector.shape_cast %67 : vector<1x128xf32> to vector<1x1x128xf32>
      %69 = vector.broadcast %68 : vector<1x1x128xf32> to vector<10x10x128xf32>
      %70 = arith.mulf %66, %69 : vector<10x10x128xf32>
      %c0_52 = arith.constant 0 : index
      %c0_53 = arith.constant 0 : index
      %71 = vector.load %arg4[%c0_52, %c0_53] : memref<1x128xf32, #tpu.memory_space<vmem>>, vector<1x128xf32>
      %72 = vector.shape_cast %71 : vector<1x128xf32> to vector<1x1x128xf32>
      %73 = vector.broadcast %72 : vector<1x1x128xf32> to vector<10x10x128xf32>
      %74 = arith.addf %70, %73 : vector<10x10x128xf32>
      %cst_54 = arith.constant 0.000000e+00 : f32
      %75 = vector.broadcast %cst_54 : f32 to vector<10x10x128xf32>
      %76 = arith.maximumf %74, %75 : vector<10x10x128xf32>
      %77 = tpu.iota {dimensions = array<i32: 0>} : vector<10x10x128xi32>
      %78 = tpu.iota {dimensions = array<i32: 1>} : vector<10x10x128xi32>
      %c0_i32_55 = arith.constant 0 : i32
      %79 = vector.broadcast %c0_i32_55 : i32 to vector<10x10x128xi32>
      %80 = arith.cmpi eq, %77, %79 : vector<10x10x128xi32>
      %c9_i32 = arith.constant 9 : i32
      %81 = vector.broadcast %c9_i32 : i32 to vector<10x10x128xi32>
      %82 = arith.cmpi eq, %77, %81 : vector<10x10x128xi32>
      %83 = arith.ori %80, %82 : vector<10x10x128xi1>
      %c0_i32_56 = arith.constant 0 : i32
      %84 = vector.broadcast %c0_i32_56 : i32 to vector<10x10x128xi32>
      %85 = arith.cmpi eq, %78, %84 : vector<10x10x128xi32>
      %86 = arith.ori %83, %85 : vector<10x10x128xi1>
      %c9_i32_57 = arith.constant 9 : i32
      %87 = vector.broadcast %c9_i32_57 : i32 to vector<10x10x128xi32>
      %88 = arith.cmpi eq, %78, %87 : vector<10x10x128xi32>
      %89 = arith.ori %86, %88 : vector<10x10x128xi1>
      %cst_58 = arith.constant 0.000000e+00 : f32
      %90 = vector.broadcast %cst_58 : f32 to vector<10x10x128xf32>
      %91 = arith.select %89, %90, %76 : vector<10x10x128xi1>, vector<10x10x128xf32>
      %92 = arith.truncf %91 : vector<10x10x128xf32> to vector<10x10x128xbf16>
      %c0_59 = arith.constant 0 : index
      %c0_60 = arith.constant 0 : index
      %c0_61 = arith.constant 0 : index
      %93 = vector.load %arg8[%c0_59, %c0_60, %c0_61] : memref<10x10x128xbf16, #tpu.memory_space<vmem>>, vector<10x10x128xbf16>
      tpu.vector_store %arg8[%c0_59, %c0_60, %c0_61], %92 {strides = array<i32>} : memref<10x10x128xbf16, #tpu.memory_space<vmem>>, vector<10x10x128xbf16>,
    } else {
    }
    %c8_i32 = arith.constant 8 : i32
    %3 = arith.muli %arg1, %c8_i32 : i32
    %c0_i32_1 = arith.constant 0 : i32
    %4 = arith.addi %3, %c0_i32_1 : i32
    %5 = arith.index_cast %4 : i32 to index
    %c0 = arith.constant 0 : index
    %c0_2 = arith.constant 0 : index
    %6 = vector.load %arg8[%5, %c0, %c0_2] : memref<10x10x128xbf16, #tpu.memory_space<vmem>>, vector<8x8x128xbf16>
    %7 = vector.shape_cast %6 : vector<8x8x128xbf16> to vector<64x128xbf16>
    %c0_3 = arith.constant 0 : index
    %c0_4 = arith.constant 0 : index
    %8 = vector.load %arg9[%c0_3, %c0_4] : memref<64x1152xbf16, #tpu.memory_space<vmem>>, vector<64x128xbf16>
    tpu.vector_store %arg9[%c0_3, %c0_4], %7 {strides = array<i32>} : memref<64x1152xbf16, #tpu.memory_space<vmem>>, vector<64x128xbf16>,
    %c0_i32_5 = arith.constant 0 : i32
    %9 = arith.addi %3, %c0_i32_5 : i32
    %10 = arith.index_cast %9 : i32 to index
    %c1 = arith.constant 1 : index
    %c0_6 = arith.constant 0 : index
    %11 = vector.load %arg8[%10, %c1, %c0_6] : memref<10x10x128xbf16, #tpu.memory_space<vmem>>, vector<8x8x128xbf16>
    %12 = vector.shape_cast %11 : vector<8x8x128xbf16> to vector<64x128xbf16>
    %c0_7 = arith.constant 0 : index
    %c128 = arith.constant 128 : index
    %13 = vector.load %arg9[%c0_7, %c128] : memref<64x1152xbf16, #tpu.memory_space<vmem>>, vector<64x128xbf16>
    tpu.vector_store %arg9[%c0_7, %c128], %12 {strides = array<i32>} : memref<64x1152xbf16, #tpu.memory_space<vmem>>, vector<64x128xbf16>,
    %c0_i32_8 = arith.constant 0 : i32
    %14 = arith.addi %3, %c0_i32_8 : i32
    %15 = arith.index_cast %14 : i32 to index
    %c2 = arith.constant 2 : index
    %c0_9 = arith.constant 0 : index
    %16 = vector.load %arg8[%15, %c2, %c0_9] : memref<10x10x128xbf16, #tpu.memory_space<vmem>>, vector<8x8x128xbf16>
    %17 = vector.shape_cast %16 : vector<8x8x128xbf16> to vector<64x128xbf16>
    %c0_10 = arith.constant 0 : index
    %c256 = arith.constant 256 : index
    %18 = vector.load %arg9[%c0_10, %c256] : memref<64x1152xbf16, #tpu.memory_space<vmem>>, vector<64x128xbf16>
    tpu.vector_store %arg9[%c0_10, %c256], %17 {strides = array<i32>} : memref<64x1152xbf16, #tpu.memory_space<vmem>>, vector<64x128xbf16>,
    %c1_i32 = arith.constant 1 : i32
    %19 = arith.addi %3, %c1_i32 : i32
    %20 = arith.index_cast %19 : i32 to index
    %c0_11 = arith.constant 0 : index
    %c0_12 = arith.constant 0 : index
    %21 = vector.load %arg8[%20, %c0_11, %c0_12] : memref<10x10x128xbf16, #tpu.memory_space<vmem>>, vector<8x8x128xbf16>
    %22 = vector.shape_cast %21 : vector<8x8x128xbf16> to vector<64x128xbf16>
    %c0_13 = arith.constant 0 : index
    %c384 = arith.constant 384 : index
    %23 = vector.load %arg9[%c0_13, %c384] : memref<64x1152xbf16, #tpu.memory_space<vmem>>, vector<64x128xbf16>
    tpu.vector_store %arg9[%c0_13, %c384], %22 {strides = array<i32>} : memref<64x1152xbf16, #tpu.memory_space<vmem>>, vector<64x128xbf16>,
    %c1_i32_14 = arith.constant 1 : i32
    %24 = arith.addi %3, %c1_i32_14 : i32
    %25 = arith.index_cast %24 : i32 to index
    %c1_15 = arith.constant 1 : index
    %c0_16 = arith.constant 0 : index
    %26 = vector.load %arg8[%25, %c1_15, %c0_16] : memref<10x10x128xbf16, #tpu.memory_space<vmem>>, vector<8x8x128xbf16>
    %27 = vector.shape_cast %26 : vector<8x8x128xbf16> to vector<64x128xbf16>
    %c0_17 = arith.constant 0 : index
    %c512 = arith.constant 512 : index
    %28 = vector.load %arg9[%c0_17, %c512] : memref<64x1152xbf16, #tpu.memory_space<vmem>>, vector<64x128xbf16>
    tpu.vector_store %arg9[%c0_17, %c512], %27 {strides = array<i32>} : memref<64x1152xbf16, #tpu.memory_space<vmem>>, vector<64x128xbf16>,
    %c1_i32_18 = arith.constant 1 : i32
    %29 = arith.addi %3, %c1_i32_18 : i32
    %30 = arith.index_cast %29 : i32 to index
    %c2_19 = arith.constant 2 : index
    %c0_20 = arith.constant 0 : index
    %31 = vector.load %arg8[%30, %c2_19, %c0_20] : memref<10x10x128xbf16, #tpu.memory_space<vmem>>, vector<8x8x128xbf16>
    %32 = vector.shape_cast %31 : vector<8x8x128xbf16> to vector<64x128xbf16>
    %c0_21 = arith.constant 0 : index
    %c640 = arith.constant 640 : index
    %33 = vector.load %arg9[%c0_21, %c640] : memref<64x1152xbf16, #tpu.memory_space<vmem>>, vector<64x128xbf16>
    tpu.vector_store %arg9[%c0_21, %c640], %32 {strides = array<i32>} : memref<64x1152xbf16, #tpu.memory_space<vmem>>, vector<64x128xbf16>,
    %c2_i32 = arith.constant 2 : i32
    %34 = arith.addi %3, %c2_i32 : i32
    %35 = arith.index_cast %34 : i32 to index
    %c0_22 = arith.constant 0 : index
    %c0_23 = arith.constant 0 : index
    %36 = vector.load %arg8[%35, %c0_22, %c0_23] : memref<10x10x128xbf16, #tpu.memory_space<vmem>>, vector<8x8x128xbf16>
    %37 = vector.shape_cast %36 : vector<8x8x128xbf16> to vector<64x128xbf16>
    %c0_24 = arith.constant 0 : index
    %c768 = arith.constant 768 : index
    %38 = vector.load %arg9[%c0_24, %c768] : memref<64x1152xbf16, #tpu.memory_space<vmem>>, vector<64x128xbf16>
    tpu.vector_store %arg9[%c0_24, %c768], %37 {strides = array<i32>} : memref<64x1152xbf16, #tpu.memory_space<vmem>>, vector<64x128xbf16>,
    %c2_i32_25 = arith.constant 2 : i32
    %39 = arith.addi %3, %c2_i32_25 : i32
    %40 = arith.index_cast %39 : i32 to index
    %c1_26 = arith.constant 1 : index
    %c0_27 = arith.constant 0 : index
    %41 = vector.load %arg8[%40, %c1_26, %c0_27] : memref<10x10x128xbf16, #tpu.memory_space<vmem>>, vector<8x8x128xbf16>
    %42 = vector.shape_cast %41 : vector<8x8x128xbf16> to vector<64x128xbf16>
    %c0_28 = arith.constant 0 : index
    %c896 = arith.constant 896 : index
    %43 = vector.load %arg9[%c0_28, %c896] : memref<64x1152xbf16, #tpu.memory_space<vmem>>, vector<64x128xbf16>
    tpu.vector_store %arg9[%c0_28, %c896], %42 {strides = array<i32>} : memref<64x1152xbf16, #tpu.memory_space<vmem>>, vector<64x128xbf16>,
    %c2_i32_29 = arith.constant 2 : i32
    %44 = arith.addi %3, %c2_i32_29 : i32
    %45 = arith.index_cast %44 : i32 to index
    %c2_30 = arith.constant 2 : index
    %c0_31 = arith.constant 0 : index
    %46 = vector.load %arg8[%45, %c2_30, %c0_31] : memref<10x10x128xbf16, #tpu.memory_space<vmem>>, vector<8x8x128xbf16>
    %47 = vector.shape_cast %46 : vector<8x8x128xbf16> to vector<64x128xbf16>
    %c0_32 = arith.constant 0 : index
    %c1024 = arith.constant 1024 : index
    %48 = vector.load %arg9[%c0_32, %c1024] : memref<64x1152xbf16, #tpu.memory_space<vmem>>, vector<64x128xbf16>
    tpu.vector_store %arg9[%c0_32, %c1024], %47 {strides = array<i32>} : memref<64x1152xbf16, #tpu.memory_space<vmem>>, vector<64x128xbf16>,
    %c0_33 = arith.constant 0 : index
    %c0_34 = arith.constant 0 : index
    %49 = vector.load %arg9[%c0_33, %c0_34] : memref<64x1152xbf16, #tpu.memory_space<vmem>>, vector<64x1152xbf16>
    %c0_35 = arith.constant 0 : index
    %c0_36 = arith.constant 0 : index
    %50 = vector.load %arg5[%c0_35, %c0_36] : memref<1152x128xbf16, #tpu.memory_space<vmem>>, vector<1152x128xbf16>
    %cst = arith.constant dense<0.000000e+00> : vector<64x128xf32>
    %51 = tpu.matmul %49, %50, %cst {dimension_numbers = #tpu.dot_dimension_numbers<[1], [0], [0], [1], [0, 0, 1, 1], [], []>} : vector<64x1152xbf16>, vector<1152x128xbf16>, vector<64x128xf32> -> vector<64x128xf32>
    %52 = arith.truncf %51 : vector<64x128xf32> to vector<64x128xbf16>
    %c0_37 = arith.constant 0 : index
    %c0_38 = arith.constant 0 : index
    %c0_39 = arith.constant 0 : index
    %53 = vector.load %arg6[%c0_37, %c0_38, %c0_39] : memref<1x64x128xbf16, #tpu.memory_space<vmem>>, vector<1x64x128xbf16>
    %54 = vector.shape_cast %53 : vector<1x64x128xbf16> to vector<64x128xbf16>
    %55 = vector.shape_cast %52 : vector<64x128xbf16> to vector<1x64x128xbf16>
    tpu.vector_store %arg6[%c0_37, %c0_38, %c0_39], %55 {strides = array<i32>} : memref<1x64x128xbf16, #tpu.memory_space<vmem>>, vector<1x64x128xbf16>,
    %cst_40 = arith.constant dense<0.000000e+00> : vector<128xf32>
    %56 = vector.multi_reduction <add>, %51, %cst_40 [0] : vector<64x128xf32> to vector<128xf32>
    %57 = vector.shape_cast %56 : vector<128xf32> to vector<1x128xf32>
    %58 = arith.mulf %51, %51 : vector<64x128xf32>
    %cst_41 = arith.constant dense<0.000000e+00> : vector<128xf32>
    %59 = vector.multi_reduction <add>, %58, %cst_41 [0] : vector<64x128xf32> to vector<128xf32>
    %60 = vector.shape_cast %59 : vector<128xf32> to vector<1x128xf32>
    %61 = tpu.concatenate %57, %60 in 0 : vector<1x128xf32>, vector<1x128xf32> -> vector<2x128xf32>
    %62 = vector.shape_cast %61 : vector<2x128xf32> to vector<1x1x2x128xf32>
    %c0_42 = arith.constant 0 : index
    %c0_43 = arith.constant 0 : index
    %c0_44 = arith.constant 0 : index
    %c0_45 = arith.constant 0 : index
    %63 = vector.load %arg7[%c0_42, %c0_43, %c0_44, %c0_45] : memref<1x1x2x128xf32, #tpu.memory_space<vmem>>, vector<1x1x2x128xf32>
    tpu.vector_store %arg7[%c0_42, %c0_43, %c0_44, %c0_45], %62 {strides = array<i32>} : memref<1x1x2x128xf32, #tpu.memory_space<vmem>>, vector<1x1x2x128xf32>,
    return
  }
  func.func @transform_0(%arg0: i32, %arg1: i32) -> (i32, i32, i32, i32) {
    %c0_i32 = arith.constant 0 : i32
    %c0_i32_0 = arith.constant 0 : i32
    %c0_i32_1 = arith.constant 0 : i32
    %c0_i32_2 = arith.constant 0 : i32
    return %arg0, %c0_i32, %c0_i32_0, %c0_i32_1 : i32, i32, i32, i32
  }
  func.func @transform_1(%arg0: i32, %arg1: i32) -> (i32, i32) {
    %c0_i32 = arith.constant 0 : i32
    %c0_i32_0 = arith.constant 0 : i32
    %c0_i32_1 = arith.constant 0 : i32
    return %c0_i32, %c0_i32_0 : i32, i32
  }
  func.func @transform_2(%arg0: i32, %arg1: i32) -> (i32, i32) {
    %c0_i32 = arith.constant 0 : i32
    %c0_i32_0 = arith.constant 0 : i32
    %c0_i32_1 = arith.constant 0 : i32
    return %c0_i32, %c0_i32_0 : i32, i32
  }
  func.func @transform_3(%arg0: i32, %arg1: i32) -> (i32, i32) {
    %c0_i32 = arith.constant 0 : i32
    %c0_i32_0 = arith.constant 0 : i32
    %c0_i32_1 = arith.constant 0 : i32
    return %c0_i32, %c0_i32_0 : i32, i32
  }
  func.func @transform_4(%arg0: i32, %arg1: i32) -> (i32, i32, i32) {
    %c0_i32 = arith.constant 0 : i32
    %c0_i32_0 = arith.constant 0 : i32
    return %arg0, %arg1, %c0_i32 : i32, i32, i32
  }
  func.func @transform_5(%arg0: i32, %arg1: i32) -> (i32, i32, i32, i32) {
    %c0_i32 = arith.constant 0 : i32
    %c0_i32_0 = arith.constant 0 : i32
    %c0_i32_1 = arith.constant 0 : i32
    return %arg0, %arg1, %c0_i32, %c0_i32_0 : i32, i32, i32, i32
  }
}

module attributes {stable_mosaic.version = 11 : i64} {
  func.func @bn_proj_add_relu_kernel(%arg0: i32, %arg1: memref<16x1024xbf16, #tpu.memory_space<vmem>>, %arg2: memref<1x1024xf32, #tpu.memory_space<vmem>>, %arg3: memref<1x1024xf32, #tpu.memory_space<vmem>>, %arg4: memref<16x1024xbf16, #tpu.memory_space<vmem>>, %arg5: memref<1x1024xf32, #tpu.memory_space<vmem>>, %arg6: memref<1x1024xf32, #tpu.memory_space<vmem>>, %arg7: memref<16x1024xbf16, #tpu.memory_space<vmem>>) attributes {dimension_semantics = [#tpu.dimension_semantics<parallel>], iteration_bounds = array<i64: 1>, scalar_prefetch = 0 : i64, scratch_operands = 0 : i64, tpu.core_type = #tpu.core_type<tc>, window_params = [{transform_indices = @transform_0, window_bounds = array<i64: 16, 1024>}, {pipeline_mode = #tpu.pipeline_mode<synchronous>, transform_indices = @transform_1, window_bounds = array<i64: 1, 1024>}, {pipeline_mode = #tpu.pipeline_mode<synchronous>, transform_indices = @transform_2, window_bounds = array<i64: 1, 1024>}, {transform_indices = @transform_3, window_bounds = array<i64: 16, 1024>}, {pipeline_mode = #tpu.pipeline_mode<synchronous>, transform_indices = @transform_4, window_bounds = array<i64: 1, 1024>}, {pipeline_mode = #tpu.pipeline_mode<synchronous>, transform_indices = @transform_5, window_bounds = array<i64: 1, 1024>}, {transform_indices = @transform_6, window_bounds = array<i64: 16, 1024>}]} {
    %c0 = arith.constant 0 : index
    %c0_0 = arith.constant 0 : index
    %0 = vector.load %arg1[%c0, %c0_0] : memref<16x1024xbf16, #tpu.memory_space<vmem>>, vector<16x1024xbf16>
    %1 = arith.extf %0 : vector<16x1024xbf16> to vector<16x1024xf32>
    %c0_1 = arith.constant 0 : index
    %c0_2 = arith.constant 0 : index
    %2 = vector.load %arg2[%c0_1, %c0_2] : memref<1x1024xf32, #tpu.memory_space<vmem>>, vector<1x1024xf32>
    %3 = vector.broadcast %2 : vector<1x1024xf32> to vector<16x1024xf32>
    %4 = arith.mulf %1, %3 : vector<16x1024xf32>
    %c0_3 = arith.constant 0 : index
    %c0_4 = arith.constant 0 : index
    %5 = vector.load %arg3[%c0_3, %c0_4] : memref<1x1024xf32, #tpu.memory_space<vmem>>, vector<1x1024xf32>
    %6 = vector.broadcast %5 : vector<1x1024xf32> to vector<16x1024xf32>
    %7 = arith.addf %4, %6 : vector<16x1024xf32>
    %c0_5 = arith.constant 0 : index
    %c0_6 = arith.constant 0 : index
    %8 = vector.load %arg4[%c0_5, %c0_6] : memref<16x1024xbf16, #tpu.memory_space<vmem>>, vector<16x1024xbf16>
    %9 = arith.extf %8 : vector<16x1024xbf16> to vector<16x1024xf32>
    %c0_7 = arith.constant 0 : index
    %c0_8 = arith.constant 0 : index
    %10 = vector.load %arg5[%c0_7, %c0_8] : memref<1x1024xf32, #tpu.memory_space<vmem>>, vector<1x1024xf32>
    %11 = vector.broadcast %10 : vector<1x1024xf32> to vector<16x1024xf32>
    %12 = arith.mulf %9, %11 : vector<16x1024xf32>
    %c0_9 = arith.constant 0 : index
    %c0_10 = arith.constant 0 : index
    %13 = vector.load %arg6[%c0_9, %c0_10] : memref<1x1024xf32, #tpu.memory_space<vmem>>, vector<1x1024xf32>
    %14 = vector.broadcast %13 : vector<1x1024xf32> to vector<16x1024xf32>
    %15 = arith.addf %12, %14 : vector<16x1024xf32>
    %16 = arith.addf %7, %15 : vector<16x1024xf32>
    %cst = arith.constant 0.000000e+00 : f32
    %17 = vector.broadcast %cst : f32 to vector<16x1024xf32>
    %18 = arith.maximumf %16, %17 : vector<16x1024xf32>
    %19 = arith.truncf %18 : vector<16x1024xf32> to vector<16x1024xbf16>
    %c0_11 = arith.constant 0 : index
    %c0_12 = arith.constant 0 : index
    %20 = vector.load %arg7[%c0_11, %c0_12] : memref<16x1024xbf16, #tpu.memory_space<vmem>>, vector<16x1024xbf16>
    tpu.vector_store %arg7[%c0_11, %c0_12], %19 {strides = array<i32>} : memref<16x1024xbf16, #tpu.memory_space<vmem>>, vector<16x1024xbf16>,
    return
  }
  func.func @transform_0(%arg0: i32) -> (i32, i32) {
    %c0_i32 = arith.constant 0 : i32
    %c0_i32_0 = arith.constant 0 : i32
    return %arg0, %c0_i32 : i32, i32
  }
  func.func @transform_1(%arg0: i32) -> (i32, i32) {
    %c0_i32 = arith.constant 0 : i32
    %c0_i32_0 = arith.constant 0 : i32
    %c0_i32_1 = arith.constant 0 : i32
    return %c0_i32, %c0_i32_0 : i32, i32
  }
  func.func @transform_2(%arg0: i32) -> (i32, i32) {
    %c0_i32 = arith.constant 0 : i32
    %c0_i32_0 = arith.constant 0 : i32
    %c0_i32_1 = arith.constant 0 : i32
    return %c0_i32, %c0_i32_0 : i32, i32
  }
  func.func @transform_3(%arg0: i32) -> (i32, i32) {
    %c0_i32 = arith.constant 0 : i32
    %c0_i32_0 = arith.constant 0 : i32
    return %arg0, %c0_i32 : i32, i32
  }
  func.func @transform_4(%arg0: i32) -> (i32, i32) {
    %c0_i32 = arith.constant 0 : i32
    %c0_i32_0 = arith.constant 0 : i32
    %c0_i32_1 = arith.constant 0 : i32
    return %c0_i32, %c0_i32_0 : i32, i32
  }
  func.func @transform_5(%arg0: i32) -> (i32, i32) {
    %c0_i32 = arith.constant 0 : i32
    %c0_i32_0 = arith.constant 0 : i32
    %c0_i32_1 = arith.constant 0 : i32
    return %c0_i32, %c0_i32_0 : i32, i32
  }
  func.func @transform_6(%arg0: i32) -> (i32, i32) {
    %c0_i32 = arith.constant 0 : i32
    %c0_i32_0 = arith.constant 0 : i32
    return %arg0, %c0_i32 : i32, i32
  }
}

module attributes {stable_mosaic.version = 11 : i64} {
  func.func @conv1x1_stats_kernel(%arg0: i32, %arg1: i32, %arg2: memref<1x8x8x128xbf16, #tpu.memory_space<vmem>>, %arg3: memref<128x128xbf16, #tpu.memory_space<vmem>>, %arg4: memref<1x64x128xbf16, #tpu.memory_space<vmem>>, %arg5: memref<1x1x2x128xf32, #tpu.memory_space<vmem>>) attributes {dimension_semantics = [#tpu.dimension_semantics<parallel>, #tpu.dimension_semantics<parallel>], iteration_bounds = array<i64: 2, 1>, scalar_prefetch = 0 : i64, scratch_operands = 0 : i64, tpu.core_type = #tpu.core_type<tc>, window_params = [{transform_indices = @transform_0, window_bounds = array<i64: 1, 8, 8, 128>}, {pipeline_mode = #tpu.pipeline_mode<synchronous>, transform_indices = @transform_1, window_bounds = array<i64: 128, 128>}, {transform_indices = @transform_2, window_bounds = array<i64: 1, 64, 128>}, {transform_indices = @transform_3, window_bounds = array<i64: 1, 1, 2, 128>}]} {
    %c0 = arith.constant 0 : index
    %c0_0 = arith.constant 0 : index
    %c0_1 = arith.constant 0 : index
    %c0_2 = arith.constant 0 : index
    %0 = vector.load %arg2[%c0, %c0_0, %c0_1, %c0_2] : memref<1x8x8x128xbf16, #tpu.memory_space<vmem>>, vector<1x8x8x128xbf16>
    %1 = vector.shape_cast %0 : vector<1x8x8x128xbf16> to vector<8x8x128xbf16>
    %2 = vector.shape_cast %1 : vector<8x8x128xbf16> to vector<64x128xbf16>
    %c0_3 = arith.constant 0 : index
    %c0_4 = arith.constant 0 : index
    %3 = vector.load %arg3[%c0_3, %c0_4] : memref<128x128xbf16, #tpu.memory_space<vmem>>, vector<128x128xbf16>
    %cst = arith.constant dense<0.000000e+00> : vector<64x128xf32>
    %4 = tpu.matmul %2, %3, %cst {dimension_numbers = #tpu.dot_dimension_numbers<[1], [0], [0], [1], [0, 0, 1, 1], [], []>} : vector<64x128xbf16>, vector<128x128xbf16>, vector<64x128xf32> -> vector<64x128xf32>
    %5 = arith.truncf %4 : vector<64x128xf32> to vector<64x128xbf16>
    %c0_5 = arith.constant 0 : index
    %c0_6 = arith.constant 0 : index
    %c0_7 = arith.constant 0 : index
    %6 = vector.load %arg4[%c0_5, %c0_6, %c0_7] : memref<1x64x128xbf16, #tpu.memory_space<vmem>>, vector<1x64x128xbf16>
    %7 = vector.shape_cast %6 : vector<1x64x128xbf16> to vector<64x128xbf16>
    %8 = vector.shape_cast %5 : vector<64x128xbf16> to vector<1x64x128xbf16>
    tpu.vector_store %arg4[%c0_5, %c0_6, %c0_7], %8 {strides = array<i32>} : memref<1x64x128xbf16, #tpu.memory_space<vmem>>, vector<1x64x128xbf16>,
    %cst_8 = arith.constant dense<0.000000e+00> : vector<128xf32>
    %9 = vector.multi_reduction <add>, %4, %cst_8 [0] : vector<64x128xf32> to vector<128xf32>
    %10 = vector.shape_cast %9 : vector<128xf32> to vector<1x128xf32>
    %11 = arith.mulf %4, %4 : vector<64x128xf32>
    %cst_9 = arith.constant dense<0.000000e+00> : vector<128xf32>
    %12 = vector.multi_reduction <add>, %11, %cst_9 [0] : vector<64x128xf32> to vector<128xf32>
    %13 = vector.shape_cast %12 : vector<128xf32> to vector<1x128xf32>
    %14 = tpu.concatenate %10, %13 in 0 : vector<1x128xf32>, vector<1x128xf32> -> vector<2x128xf32>
    %15 = vector.shape_cast %14 : vector<2x128xf32> to vector<1x1x2x128xf32>
    %c0_10 = arith.constant 0 : index
    %c0_11 = arith.constant 0 : index
    %c0_12 = arith.constant 0 : index
    %c0_13 = arith.constant 0 : index
    %16 = vector.load %arg5[%c0_10, %c0_11, %c0_12, %c0_13] : memref<1x1x2x128xf32, #tpu.memory_space<vmem>>, vector<1x1x2x128xf32>
    tpu.vector_store %arg5[%c0_10, %c0_11, %c0_12, %c0_13], %15 {strides = array<i32>} : memref<1x1x2x128xf32, #tpu.memory_space<vmem>>, vector<1x1x2x128xf32>,
    return
  }
  func.func @transform_0(%arg0: i32, %arg1: i32) -> (i32, i32, i32, i32) {
    %c0_i32 = arith.constant 0 : i32
    %c0_i32_0 = arith.constant 0 : i32
    %c0_i32_1 = arith.constant 0 : i32
    return %arg0, %arg1, %c0_i32, %c0_i32_0 : i32, i32, i32, i32
  }
  func.func @transform_1(%arg0: i32, %arg1: i32) -> (i32, i32) {
    %c0_i32 = arith.constant 0 : i32
    %c0_i32_0 = arith.constant 0 : i32
    %c0_i32_1 = arith.constant 0 : i32
    return %c0_i32, %c0_i32_0 : i32, i32
  }
  func.func @transform_2(%arg0: i32, %arg1: i32) -> (i32, i32, i32) {
    %c0_i32 = arith.constant 0 : i32
    %c0_i32_0 = arith.constant 0 : i32
    return %arg0, %arg1, %c0_i32 : i32, i32, i32
  }
  func.func @transform_3(%arg0: i32, %arg1: i32) -> (i32, i32, i32, i32) {
    %c0_i32 = arith.constant 0 : i32
    %c0_i32_0 = arith.constant 0 : i32
    %c0_i32_1 = arith.constant 0 : i32
    return %arg0, %arg1, %c0_i32, %c0_i32_0 : i32, i32, i32, i32
  }
}

</mosaic_0001>

<llo_original>
// kernel: basic_block_forward.7
$region0: #{basic_block_forward.7}
  #allocation0 [shape = 'u32[]', space=smem, size = 0x4, offset = 0x4, fixed_abs, tag = 'smem constant byte address 0x4 - core index']
  #allocation1 [shape = 'u32[144,128]{1,0:T(1,128)}', space=vmem, size = 0x12000, scoped, tag = 'internal scratch']
  %s0 = inlined_call_operand.vmem [shape: bf16[16,1024], index: 0, kind: input, shape index: {}]
  %s1 = inlined_call_operand.vmem [shape: f32[1,1024], index: 1, kind: input, shape index: {}]
  %s2 = inlined_call_operand.vmem [shape: f32[1,1024], index: 2, kind: input, shape index: {}]
  %s3 = inlined_call_operand.vmem [shape: bf16[16,1024], index: 3, kind: input, shape index: {}]
  %s4 = inlined_call_operand.vmem [shape: f32[1,1024], index: 4, kind: input, shape index: {}]
  %s5 = inlined_call_operand.vmem [shape: f32[1,1024], index: 5, kind: input, shape index: {}]
  %s6 = inlined_call_operand.vmem [shape: bf16[16,1024], index: 6, kind: output, shape index: {}]
  %s7 = sld [smem:[#allocation0]]
  $region34: #{basic_block_forward.7} parent=0
    _
  %s9 = ssub.s32 1, %s7
  %s10 = scalar_select 0, %s9, %s7
  // Predicated region
  $region2: #{basic_block_forward.7} parent=0 // pred_check
    _
  $region3: #{basic_block_forward.7} parent=0 // pred_check_branch
    %12 = sbr.rel (0) target = $region5
  $region4: #{basic_block_forward.7} parent=0 // pred_region
    _
  $region5: #{basic_block_forward.7} parent=0 // pred_fallthru
    _
  // Predicated region
  $region6: #{basic_block_forward.7} parent=0 // pred_check
    _
  $region7: #{basic_block_forward.7} parent=0 // pred_check_branch
    %14 = sbr.rel (0) target = $region9
  $region8: #{basic_block_forward.7} parent=0 // pred_region
    _
  $region9: #{basic_block_forward.7} parent=0 // pred_fallthru
    _
  // Predicated region
  $region10: #{basic_block_forward.7} parent=0 // pred_check
    _
  $region11: #{basic_block_forward.7} parent=0 // pred_check_branch
    %16 = sbr.rel (0) target = $region13
  $region12: #{basic_block_forward.7} parent=0 // pred_region
    _
  $region13: #{basic_block_forward.7} parent=0 // pred_fallthru
    _
  // Predicated region
  $region14: #{basic_block_forward.7} parent=0 // pred_check
    _
  $region15: #{basic_block_forward.7} parent=0 // pred_check_branch
    %18 = sbr.rel (0) target = $region17
  $region16: #{basic_block_forward.7} parent=0 // pred_region
    _
  $region17: #{basic_block_forward.7} parent=0 // pred_fallthru
    _
  // Predicated region
  $region18: #{basic_block_forward.7} parent=0 // pred_check
    _
  $region19: #{basic_block_forward.7} parent=0 // pred_check_branch
    %20 = sbr.rel (0) target = $region21
  $region20: #{basic_block_forward.7} parent=0 // pred_region
    _
  $region21: #{basic_block_forward.7} parent=0 // pred_fallthru
    _
  // Predicated region
  $region22: #{basic_block_forward.7} parent=0 // pred_check
    _
  $region23: #{basic_block_forward.7} parent=0 // pred_check_branch
    %22 = sbr.rel (0) target = $region25
  $region24: #{basic_block_forward.7} parent=0 // pred_region
    _
  $region25: #{basic_block_forward.7} parent=0 // pred_fallthru
    _
  %v23 = vld [vmem:[%s0] sm:$0xff]
  %v24 = vld [vmem:[%s0 + $0x8] sm:$0xff]
  %v25 = vld [vmem:[%s0 + $0x10] sm:$0xff]
  %v26 = vld [vmem:[%s0 + $0x18] sm:$0xff]
  %v27 = vld [vmem:[%s0 + $0x20] sm:$0xff]
  %v28 = vld [vmem:[%s0 + $0x28] sm:$0xff]
  %v29 = vld [vmem:[%s0 + $0x30] sm:$0xff]
  %v30 = vld [vmem:[%s0 + $0x38] sm:$0xff]
  %v31 = vunpack.c.l.bf16 %v23
  %v32 = vunpack.c.h.bf16 %v23
  %v33 = vunpack.c.l.bf16 %v24
  %v34 = vunpack.c.h.bf16 %v24
  %v35 = vunpack.c.l.bf16 %v25
  %v36 = vunpack.c.h.bf16 %v25
  %v37 = vunpack.c.l.bf16 %v26
  %v38 = vunpack.c.h.bf16 %v26
  %v39 = vunpack.c.l.bf16 %v27
  %v40 = vunpack.c.h.bf16 %v27
  %v41 = vunpack.c.l.bf16 %v28
  %v42 = vunpack.c.h.bf16 %v28
  %v43 = vunpack.c.l.bf16 %v29
  %v44 = vunpack.c.h.bf16 %v29
  %v45 = vunpack.c.l.bf16 %v30
  %v46 = vunpack.c.h.bf16 %v30
  %v47 = vld [vmem:[%s1] sm:$0xff]
  %v49 = vlaneseq
  %v50 = vshrl.u32 %v49, 7
  %v51 = vsub.s32 0, %v50
  %v52 = vrot.slane %v47, %v51
  %v53 = vlaneseq
  %v54 = vshrl.u32 %v53, 7
  %v55 = vsub.s32 1, %v54
  %v56 = vrot.slane %v47, %v55
  %v57 = vlaneseq
  %v58 = vshrl.u32 %v57, 7
  %v59 = vsub.s32 2, %v58
  %v60 = vrot.slane %v47, %v59
  %v61 = vlaneseq
  %v62 = vshrl.u32 %v61, 7
  %v63 = vsub.s32 3, %v62
  %v64 = vrot.slane %v47, %v63
  %v65 = vlaneseq
  %v66 = vshrl.u32 %v65, 7
  %v67 = vsub.s32 4, %v66
  %v68 = vrot.slane %v47, %v67
  %v69 = vlaneseq
  %v70 = vshrl.u32 %v69, 7
  %v71 = vsub.s32 5, %v70
  %v72 = vrot.slane %v47, %v71
  %v73 = vlaneseq
  %v74 = vshrl.u32 %v73, 7
  %v75 = vsub.s32 6, %v74
  %v76 = vrot.slane %v47, %v75
  %v77 = vlaneseq
  %v78 = vshrl.u32 %v77, 7
  %v79 = vsub.s32 7, %v78
  %v80 = vrot.slane %v47, %v79
  %v89 = vmul.f32 %v31, %v52
  %v90 = vmul.f32 %v32, %v56
  %v91 = vmul.f32 %v33, %v60
  %v92 = vmul.f32 %v34, %v64
  %v93 = vmul.f32 %v35, %v68
  %v94 = vmul.f32 %v36, %v72
  %v95 = vmul.f32 %v37, %v76
  %v96 = vmul.f32 %v38, %v80
  %v97 = vmul.f32 %v39, %v52
  %v98 = vmul.f32 %v40, %v56
  %v99 = vmul.f32 %v41, %v60
  %v100 = vmul.f32 %v42, %v64
  %v101 = vmul.f32 %v43, %v68
  %v102 = vmul.f32 %v44, %v72
  %v103 = vmul.f32 %v45, %v76
  %v104 = vmul.f32 %v46, %v80
  %v105 = vld [vmem:[%s2] sm:$0xff]
  %v107 = vlaneseq
  %v108 = vshrl.u32 %v107, 7
  %v109 = vsub.s32 0, %v108
  %v110 = vrot.slane %v105, %v109
  %v111 = vlaneseq
  %v112 = vshrl.u32 %v111, 7
  %v113 = vsub.s32 1, %v112
  %v114 = vrot.slane %v105, %v113
  %v115 = vlaneseq
  %v116 = vshrl.u32 %v115, 7
  %v117 = vsub.s32 2, %v116
  %v118 = vrot.slane %v105, %v117
  %v119 = vlaneseq
  %v120 = vshrl.u32 %v119, 7
  %v121 = vsub.s32 3, %v120
  %v122 = vrot.slane %v105, %v121
  %v123 = vlaneseq
  %v124 = vshrl.u32 %v123, 7
  %v125 = vsub.s32 4, %v124
  %v126 = vrot.slane %v105, %v125
  %v127 = vlaneseq
  %v128 = vshrl.u32 %v127, 7
  %v129 = vsub.s32 5, %v128
  %v130 = vrot.slane %v105, %v129
  %v131 = vlaneseq
  %v132 = vshrl.u32 %v131, 7
  %v133 = vsub.s32 6, %v132
  %v134 = vrot.slane %v105, %v133
  %v135 = vlaneseq
  %v136 = vshrl.u32 %v135, 7
  %v137 = vsub.s32 7, %v136
  %v138 = vrot.slane %v105, %v137
  %v147 = vadd.f32 %v89, %v110
  %v148 = vadd.f32 %v90, %v114
  %v149 = vadd.f32 %v91, %v118
  %v150 = vadd.f32 %v92, %v122
  %v151 = vadd.f32 %v93, %v126
  %v152 = vadd.f32 %v94, %v130
  %v153 = vadd.f32 %v95, %v134
  %v154 = vadd.f32 %v96, %v138
  %v155 = vadd.f32 %v97, %v110
  %v156 = vadd.f32 %v98, %v114
  %v157 = vadd.f32 %v99, %v118
  %v158 = vadd.f32 %v100, %v122
  %v159 = vadd.f32 %v101, %v126
  %v160 = vadd.f32 %v102, %v130
  %v161 = vadd.f32 %v103, %v134
  %v162 = vadd.f32 %v104, %v138
  %v163 = vld [vmem:[%s3] sm:$0xff]
  %v164 = vld [vmem:[%s3 + $0x8] sm:$0xff]
  %v165 = vld [vmem:[%s3 + $0x10] sm:$0xff]
  %v166 = vld [vmem:[%s3 + $0x18] sm:$0xff]
  %v167 = vld [vmem:[%s3 + $0x20] sm:$0xff]
  %v168 = vld [vmem:[%s3 + $0x28] sm:$0xff]
  %v169 = vld [vmem:[%s3 + $0x30] sm:$0xff]
  %v170 = vld [vmem:[%s3 + $0x38] sm:$0xff]
  %v171 = vunpack.c.l.bf16 %v163
  %v172 = vunpack.c.h.bf16 %v163
  %v173 = vunpack.c.l.bf16 %v164
  %v174 = vunpack.c.h.bf16 %v164
  %v175 = vunpack.c.l.bf16 %v165
  %v176 = vunpack.c.h.bf16 %v165
  %v177 = vunpack.c.l.bf16 %v166
  %v178 = vunpack.c.h.bf16 %v166
  %v179 = vunpack.c.l.bf16 %v167
  %v180 = vunpack.c.h.bf16 %v167
  %v181 = vunpack.c.l.bf16 %v168
  %v182 = vunpack.c.h.bf16 %v168
  %v183 = vunpack.c.l.bf16 %v169
  %v184 = vunpack.c.h.bf16 %v169
  %v185 = vunpack.c.l.bf16 %v170
  %v186 = vunpack.c.h.bf16 %v170
  %v187 = vld [vmem:[%s4] sm:$0xff]
  %v189 = vlaneseq
  %v190 = vshrl.u32 %v189, 7
  %v191 = vsub.s32 0, %v190
  %v192 = vrot.slane %v187, %v191
  %v193 = vlaneseq
  %v194 = vshrl.u32 %v193, 7
  %v195 = vsub.s32 1, %v194
  %v196 = vrot.slane %v187, %v195
  %v197 = vlaneseq
  %v198 = vshrl.u32 %v197, 7
  %v199 = vsub.s32 2, %v198
  %v200 = vrot.slane %v187, %v199
  %v201 = vlaneseq
  %v202 = vshrl.u32 %v201, 7
  %v203 = vsub.s32 3, %v202
  %v204 = vrot.slane %v187, %v203
  %v205 = vlaneseq
  %v206 = vshrl.u32 %v205, 7
  %v207 = vsub.s32 4, %v206
  %v208 = vrot.slane %v187, %v207
  %v209 = vlaneseq
  %v210 = vshrl.u32 %v209, 7
  %v211 = vsub.s32 5, %v210
  %v212 = vrot.slane %v187, %v211
  %v213 = vlaneseq
  %v214 = vshrl.u32 %v213, 7
  %v215 = vsub.s32 6, %v214
  %v216 = vrot.slane %v187, %v215
  %v217 = vlaneseq
  %v218 = vshrl.u32 %v217, 7
  %v219 = vsub.s32 7, %v218
  %v220 = vrot.slane %v187, %v219
  %v229 = vmul.f32 %v171, %v192
  %v230 = vmul.f32 %v172, %v196
  %v231 = vmul.f32 %v173, %v200
  %v232 = vmul.f32 %v174, %v204
  %v233 = vmul.f32 %v175, %v208
  %v234 = vmul.f32 %v176, %v212
  %v235 = vmul.f32 %v177, %v216
  %v236 = vmul.f32 %v178, %v220
  %v237 = vmul.f32 %v179, %v192
  %v238 = vmul.f32 %v180, %v196
  %v239 = vmul.f32 %v181, %v200
  %v240 = vmul.f32 %v182, %v204
  %v241 = vmul.f32 %v183, %v208
  %v242 = vmul.f32 %v184, %v212
  %v243 = vmul.f32 %v185, %v216
  %v244 = vmul.f32 %v186, %v220
  %v245 = vld [vmem:[%s5] sm:$0xff]
  %v247 = vlaneseq
  %v248 = vshrl.u32 %v247, 7
  %v249 = vsub.s32 0, %v248
  %v250 = vrot.slane %v245, %v249
  %v251 = vlaneseq
  %v252 = vshrl.u32 %v251, 7
  %v253 = vsub.s32 1, %v252
  %v254 = vrot.slane %v245, %v253
  %v255 = vlaneseq
  %v256 = vshrl.u32 %v255, 7
  %v257 = vsub.s32 2, %v256
  %v258 = vrot.slane %v245, %v257
  %v259 = vlaneseq
  %v260 = vshrl.u32 %v259, 7
  %v261 = vsub.s32 3, %v260
  %v262 = vrot.slane %v245, %v261
  %v263 = vlaneseq
  %v264 = vshrl.u32 %v263, 7
  %v265 = vsub.s32 4, %v264
  %v266 = vrot.slane %v245, %v265
  %v267 = vlaneseq
  %v268 = vshrl.u32 %v267, 7
  %v269 = vsub.s32 5, %v268
  %v270 = vrot.slane %v245, %v269
  %v271 = vlaneseq
  %v272 = vshrl.u32 %v271, 7
  %v273 = vsub.s32 6, %v272
  %v274 = vrot.slane %v245, %v273
  %v275 = vlaneseq
  %v276 = vshrl.u32 %v275, 7
  %v277 = vsub.s32 7, %v276
  %v278 = vrot.slane %v245, %v277
  %v287 = vadd.f32 %v229, %v250
  %v288 = vadd.f32 %v230, %v254
  %v289 = vadd.f32 %v231, %v258
  %v290 = vadd.f32 %v232, %v262
  %v291 = vadd.f32 %v233, %v266
  %v292 = vadd.f32 %v234, %v270
  %v293 = vadd.f32 %v235, %v274
  %v294 = vadd.f32 %v236, %v278
  %v295 = vadd.f32 %v237, %v250
  %v296 = vadd.f32 %v238, %v254
  %v297 = vadd.f32 %v239, %v258
  %v298 = vadd.f32 %v240, %v262
  %v299 = vadd.f32 %v241, %v266
  %v300 = vadd.f32 %v242, %v270
  %v301 = vadd.f32 %v243, %v274
  %v302 = vadd.f32 %v244, %v278
  %v303 = vadd.f32 %v147, %v287
  %v304 = vadd.f32 %v148, %v288
  %v305 = vadd.f32 %v149, %v289
  %v306 = vadd.f32 %v150, %v290
  %v307 = vadd.f32 %v151, %v291
  %v308 = vadd.f32 %v152, %v292
  %v309 = vadd.f32 %v153, %v293
  %v310 = vadd.f32 %v154, %v294
  %v311 = vadd.f32 %v155, %v295
  %v312 = vadd.f32 %v156, %v296
  %v313 = vadd.f32 %v157, %v297
  %v314 = vadd.f32 %v158, %v298
  %v315 = vadd.f32 %v159, %v299
  %v316 = vadd.f32 %v160, %v300
  %v317 = vadd.f32 %v161, %v301
  %v318 = vadd.f32 %v162, %v302
  %v319 = vmax.f32 %v303, 0.0
  %v320 = vmax.f32 %v304, 0.0
  %v321 = vmax.f32 %v305, 0.0
  %v322 = vmax.f32 %v306, 0.0
  %v323 = vmax.f32 %v307, 0.0
  %v324 = vmax.f32 %v308, 0.0
  %v325 = vmax.f32 %v309, 0.0
  %v326 = vmax.f32 %v310, 0.0
  %v327 = vmax.f32 %v311, 0.0
  %v328 = vmax.f32 %v312, 0.0
  %v329 = vmax.f32 %v313, 0.0
  %v330 = vmax.f32 %v314, 0.0
  %v331 = vmax.f32 %v315, 0.0
  %v332 = vmax.f32 %v316, 0.0
  %v333 = vmax.f32 %v317, 0.0
  %v334 = vmax.f32 %v318, 0.0
  %v335 = vpack.c.bf16 %v327, %v319
  %v336 = vpack.c.bf16 %v328, %v320
  %v337 = vpack.c.bf16 %v329, %v321
  %v338 = vpack.c.bf16 %v330, %v322
  %v339 = vpack.c.bf16 %v331, %v323
  %v340 = vpack.c.bf16 %v332, %v324
  %v341 = vpack.c.bf16 %v333, %v325
  %v342 = vpack.c.bf16 %v334, %v326
  %v351 = vunpack.c.l.b16 %v335
  %v352 = vunpack.c.l.b16 %v336
  %v353 = vunpack.c.l.b16 %v337
  %v354 = vunpack.c.l.b16 %v338
  %v355 = vunpack.c.l.b16 %v339
  %v356 = vunpack.c.l.b16 %v340
  %v357 = vunpack.c.l.b16 %v341
  %v358 = vunpack.c.l.b16 %v342
  %v359 = vunpack.c.h.b16 %v335
  %v360 = vunpack.c.h.b16 %v336
  %v361 = vunpack.c.h.b16 %v337
  %v362 = vunpack.c.h.b16 %v338
  %v363 = vunpack.c.h.b16 %v339
  %v364 = vunpack.c.h.b16 %v340
  %v365 = vunpack.c.h.b16 %v341
  %v366 = vunpack.c.h.b16 %v342
  %v367 = vpack.c.b16 %v352, %v351
  %v368 = vpack.c.b16 %v354, %v353
  %v369 = vpack.c.b16 %v356, %v355
  %v370 = vpack.c.b16 %v358, %v357
  %v371 = vpack.c.b16 %v360, %v359
  %v372 = vpack.c.b16 %v362, %v361
  %v373 = vpack.c.b16 %v364, %v363
  %v374 = vpack.c.b16 %v366, %v365
  %383 = vst [vmem:[%s6] sm:$0xff] %v367
  %384 = vst [vmem:[%s6 + $0x8] sm:$0xff] %v368
  %385 = vst [vmem:[%s6 + $0x10] sm:$0xff] %v369
  %386 = vst [vmem:[%s6 + $0x18] sm:$0xff] %v370
  %387 = vst [vmem:[%s6 + $0x20] sm:$0xff] %v371
  %388 = vst [vmem:[%s6 + $0x28] sm:$0xff] %v372
  %389 = vst [vmem:[%s6 + $0x30] sm:$0xff] %v373
  %390 = vst [vmem:[%s6 + $0x38] sm:$0xff] %v374
  // Predicated region
  $region26: #{basic_block_forward.7} parent=0 // pred_check
    _
  $region27: #{basic_block_forward.7} parent=0 // pred_check_branch
    %392 = sbr.rel (0) target = $region29
  $region28: #{basic_block_forward.7} parent=0 // pred_region
    _
  $region29: #{basic_block_forward.7} parent=0 // pred_fallthru
    _
  // Predicated region
  $region30: #{basic_block_forward.7} parent=0 // pred_check
    _
  $region31: #{basic_block_forward.7} parent=0 // pred_check_branch
    %394 = sbr.rel (0) target = $region33
  $region32: #{basic_block_forward.7} parent=0 // pred_region
    _
  $region33: #{basic_block_forward.7} parent=0 // pred_fallthru
    _

// kernel: basic_block_forward.6
$region0: #{basic_block_forward.6}
  #allocation0 [shape = 'u32[]', space=smem, size = 0x4, offset = 0x4, fixed_abs, tag = 'smem constant byte address 0x4 - core index']
  #allocation1 [shape = 'u32[144,128]{1,0:T(1,128)}', space=vmem, size = 0x12000, scoped, tag = 'internal scratch']
  %s0 = inlined_call_operand.vmem [shape: bf16[2,8,8,128], index: 0, kind: input, shape index: {}]
  %s1 = inlined_call_operand.vmem [shape: bf16[128,128], index: 1, kind: input, shape index: {}]
  %s2 = inlined_call_operand.vmem [shape: bf16[2,64,128], index: 2, kind: output, shape index: {0}]
  %s3 = inlined_call_operand.vmem [shape: f32[2,1,2,128], index: 3, kind: output, shape index: {1}]
  %4 = xla_tuple %s2, %s3
  %s5 = sld [smem:[#allocation0]]
  $region49: #{basic_block_forward.6} parent=0
    _
  %s7 = ssub.s32 1, %s5
  %s8 = scalar_select 0, %s7, %s5
  loop: start=0, step=1, limit=4
  $region2: #{basic_block_forward.6} parent=0 // loop_pre_header
    _
  $region3: #{basic_block_forward.6} parent=0 // loop_header
    %s10 = sphi 0, %s14
    %p11 = scmp.ge.s32.totalorder %s10, 4
    %s17 = sphi 0, %s29
    %s18 = sphi 0, %s25
    %s19 = sphi 0, %s17
    %s20 = sphi 0, %s18
    %s21 = sphi 0, %s19
    %s22 = sphi 0, %s20
    %s34 = sphi 0, %s36
    %s37 = sphi 0, %s34
    %s38 = sphi 0, %s37
    %s54 = sphi 0, %s38
    %s58 = sphi 0, %s58
    %s60 = sphi 0, %s58
    %s61 = sphi 0, %s60
    %s75 = sphi 0, %s61
    %s83 = sphi 0, %s85
    %s86 = sphi 0, %s83
    %s87 = sphi 0, %s86
    %s103 = sphi 0, %s87
    %s111 = sphi 0, %s113
    %s114 = sphi 0, %s111
    %s115 = sphi 0, %s114
    %s131 = sphi 0, %s115
  $region4: #{basic_block_forward.6} parent=0 // loop_header_branch
    %13 = sbr.rel (%p11) target = $region8
  $region5: #{basic_block_forward.6} parent=0 // loop_body
    %s15 = ssub.s32 %s10, 1
    %s16 = ssub.s32 %s10, 2
    %s23 = sadd.s32 1, %s18
    %p24 = scmp.ge.s32.totalorder %s23, 1
    %s25 = scalar_select %p24, 0, %s23
    %s26 = sadd.s32 1, %s17
    %s27 = scalar_select %p24, %s26, %s17
    %p28 = scmp.ge.s32.totalorder %s27, 2
    %s29 = scalar_select %p28, 0, %s27
    %s30 = ssub.s32 %s17, %s29
    %s31 = ssub.s32 %s18, %s25
    %s32 = sor.u32 %s30, %s31
    %p33 = scmp.eq.s32.totalorder %s32, 0
    %s35 = sadd.s32 %s34, 1
    %s36 = scalar_select %p33, %s34, %s35
    %p39 = pneg %p33
    %p40 = scmp.eq.s32.totalorder %s10, 1
    %p41 = por %p39, %p40
    %p42 = scmp.ne.s32.totalorder %s34, %s37
    %p43 = scmp.eq.s32.totalorder %s10, 0
    %p44 = por %p42, %p43
    %p45 = scmp.ne.s32.totalorder %s34, %s37
    %p46 = scmp.eq.s32.totalorder %s15, 1
    %p47 = por %p45, %p46
    %p48 = scmp.ne.s32.totalorder %s37, %s38
    %p49 = scmp.eq.s32.totalorder %s15, 0
    %p50 = por %p48, %p49
    %p51 = scmp.ne.s32.totalorder %s37, %s38
    %p52 = scmp.eq.s32.totalorder %s16, 1
    %p53 = por %p51, %p52
    %p55 = scmp.ne.s32.totalorder %s38, %s54
    %p56 = scmp.eq.s32.totalorder %s16, 0
    %p57 = por %p55, %p56
    %s59 = sadd.s32 %s58, 1
    %p62 = scmp.eq.s32.totalorder %s10, 1
    %p63 = scmp.ne.s32.totalorder %s58, %s60
    %p64 = scmp.eq.s32.totalorder %s10, 0
    %p65 = por %p63, %p64
    %p66 = scmp.ne.s32.totalorder %s58, %s60
    %p67 = scmp.eq.s32.totalorder %s15, 1
    %p68 = por %p66, %p67
    %p69 = scmp.ne.s32.totalorder %s60, %s61
    %p70 = scmp.eq.s32.totalorder %s15, 0
    %p71 = por %p69, %p70
    %p72 = scmp.ne.s32.totalorder %s60, %s61
    %p73 = scmp.eq.s32.totalorder %s16, 1
    %p74 = por %p72, %p73
    %p76 = scmp.ne.s32.totalorder %s61, %s75
    %p77 = scmp.eq.s32.totalorder %s16, 0
    %p78 = por %p76, %p77
    %s79 = ssub.s32 %s17, %s29
    %s80 = ssub.s32 %s18, %s25
    %s81 = sor.u32 %s79, %s80
    %p82 = scmp.eq.s32.totalorder %s81, 0
    %s84 = sadd.s32 %s83, 1
    %s85 = scalar_select %p82, %s83, %s84
    %p88 = pneg %p82
    %p89 = scmp.eq.s32.totalorder %s10, 1
    %p90 = por %p88, %p89
    %p91 = scmp.ne.s32.totalorder %s83, %s86
    %p92 = scmp.eq.s32.totalorder %s10, 0
    %p93 = por %p91, %p92
    %p94 = scmp.ne.s32.totalorder %s83, %s86
    %p95 = scmp.eq.s32.totalorder %s15, 1
    %p96 = por %p94, %p95
    %p97 = scmp.ne.s32.totalorder %s86, %s87
    %p98 = scmp.eq.s32.totalorder %s15, 0
    %p99 = por %p97, %p98
    %p100 = scmp.ne.s32.totalorder %s86, %s87
    %p101 = scmp.eq.s32.totalorder %s16, 1
    %p102 = por %p100, %p101
    %p104 = scmp.ne.s32.totalorder %s87, %s103
    %p105 = scmp.eq.s32.totalorder %s16, 0
    %p106 = por %p104, %p105
    %s107 = ssub.s32 %s17, %s29
    %s108 = ssub.s32 %s18, %s25
    %s109 = sor.u32 %s107, %s108
    %p110 = scmp.eq.s32.totalorder %s109, 0
    %s112 = sadd.s32 %s111, 1
    %s113 = scalar_select %p110, %s111, %s112
    %p116 = pneg %p110
    %p117 = scmp.eq.s32.totalorder %s10, 1
    %p118 = por %p116, %p117
    %p119 = scmp.ne.s32.totalorder %s111, %s114
    %p120 = scmp.eq.s32.totalorder %s10, 0
    %p121 = por %p119, %p120
    %p122 = scmp.ne.s32.totalorder %s111, %s114
    %p123 = scmp.eq.s32.totalorder %s15, 1
    %p124 = por %p122, %p123
    %p125 = scmp.ne.s32.totalorder %s114, %s115
    %p126 = scmp.eq.s32.totalorder %s15, 0
    %p127 = por %p125, %p126
    %p128 = scmp.ne.s32.totalorder %s114, %s115
    %p129 = scmp.eq.s32.totalorder %s16, 1
    %p130 = por %p128, %p129
    %p132 = scmp.ne.s32.totalorder %s115, %s131
    %p133 = scmp.eq.s32.totalorder %s16, 0
    %p134 = por %p132, %p133
    %p135 = scmp.le.s32.totalorder 1, %s10
    %p136 = scmp.lt.s32.totalorder %s10, 3
    %p137 = pnand %p135, %p136
    %p138 = pneg %p137
    // Predicated region
    $region9: #{basic_block_forward.6} parent=5 // pred_check
      _
    $region10: #{basic_block_forward.6} parent=5 // pred_check_branch
      %140 = sbr.rel (%p137) target = $region12
    $region11: #{basic_block_forward.6} parent=5 // pred_region
      %s141 = ssub.s32 %s10, 1
      // Predicated region
      $region13: #{basic_block_forward.6} parent=11 // pred_check
        %p142 = pneg %p71
      $region14: #{basic_block_forward.6} parent=11 // pred_check_branch
        %144 = sbr.rel (%p142) target = $region16
      $region15: #{basic_block_forward.6} parent=11 // pred_region
        _
      $region16: #{basic_block_forward.6} parent=11 // pred_fallthru
        _
    $region12: #{basic_block_forward.6} parent=5 // pred_fallthru
      _
    %p145 = scmp.lt.s32.totalorder %s10, 2
    // Predicated region
    $region17: #{basic_block_forward.6} parent=5 // pred_check
      %p146 = pneg %p145
    $region18: #{basic_block_forward.6} parent=5 // pred_check_branch
      %148 = sbr.rel (%p146) target = $region20
    $region19: #{basic_block_forward.6} parent=5 // pred_region
      // Predicated region
      $region21: #{basic_block_forward.6} parent=19 // pred_check
        %p149 = pneg %p44
      $region22: #{basic_block_forward.6} parent=19 // pred_check_branch
        %151 = sbr.rel (%p149) target = $region24
      $region23: #{basic_block_forward.6} parent=19 // pred_region
        %s152 = smul.u32 8, %s18
        %p153 = scmp.lt.s32.totalorder %s17, 1
        %s154 = scalar_select %p153, %s17, 1
        %p155 = scmp.lt.s32.totalorder %s152, 7
        %s156 = scalar_select %p155, %s152, 7
        %s157 = smul.addr %s154, 8
        %s158 = sadd.s32 %s156, %s157
        %s159 = smul.addr %s158, 4
        %s160 = scalar_lea.vmem %s0, %s159
        %s161 = smul.u32 8, %s18
      $region24: #{basic_block_forward.6} parent=19 // pred_fallthru
        _
    $region20: #{basic_block_forward.6} parent=5 // pred_fallthru
      _
    %p162 = scmp.le.s32.totalorder 1, %s10
    %p163 = scmp.lt.s32.totalorder %s10, 3
    %p164 = pnand %p162, %p163
    %p165 = pneg %p164
    // Predicated region
    $region25: #{basic_block_forward.6} parent=5 // pred_check
      _
    $region26: #{basic_block_forward.6} parent=5 // pred_check_branch
      %167 = sbr.rel (%p164) target = $region28
    $region27: #{basic_block_forward.6} parent=5 // pred_region
      %s168 = ssub.s32 %s10, 1
      %s169 = smul.u32 8, %s20
      %p170 = scmp.lt.s32.totalorder %s19, 1
      %s171 = scalar_select %p170, %s19, 1
      %p172 = scmp.lt.s32.totalorder %s169, 7
      %s173 = scalar_select %p172, %s169, 7
      %s174 = smul.addr %s171, 8
      %s175 = sadd.s32 %s173, %s174
      %s176 = smul.addr %s175, 4
      %s177 = scalar_lea.vmem %s0, %s176
      %p178 = pneg %p50
      %p179 = pneg %p47
      %p180 = pneg %p71
      %p181 = pneg %p68
      %p182 = pneg %p99
      %p183 = pneg %p96
      %s184 = smul.u32 8, %s20
      %p185 = scmp.lt.s32.totalorder %s19, 1
      %s186 = scalar_select %p185, %s19, 1
      %p187 = scmp.lt.s32.totalorder %s184, 7
      %s188 = scalar_select %p187, %s184, 7
      %s189 = smul.addr %s186, 8
      %s190 = sadd.s32 %s188, %s189
      %s191 = smul.addr %s190, 4
      %s192 = scalar_lea.vmem %s2, %s191
      %p193 = pneg %p127
      %p194 = pneg %p124
      %p195 = scmp.lt.s32.totalorder %s19, 1
      %s196 = scalar_select %p195, %s19, 1
      %p197 = scmp.lt.s32.totalorder %s20, 0
      %s198 = scalar_select %p197, %s20, 0
      %s199 = sadd.s32 %s198, %s196
      %s200 = smul.addr %s199, 2
      %s201 = scalar_lea.vmem %s3, %s200
      %s202 = smul.u32 8, %s20
      %p203 = scmp.lt.s32.totalorder %s19, 1
      %s204 = scalar_select %p203, %s19, 1
      %p205 = scmp.lt.s32.totalorder %s202, 7
      %s206 = scalar_select %p205, %s202, 7
      %s207 = smul.addr %s204, 8
      %s208 = sadd.s32 %s206, %s207
      %s209 = smul.addr %s208, 4
      %s210 = scalar_lea.vmem %s0, %s209
      %s211 = smul.u32 8, %s20
      %s212 = smul.u32 8, %s20
      %p213 = scmp.lt.s32.totalorder %s19, 1
      %s214 = scalar_select %p213, %s19, 1
      %p215 = scmp.lt.s32.totalorder %s212, 7
      %s216 = scalar_select %p215, %s212, 7
      %s217 = smul.addr %s214, 8
      %s218 = sadd.s32 %s216, %s217
      %s219 = smul.addr %s218, 4
      %s220 = scalar_lea.vmem %s2, %s219
      %s221 = smul.u32 8, %s20
      %p222 = scmp.lt.s32.totalorder %s19, 1
      %s223 = scalar_select %p222, %s19, 1
      %p224 = scmp.lt.s32.totalorder %s20, 0
      %s225 = scalar_select %p224, %s20, 0
      %s226 = sadd.s32 %s225, %s223
      %s227 = smul.addr %s226, 2
      %s228 = scalar_lea.vmem %s3, %s227
      %v230 = vld [vmem:[%s210] sm:$0xf]
      %v231 = vld [vmem:[%s210 + $0x4] sm:$0xf]
      %v232 = vld [vmem:[%s210 + $0x8] sm:$0xf]
      %v233 = vld [vmem:[%s210 + $0xc] sm:$0xf]
      %v234 = vld [vmem:[%s210 + $0x10] sm:$0xf]
      %v235 = vld [vmem:[%s210 + $0x14] sm:$0xf]
      %v236 = vld [vmem:[%s210 + $0x18] sm:$0xf]
      %v237 = vld [vmem:[%s210 + $0x1c] sm:$0xf]
      %v238 = vld [vmem:[%s1] sm:$0xf]
      %v239 = vld [vmem:[%s1 + $0x4] sm:$0xf]
      %v240 = vld [vmem:[%s1 + $0x8] sm:$0xf]
      %v241 = vld [vmem:[%s1 + $0xc] sm:$0xf]
      %v242 = vld [vmem:[%s1 + $0x10] sm:$0xf]
      %v243 = vld [vmem:[%s1 + $0x14] sm:$0xf]
      %v244 = vld [vmem:[%s1 + $0x18] sm:$0xf]
      %v245 = vld [vmem:[%s1 + $0x1c] sm:$0xf]
      %v246 = vld [vmem:[%s1 + $0x20] sm:$0xf]
      %v247 = vld [vmem:[%s1 + $0x24] sm:$0xf]
      %v248 = vld [vmem:[%s1 + $0x28] sm:$0xf]
      %v249 = vld [vmem:[%s1 + $0x2c] sm:$0xf]
      %v250 = vld [vmem:[%s1 + $0x30] sm:$0xf]
      %v251 = vld [vmem:[%s1 + $0x34] sm:$0xf]
      %v252 = vld [vmem:[%s1 + $0x38] sm:$0xf]
      %v253 = vld [vmem:[%s1 + $0x3c] sm:$0xf]
      %v262 = vunpack.c.l.b16 %v230
      %v263 = vunpack.c.l.b16 %v231
      %v264 = vunpack.c.l.b16 %v232
      %v265 = vunpack.c.l.b16 %v233
      %v266 = vunpack.c.l.b16 %v234
      %v267 = vunpack.c.l.b16 %v235
      %v268 = vunpack.c.l.b16 %v236
      %v269 = vunpack.c.l.b16 %v237
      %v270 = vpack.c.b16 %v263, %v262
      %v271 = vpack.c.b16 %v265, %v264
      %v272 = vpack.c.b16 %v267, %v266
      %v273 = vpack.c.b16 %v269, %v268
      %v294 = vunpack.c.l.b16 %v238
      %v295 = vunpack.c.l.b16 %v239
      %v296 = vunpack.c.l.b16 %v240
      %v297 = vunpack.c.l.b16 %v241
      %v298 = vunpack.c.l.b16 %v242
      %v299 = vunpack.c.l.b16 %v243
      %v300 = vunpack.c.l.b16 %v244
      %v301 = vunpack.c.l.b16 %v245
      %v302 = vunpack.c.l.b16 %v246
      %v303 = vunpack.c.l.b16 %v247
      %v304 = vunpack.c.l.b16 %v248
      %v305 = vunpack.c.l.b16 %v249
      %v306 = vunpack.c.l.b16 %v250
      %v307 = vunpack.c.l.b16 %v251
      %v308 = vunpack.c.l.b16 %v252
      %v309 = vunpack.c.l.b16 %v253
      %v310 = vpack.c.b16 %v295, %v294
      %v311 = vpack.c.b16 %v297, %v296
      %v312 = vpack.c.b16 %v299, %v298
      %v313 = vpack.c.b16 %v301, %v300
      %v314 = vpack.c.b16 %v303, %v302
      %v315 = vpack.c.b16 %v305, %v304
      %v316 = vpack.c.b16 %v307, %v306
      %v317 = vpack.c.b16 %v309, %v308
      %326 = vmatprep.subr.bf16.mxu0 0
      %327 = vmatpush1.bf16.msra.mxu0 %v310
      %328 = vmatprep.subr.bf16.mxu0 0
      %329 = vmatpush1.bf16.msra.mxu0 %v311
      %330 = vmatprep.subr.bf16.mxu0 0
      %331 = vmatpush1.bf16.msra.mxu0 %v312
      %332 = vmatprep.subr.bf16.mxu0 0
      %333 = vmatpush1.bf16.msra.mxu0 %v313
      %334 = vmatprep.subr.bf16.mxu0 0
      %335 = vmatpush1.bf16.msra.mxu0 %v314
      %336 = vmatprep.subr.bf16.mxu0 0
      %337 = vmatpush1.bf16.msra.mxu0 %v315
      %338 = vmatprep.subr.bf16.mxu0 0
      %339 = vmatpush1.bf16.msra.mxu0 %v316
      %340 = vmatprep.subr.bf16.mxu0 0
      %341 = vmatpush1.bf16.msra.mxu0 %v317
      %342 = vmatprep.subr.bf16.mxu0 0
      %343 = vmatpush1.bf16.msra.mxu0 0
      %344 = vmatprep.subr.bf16.mxu0 0
      %345 = vmatpush1.bf16.msra.mxu0 0
      %346 = vmatprep.subr.bf16.mxu0 0
      %347 = vmatpush1.bf16.msra.mxu0 0
      %348 = vmatprep.subr.bf16.mxu0 0
      %349 = vmatpush1.bf16.msra.mxu0 0
      %350 = vmatprep.subr.bf16.mxu0 0
      %351 = vmatpush1.bf16.msra.mxu0 0
      %352 = vmatprep.subr.bf16.mxu0 0
      %353 = vmatpush1.bf16.msra.mxu0 0
      %354 = vmatprep.subr.bf16.mxu0 0
      %355 = vmatpush1.bf16.msra.mxu0 0
      %356 = vmatprep.subr.bf16.mxu0 0
      %357 = vmatpush1.bf16.msra.mxu0 0
      %358 = vmatprep.mubr.bf16.mxu0 0
      %359 = vmatmul.mubr.bf16.gmra.mrb[0].mxu0 %v270
      %v360 = vpop.f32.mrb[0].mxu0
      %v361 = vadd.f32 0.0, %v360
      %v362 = vpop.f32.mrb[0].mxu0
      %v363 = vpop.f32.mrb[0].mxu0
      %v364 = vadd.f32 0.0, %v363
      %v365 = vpop.f32.mrb[0].mxu0
      %366 = vmatprep.mubr.bf16.mxu0 0
      %367 = vmatmul.mubr.bf16.gmra.mrb[0].mxu0 %v271
      %v368 = vpop.f32.mrb[0].mxu0
      %v369 = vadd.f32 0.0, %v368
      %v370 = vpop.f32.mrb[0].mxu0
      %v371 = vpop.f32.mrb[0].mxu0
      %v372 = vadd.f32 0.0, %v371
      %v373 = vpop.f32.mrb[0].mxu0
      %374 = vmatprep.mubr.bf16.mxu0 0
      %375 = vmatmul.mubr.bf16.gmra.mrb[0].mxu0 %v272
      %v376 = vpop.f32.mrb[0].mxu0
      %v377 = vadd.f32 0.0, %v376
      %v378 = vpop.f32.mrb[0].mxu0
      %v379 = vpop.f32.mrb[0].mxu0
      %v380 = vadd.f32 0.0, %v379
      %v381 = vpop.f32.mrb[0].mxu0
      %382 = vmatprep.mubr.bf16.mxu0 0
      %383 = vmatmul.mubr.bf16.gmra.mrb[0].mxu0 %v273
      %v384 = vpop.f32.mrb[0].mxu0
      %v385 = vadd.f32 0.0, %v384
      %v386 = vpop.f32.mrb[0].mxu0
      %v387 = vpop.f32.mrb[0].mxu0
      %v388 = vadd.f32 0.0, %v387
      %v389 = vpop.f32.mrb[0].mxu0
      %390 = vdwg.mxu0
      %v391 = vpack.c.bf16 %v364, %v361
      %v392 = vpack.c.bf16 %v372, %v369
      %v393 = vpack.c.bf16 %v380, %v377
      %v394 = vpack.c.bf16 %v388, %v385
      %v399 = vunpack.c.l.b16 %v391
      %v400 = vunpack.c.h.b16 %v391
      %v401 = vunpack.c.l.b16 %v392
      %v402 = vunpack.c.h.b16 %v392
      %v403 = vunpack.c.l.b16 %v393
      %v404 = vunpack.c.h.b16 %v393
      %v405 = vunpack.c.l.b16 %v394
      %v406 = vunpack.c.h.b16 %v394
      %v407 = vpack.c.b16 %v399, %v399
      %v408 = vpack.c.b16 %v400, %v400
      %v409 = vpack.c.b16 %v401, %v401
      %v410 = vpack.c.b16 %v402, %v402
      %v411 = vpack.c.b16 %v403, %v403
      %v412 = vpack.c.b16 %v404, %v404
      %v413 = vpack.c.b16 %v405, %v405
      %v414 = vpack.c.b16 %v406, %v406
      %423 = vst [vmem:[%s220] sm:$0xf] %v407
      %424 = vst [vmem:[%s220 + $0x4] sm:$0xf] %v408
      %425 = vst [vmem:[%s220 + $0x8] sm:$0xf] %v409
      %426 = vst [vmem:[%s220 + $0xc] sm:$0xf] %v410
      %427 = vst [vmem:[%s220 + $0x10] sm:$0xf] %v411
      %428 = vst [vmem:[%s220 + $0x14] sm:$0xf] %v412
      %429 = vst [vmem:[%s220 + $0x18] sm:$0xf] %v413
      %430 = vst [vmem:[%s220 + $0x1c] sm:$0xf] %v414
      %v431 = vadd.f32 %v361, %v364
      %v432 = vadd.f32 %v431, %v369
      %v433 = vadd.f32 %v432, %v372
      %v434 = vadd.f32 %v433, %v377
      %v435 = vadd.f32 %v434, %v380
      %v436 = vadd.f32 %v435, %v385
      %v437 = vadd.f32 %v436, %v388
      %v438 = vrot.slane %v437, 4
      %v439 = vadd.f32 %v437, %v438
      %v440 = vrot.slane %v439, 2
      %v441 = vadd.f32 %v439, %v440
      %v442 = vrot.slane %v441, 1
      %v443 = vadd.f32 %v441, %v442
      %v444 = vmul.f32 %v361, %v361
      %v445 = vmul.f32 %v364, %v364
      %v446 = vmul.f32 %v369, %v369
      %v447 = vmul.f32 %v372, %v372
      %v448 = vmul.f32 %v377, %v377
      %v449 = vmul.f32 %v380, %v380
      %v450 = vmul.f32 %v385, %v385
      %v451 = vmul.f32 %v388, %v388
      %v452 = vadd.f32 %v444, %v445
      %v453 = vadd.f32 %v452, %v446
      %v454 = vadd.f32 %v453, %v447
      %v455 = vadd.f32 %v454, %v448
      %v456 = vadd.f32 %v455, %v449
      %v457 = vadd.f32 %v456, %v450
      %v458 = vadd.f32 %v457, %v451
      %v459 = vrot.slane %v458, 4
      %v460 = vadd.f32 %v458, %v459
      %v461 = vrot.slane %v460, 2
      %v462 = vadd.f32 %v460, %v461
      %v463 = vrot.slane %v462, 1
      %v464 = vadd.f32 %v462, %v463
      %vm465 = vcmask 1040384
      %v466 = vsel %vm465, %v443, %v464
      %467 = vst [vmem:[%s228] sm:$0x3] %v466
      %s468 = smul.u32 8, %s20
      %p469 = scmp.lt.s32.totalorder %s19, 1
      %s470 = scalar_select %p469, %s19, 1
      %p471 = scmp.lt.s32.totalorder %s468, 7
      %s472 = scalar_select %p471, %s468, 7
      %s473 = smul.addr %s470, 8
      %s474 = sadd.s32 %s472, %s473
      %s475 = smul.addr %s474, 4
      %s476 = scalar_lea.vmem %s2, %s475
      %p477 = scmp.lt.s32.totalorder %s19, 1
      %s478 = scalar_select %p477, %s19, 1
      %p479 = scmp.lt.s32.totalorder %s20, 0
      %s480 = scalar_select %p479, %s20, 0
      %s481 = sadd.s32 %s480, %s478
      %s482 = smul.addr %s481, 2
      %s483 = scalar_lea.vmem %s3, %s482
      // Predicated region
      $region29: #{basic_block_forward.6} parent=27 // pred_check
        %p484 = pneg %p96
      $region30: #{basic_block_forward.6} parent=27 // pred_check_branch
        %486 = sbr.rel (%p484) target = $region32
      $region31: #{basic_block_forward.6} parent=27 // pred_region
        %s487 = smul.u32 8, %s20
      $region32: #{basic_block_forward.6} parent=27 // pred_fallthru
        _
      // Predicated region
      $region33: #{basic_block_forward.6} parent=27 // pred_check
        %p488 = pneg %p124
      $region34: #{basic_block_forward.6} parent=27 // pred_check_branch
        %490 = sbr.rel (%p488) target = $region36
      $region35: #{basic_block_forward.6} parent=27 // pred_region
        _
      $region36: #{basic_block_forward.6} parent=27 // pred_fallthru
        _
    $region28: #{basic_block_forward.6} parent=5 // pred_fallthru
      _
    %p491 = scmp.le.s32.totalorder 2, %s10
    // Predicated region
    $region37: #{basic_block_forward.6} parent=5 // pred_check
      %p492 = pneg %p491
    $region38: #{basic_block_forward.6} parent=5 // pred_check_branch
      %494 = sbr.rel (%p492) target = $region40
    $region39: #{basic_block_forward.6} parent=5 // pred_region
      %s495 = ssub.s32 %s10, 2
      // Predicated region
      $region41: #{basic_block_forward.6} parent=39 // pred_check
        %p496 = pneg %p102
      $region42: #{basic_block_forward.6} parent=39 // pred_check_branch
        %498 = sbr.rel (%p496) target = $region44
      $region43: #{basic_block_forward.6} parent=39 // pred_region
        %s499 = smul.u32 8, %s22
        %p500 = scmp.lt.s32.totalorder %s21, 1
        %s501 = scalar_select %p500, %s21, 1
        %p502 = scmp.lt.s32.totalorder %s499, 7
        %s503 = scalar_select %p502, %s499, 7
        %s504 = smul.addr %s501, 8
        %s505 = sadd.s32 %s503, %s504
        %s506 = smul.addr %s505, 4
        %s507 = scalar_lea.vmem %s2, %s506
      $region44: #{basic_block_forward.6} parent=39 // pred_fallthru
        _
      // Predicated region
      $region45: #{basic_block_forward.6} parent=39 // pred_check
        %p508 = pneg %p130
      $region46: #{basic_block_forward.6} parent=39 // pred_check_branch
        %510 = sbr.rel (%p508) target = $region48
      $region47: #{basic_block_forward.6} parent=39 // pred_region
        %p511 = scmp.lt.s32.totalorder %s21, 1
        %s512 = scalar_select %p511, %s21, 1
        %p513 = scmp.lt.s32.totalorder %s22, 0
        %s514 = scalar_select %p513, %s22, 0
        %s515 = sadd.s32 %s514, %s512
        %s516 = smul.addr %s515, 2
        %s517 = scalar_lea.vmem %s3, %s516
      $region48: #{basic_block_forward.6} parent=39 // pred_fallthru
        _
    $region40: #{basic_block_forward.6} parent=5 // pred_fallthru
      _
  $region6: #{basic_block_forward.6} parent=0 // loop_footer
    %s14 = sadd.s32 1, %s10
  $region7: #{basic_block_forward.6} parent=0 // loop_footer_branch
    %9 = sbr.rel target = $region3
  $region8: #{basic_block_forward.6} parent=0 // loop_exit
    _

// kernel: basic_block_forward.4
$region0: #{basic_block_forward.4}
  #allocation0 [shape = 'u32[]', space=smem, size = 0x4, offset = 0x4, fixed_abs, tag = 'smem constant byte address 0x4 - core index']
  #allocation1 [shape = 'u32[144,128]{1,0:T(1,128)}', space=vmem, size = 0x12000, scoped, tag = 'internal scratch']
  #allocation2 [shape = 'bf16[64,1152]{1,0:T(16,128)(2,1)}', space=vmem, size = 0x24000, scoped, tag = 'scratch operand']
  %s0 = inlined_call_operand.vmem [shape: bf16[2,4,9,9,128], index: 0, kind: input, shape index: {}]
  %s1 = inlined_call_operand.vmem [shape: bf16[1152,128], index: 1, kind: input, shape index: {}]
  %s2 = inlined_call_operand.vmem [shape: bf16[2,64,128], index: 2, kind: output, shape index: {0}]
  %s3 = inlined_call_operand.vmem [shape: f32[2,1,2,128], index: 3, kind: output, shape index: {1}]
  %4 = xla_tuple %s2, %s3
  %s5 = sld [smem:[#allocation0]]
  $region49: #{basic_block_forward.4} parent=0
    _
  %s7 = ssub.s32 1, %s5
  %s8 = scalar_select 0, %s7, %s5
  loop: start=0, step=1, limit=4
  $region2: #{basic_block_forward.4} parent=0 // loop_pre_header
    _
  $region3: #{basic_block_forward.4} parent=0 // loop_header
    %s10 = sphi 0, %s14
    %p11 = scmp.ge.s32.totalorder %s10, 4
    %s17 = sphi 0, %s29
    %s18 = sphi 0, %s25
    %s19 = sphi 0, %s17
    %s20 = sphi 0, %s18
    %s21 = sphi 0, %s19
    %s22 = sphi 0, %s20
    %s32 = sphi 0, %s34
    %s35 = sphi 0, %s32
    %s36 = sphi 0, %s35
    %s52 = sphi 0, %s36
    %s56 = sphi 0, %s56
    %s58 = sphi 0, %s56
    %s59 = sphi 0, %s58
    %s73 = sphi 0, %s59
    %s81 = sphi 0, %s83
    %s84 = sphi 0, %s81
    %s85 = sphi 0, %s84
    %s101 = sphi 0, %s85
    %s109 = sphi 0, %s111
    %s112 = sphi 0, %s109
    %s113 = sphi 0, %s112
    %s129 = sphi 0, %s113
  $region4: #{basic_block_forward.4} parent=0 // loop_header_branch
    %13 = sbr.rel (%p11) target = $region8
  $region5: #{basic_block_forward.4} parent=0 // loop_body
    %s15 = ssub.s32 %s10, 1
    %s16 = ssub.s32 %s10, 2
    %s23 = sadd.s32 1, %s18
    %p24 = scmp.ge.s32.totalorder %s23, 1
    %s25 = scalar_select %p24, 0, %s23
    %s26 = sadd.s32 1, %s17
    %s27 = scalar_select %p24, %s26, %s17
    %p28 = scmp.ge.s32.totalorder %s27, 2
    %s29 = scalar_select %p28, 0, %s27
    %s30 = ssub.s32 %s17, %s29
    %p31 = scmp.eq.s32.totalorder %s30, 0
    %s33 = sadd.s32 %s32, 1
    %s34 = scalar_select %p31, %s32, %s33
    %p37 = pneg %p31
    %p38 = scmp.eq.s32.totalorder %s10, 1
    %p39 = por %p37, %p38
    %p40 = scmp.ne.s32.totalorder %s32, %s35
    %p41 = scmp.eq.s32.totalorder %s10, 0
    %p42 = por %p40, %p41
    %p43 = scmp.ne.s32.totalorder %s32, %s35
    %p44 = scmp.eq.s32.totalorder %s15, 1
    %p45 = por %p43, %p44
    %p46 = scmp.ne.s32.totalorder %s35, %s36
    %p47 = scmp.eq.s32.totalorder %s15, 0
    %p48 = por %p46, %p47
    %p49 = scmp.ne.s32.totalorder %s35, %s36
    %p50 = scmp.eq.s32.totalorder %s16, 1
    %p51 = por %p49, %p50
    %p53 = scmp.ne.s32.totalorder %s36, %s52
    %p54 = scmp.eq.s32.totalorder %s16, 0
    %p55 = por %p53, %p54
    %s57 = sadd.s32 %s56, 1
    %p60 = scmp.eq.s32.totalorder %s10, 1
    %p61 = scmp.ne.s32.totalorder %s56, %s58
    %p62 = scmp.eq.s32.totalorder %s10, 0
    %p63 = por %p61, %p62
    %p64 = scmp.ne.s32.totalorder %s56, %s58
    %p65 = scmp.eq.s32.totalorder %s15, 1
    %p66 = por %p64, %p65
    %p67 = scmp.ne.s32.totalorder %s58, %s59
    %p68 = scmp.eq.s32.totalorder %s15, 0
    %p69 = por %p67, %p68
    %p70 = scmp.ne.s32.totalorder %s58, %s59
    %p71 = scmp.eq.s32.totalorder %s16, 1
    %p72 = por %p70, %p71
    %p74 = scmp.ne.s32.totalorder %s59, %s73
    %p75 = scmp.eq.s32.totalorder %s16, 0
    %p76 = por %p74, %p75
    %s77 = ssub.s32 %s17, %s29
    %s78 = ssub.s32 %s18, %s25
    %s79 = sor.u32 %s77, %s78
    %p80 = scmp.eq.s32.totalorder %s79, 0
    %s82 = sadd.s32 %s81, 1
    %s83 = scalar_select %p80, %s81, %s82
    %p86 = pneg %p80
    %p87 = scmp.eq.s32.totalorder %s10, 1
    %p88 = por %p86, %p87
    %p89 = scmp.ne.s32.totalorder %s81, %s84
    %p90 = scmp.eq.s32.totalorder %s10, 0
    %p91 = por %p89, %p90
    %p92 = scmp.ne.s32.totalorder %s81, %s84
    %p93 = scmp.eq.s32.totalorder %s15, 1
    %p94 = por %p92, %p93
    %p95 = scmp.ne.s32.totalorder %s84, %s85
    %p96 = scmp.eq.s32.totalorder %s15, 0
    %p97 = por %p95, %p96
    %p98 = scmp.ne.s32.totalorder %s84, %s85
    %p99 = scmp.eq.s32.totalorder %s16, 1
    %p100 = por %p98, %p99
    %p102 = scmp.ne.s32.totalorder %s85, %s101
    %p103 = scmp.eq.s32.totalorder %s16, 0
    %p104 = por %p102, %p103
    %s105 = ssub.s32 %s17, %s29
    %s106 = ssub.s32 %s18, %s25
    %s107 = sor.u32 %s105, %s106
    %p108 = scmp.eq.s32.totalorder %s107, 0
    %s110 = sadd.s32 %s109, 1
    %s111 = scalar_select %p108, %s109, %s110
    %p114 = pneg %p108
    %p115 = scmp.eq.s32.totalorder %s10, 1
    %p116 = por %p114, %p115
    %p117 = scmp.ne.s32.totalorder %s109, %s112
    %p118 = scmp.eq.s32.totalorder %s10, 0
    %p119 = por %p117, %p118
    %p120 = scmp.ne.s32.totalorder %s109, %s112
    %p121 = scmp.eq.s32.totalorder %s15, 1
    %p122 = por %p120, %p121
    %p123 = scmp.ne.s32.totalorder %s112, %s113
    %p124 = scmp.eq.s32.totalorder %s15, 0
    %p125 = por %p123, %p124
    %p126 = scmp.ne.s32.totalorder %s112, %s113
    %p127 = scmp.eq.s32.totalorder %s16, 1
    %p128 = por %p126, %p127
    %p130 = scmp.ne.s32.totalorder %s113, %s129
    %p131 = scmp.eq.s32.totalorder %s16, 0
    %p132 = por %p130, %p131
    %p133 = scmp.le.s32.totalorder 1, %s10
    %p134 = scmp.lt.s32.totalorder %s10, 3
    %p135 = pnand %p133, %p134
    %p136 = pneg %p135
    // Predicated region
    $region9: #{basic_block_forward.4} parent=5 // pred_check
      _
    $region10: #{basic_block_forward.4} parent=5 // pred_check_branch
      %138 = sbr.rel (%p135) target = $region12
    $region11: #{basic_block_forward.4} parent=5 // pred_region
      %s139 = ssub.s32 %s10, 1
      // Predicated region
      $region13: #{basic_block_forward.4} parent=11 // pred_check
        %p140 = pneg %p69
      $region14: #{basic_block_forward.4} parent=11 // pred_check_branch
        %142 = sbr.rel (%p140) target = $region16
      $region15: #{basic_block_forward.4} parent=11 // pred_region
        _
      $region16: #{basic_block_forward.4} parent=11 // pred_fallthru
        _
    $region12: #{basic_block_forward.4} parent=5 // pred_fallthru
      _
    %p143 = scmp.lt.s32.totalorder %s10, 2
    // Predicated region
    $region17: #{basic_block_forward.4} parent=5 // pred_check
      %p144 = pneg %p143
    $region18: #{basic_block_forward.4} parent=5 // pred_check_branch
      %146 = sbr.rel (%p144) target = $region20
    $region19: #{basic_block_forward.4} parent=5 // pred_region
      // Predicated region
      $region21: #{basic_block_forward.4} parent=19 // pred_check
        %p147 = pneg %p42
      $region22: #{basic_block_forward.4} parent=19 // pred_check_branch
        %149 = sbr.rel (%p147) target = $region24
      $region23: #{basic_block_forward.4} parent=19 // pred_region
        %p150 = scmp.lt.s32.totalorder %s17, 1
        %s151 = scalar_select %p150, %s17, 1
        %s152 = smul.addr %s151, 72
        %s153 = smul.addr %s152, 4
        %s154 = scalar_lea.vmem %s0, %s153
      $region24: #{basic_block_forward.4} parent=19 // pred_fallthru
        _
    $region20: #{basic_block_forward.4} parent=5 // pred_fallthru
      _
    %p155 = scmp.le.s32.totalorder 1, %s10
    %p156 = scmp.lt.s32.totalorder %s10, 3
    %p157 = pnand %p155, %p156
    %p158 = pneg %p157
    // Predicated region
    $region25: #{basic_block_forward.4} parent=5 // pred_check
      _
    $region26: #{basic_block_forward.4} parent=5 // pred_check_branch
      %160 = sbr.rel (%p157) target = $region28
    $region27: #{basic_block_forward.4} parent=5 // pred_region
      %s161 = ssub.s32 %s10, 1
      %p162 = scmp.lt.s32.totalorder %s19, 1
      %s163 = scalar_select %p162, %s19, 1
      %s164 = smul.addr %s163, 72
      %s165 = smul.addr %s164, 4
      %s166 = scalar_lea.vmem %s0, %s165
      %p167 = pneg %p48
      %p168 = pneg %p45
      %p169 = pneg %p69
      %p170 = pneg %p66
      %p171 = pneg %p97
      %p172 = pneg %p94
      %s173 = smul.u32 8, %s20
      %p174 = scmp.lt.s32.totalorder %s19, 1
      %s175 = scalar_select %p174, %s19, 1
      %p176 = scmp.lt.s32.totalorder %s173, 7
      %s177 = scalar_select %p176, %s173, 7
      %s178 = smul.addr %s175, 8
      %s179 = sadd.s32 %s177, %s178
      %s180 = smul.addr %s179, 4
      %s181 = scalar_lea.vmem %s2, %s180
      %p182 = pneg %p125
      %p183 = pneg %p122
      %p184 = scmp.lt.s32.totalorder %s19, 1
      %s185 = scalar_select %p184, %s19, 1
      %p186 = scmp.lt.s32.totalorder %s20, 0
      %s187 = scalar_select %p186, %s20, 0
      %s188 = sadd.s32 %s187, %s185
      %s189 = smul.addr %s188, 2
      %s190 = scalar_lea.vmem %s3, %s189
      %p191 = scmp.lt.s32.totalorder %s19, 1
      %s192 = scalar_select %p191, %s19, 1
      %s193 = smul.addr %s192, 72
      %s194 = smul.addr %s193, 4
      %s195 = scalar_lea.vmem %s0, %s194
      %s196 = smul.u32 8, %s20
      %p197 = scmp.lt.s32.totalorder %s19, 1
      %s198 = scalar_select %p197, %s19, 1
      %p199 = scmp.lt.s32.totalorder %s196, 7
      %s200 = scalar_select %p199, %s196, 7
      %s201 = smul.addr %s198, 8
      %s202 = sadd.s32 %s200, %s201
      %s203 = smul.addr %s202, 4
      %s204 = scalar_lea.vmem %s2, %s203
      %s205 = smul.u32 8, %s20
      %p206 = scmp.lt.s32.totalorder %s19, 1
      %s207 = scalar_select %p206, %s19, 1
      %p208 = scmp.lt.s32.totalorder %s20, 0
      %s209 = scalar_select %p208, %s20, 0
      %s210 = sadd.s32 %s209, %s207
      %s211 = smul.addr %s210, 2
      %s212 = scalar_lea.vmem %s3, %s211
      %s214 = smul.u32 %s20, 8
      %s215 = smul.u32 %s214, 2
      %s216 = smul.addr %s215, 4
      %s217 = scalar_lea.vmem %s195, %s216
      %v218 = vld [vmem:[%s217] sm:$0xf]
      %v219 = vld [vmem:[%s217 + $0x8] sm:$0xf]
      %v220 = vld [vmem:[%s217 + $0x10] sm:$0xf]
      %v221 = vld [vmem:[%s217 + $0x18] sm:$0xf]
      %v222 = vld [vmem:[%s217 + $0x20] sm:$0xf]
      %v223 = vld [vmem:[%s217 + $0x28] sm:$0xf]
      %v224 = vld [vmem:[%s217 + $0x30] sm:$0xf]
      %v225 = vld [vmem:[%s217 + $0x38] sm:$0xf]
      %v234 = vunpack.c.l.b16 %v218
      %v235 = vunpack.c.l.b16 %v219
      %v236 = vunpack.c.l.b16 %v220
      %v237 = vunpack.c.l.b16 %v221
      %v238 = vunpack.c.l.b16 %v222
      %v239 = vunpack.c.l.b16 %v223
      %v240 = vunpack.c.l.b16 %v224
      %v241 = vunpack.c.l.b16 %v225
      %v242 = vpack.c.b16 %v235, %v234
      %v243 = vpack.c.b16 %v237, %v236
      %v244 = vpack.c.b16 %v239, %v238
      %v245 = vpack.c.b16 %v241, %v240
      %250 = vst [vmem:[#allocation2] sm:$0xff] %v242
      %251 = vst [vmem:[#allocation2 + $0x48] sm:$0xff] %v243
      %252 = vst [vmem:[#allocation2 + $0x90] sm:$0xff] %v244
      %253 = vst [vmem:[#allocation2 + $0xd8] sm:$0xff] %v245
      %s254 = sadd.s32 %s215, 18
      %s255 = smul.addr %s254, 4
      %s256 = scalar_lea.vmem %s195, %s255
      %v257 = vld [vmem:[%s256] sm:$0xf]
      %v258 = vld [vmem:[%s256 + $0x8] sm:$0xf]
      %v259 = vld [vmem:[%s256 + $0x10] sm:$0xf]
      %v260 = vld [vmem:[%s256 + $0x18] sm:$0xf]
      %v261 = vld [vmem:[%s256 + $0x20] sm:$0xf]
      %v262 = vld [vmem:[%s256 + $0x28] sm:$0xf]
      %v263 = vld [vmem:[%s256 + $0x30] sm:$0xf]
      %v264 = vld [vmem:[%s256 + $0x38] sm:$0xf]
      %v273 = vunpack.c.l.b16 %v257
      %v274 = vunpack.c.l.b16 %v258
      %v275 = vunpack.c.l.b16 %v259
      %v276 = vunpack.c.l.b16 %v260
      %v277 = vunpack.c.l.b16 %v261
      %v278 = vunpack.c.l.b16 %v262
      %v279 = vunpack.c.l.b16 %v263
      %v280 = vunpack.c.l.b16 %v264
      %v281 = vpack.c.b16 %v274, %v273
      %v282 = vpack.c.b16 %v276, %v275
      %v283 = vpack.c.b16 %v278, %v277
      %v284 = vpack.c.b16 %v280, %v279
      %289 = vst [vmem:[#allocation2 + $0x8] sm:$0xff] %v281
      %290 = vst [vmem:[#allocation2 + $0x50] sm:$0xff] %v282
      %291 = vst [vmem:[#allocation2 + $0x98] sm:$0xff] %v283
      %292 = vst [vmem:[#allocation2 + $0xe0] sm:$0xff] %v284
      %v293 = vld [vmem:[%s217] sm:$0xf]
      %v294 = vld [vmem:[%s217 + $0x4] sm:$0x1]
      %v295 = vld [vmem:[%s217 + $0x8] sm:$0xf]
      %v296 = vld [vmem:[%s217 + $0xc] sm:$0x1]
      %v297 = vld [vmem:[%s217 + $0x10] sm:$0xf]
      %v298 = vld [vmem:[%s217 + $0x14] sm:$0x1]
      %v299 = vld [vmem:[%s217 + $0x18] sm:$0xf]
      %v300 = vld [vmem:[%s217 + $0x1c] sm:$0x1]
      %v301 = vld [vmem:[%s217 + $0x20] sm:$0xf]
      %v302 = vld [vmem:[%s217 + $0x24] sm:$0x1]
      %v303 = vld [vmem:[%s217 + $0x28] sm:$0xf]
      %v304 = vld [vmem:[%s217 + $0x2c] sm:$0x1]
      %v305 = vld [vmem:[%s217 + $0x30] sm:$0xf]
      %v306 = vld [vmem:[%s217 + $0x34] sm:$0x1]
      %v307 = vld [vmem:[%s217 + $0x38] sm:$0xf]
      %v308 = vld [vmem:[%s217 + $0x3c] sm:$0x1]
      %vm309 = vsmask.f32 3328
      %vm310 = vsmask.f32 7440
      %vm311 = vmor %vm309, %vm310
      %v313 = vshrl.u32 %v293, 16
      %v315 = vrot.slane %v313, 4
      %v316 = vshll.u32 %v293, 16
      %v318 = vrot.slane %v316, 5
      %v319 = vor.u32 %v315, %v318
      %v320 = vrot.slane %v319, 4
      %v322 = vshll.u32 %v294, 16
      %v324 = vrot.slane %v322, 5
      %v325 = vsel %vm311, %v320, %v324
      %v327 = vshrl.u32 %v295, 16
      %v329 = vrot.slane %v327, 4
      %v330 = vshll.u32 %v295, 16
      %v332 = vrot.slane %v330, 5
      %v333 = vor.u32 %v329, %v332
      %v334 = vrot.slane %v333, 4
      %v336 = vshll.u32 %v296, 16
      %v338 = vrot.slane %v336, 5
      %v339 = vsel %vm311, %v334, %v338
      %v341 = vshrl.u32 %v297, 16
      %v343 = vrot.slane %v341, 4
      %v344 = vshll.u32 %v297, 16
      %v346 = vrot.slane %v344, 5
      %v347 = vor.u32 %v343, %v346
      %v348 = vrot.slane %v347, 4
      %v350 = vshll.u32 %v298, 16
      %v352 = vrot.slane %v350, 5
      %v353 = vsel %vm311, %v348, %v352
      %v355 = vshrl.u32 %v299, 16
      %v357 = vrot.slane %v355, 4
      %v358 = vshll.u32 %v299, 16
      %v360 = vrot.slane %v358, 5
      %v361 = vor.u32 %v357, %v360
      %v362 = vrot.slane %v361, 4
      %v364 = vshll.u32 %v300, 16
      %v366 = vrot.slane %v364, 5
      %v367 = vsel %vm311, %v362, %v366
      %v369 = vshrl.u32 %v301, 16
      %v371 = vrot.slane %v369, 4
      %v372 = vshll.u32 %v301, 16
      %v374 = vrot.slane %v372, 5
      %v375 = vor.u32 %v371, %v374
      %v376 = vrot.slane %v375, 4
      %v378 = vshll.u32 %v302, 16
      %v380 = vrot.slane %v378, 5
      %v381 = vsel %vm311, %v376, %v380
      %v383 = vshrl.u32 %v303, 16
      %v385 = vrot.slane %v383, 4
      %v386 = vshll.u32 %v303, 16
      %v388 = vrot.slane %v386, 5
      %v389 = vor.u32 %v385, %v388
      %v390 = vrot.slane %v389, 4
      %v392 = vshll.u32 %v304, 16
      %v394 = vrot.slane %v392, 5
      %v395 = vsel %vm311, %v390, %v394
      %v397 = vshrl.u32 %v305, 16
      %v399 = vrot.slane %v397, 4
      %v400 = vshll.u32 %v305, 16
      %v402 = vrot.slane %v400, 5
      %v403 = vor.u32 %v399, %v402
      %v404 = vrot.slane %v403, 4
      %v406 = vshll.u32 %v306, 16
      %v408 = vrot.slane %v406, 5
      %v409 = vsel %vm311, %v404, %v408
      %v411 = vshrl.u32 %v307, 16
      %v413 = vrot.slane %v411, 4
      %v414 = vshll.u32 %v307, 16
      %v416 = vrot.slane %v414, 5
      %v417 = vor.u32 %v413, %v416
      %v418 = vrot.slane %v417, 4
      %v420 = vshll.u32 %v308, 16
      %v422 = vrot.slane %v420, 5
      %v423 = vsel %vm311, %v418, %v422
      %v424 = vunpack.c.l.b16 %v325
      %v425 = vunpack.c.l.b16 %v339
      %v426 = vunpack.c.l.b16 %v353
      %v427 = vunpack.c.l.b16 %v367
      %v428 = vunpack.c.l.b16 %v381
      %v429 = vunpack.c.l.b16 %v395
      %v430 = vunpack.c.l.b16 %v409
      %v431 = vunpack.c.l.b16 %v423
      %v432 = vpack.c.b16 %v425, %v424
      %v433 = vpack.c.b16 %v427, %v426
      %v434 = vpack.c.b16 %v429, %v428
      %v435 = vpack.c.b16 %v431, %v430
      %440 = vst [vmem:[#allocation2 + $0x10] sm:$0xff] %v432
      %441 = vst [vmem:[#allocation2 + $0x58] sm:$0xff] %v433
      %442 = vst [vmem:[#allocation2 + $0xa0] sm:$0xff] %v434
      %443 = vst [vmem:[#allocation2 + $0xe8] sm:$0xff] %v435
      %s444 = sadd.s32 %s215, 36
      %s445 = smul.addr %s444, 4
      %s446 = scalar_lea.vmem %s195, %s445
      %v447 = vld [vmem:[%s446] sm:$0xf]
      %v448 = vld [vmem:[%s446 + $0x8] sm:$0xf]
      %v449 = vld [vmem:[%s446 + $0x10] sm:$0xf]
      %v450 = vld [vmem:[%s446 + $0x18] sm:$0xf]
      %v451 = vld [vmem:[%s446 + $0x20] sm:$0xf]
      %v452 = vld [vmem:[%s446 + $0x28] sm:$0xf]
      %v453 = vld [vmem:[%s446 + $0x30] sm:$0xf]
      %v454 = vld [vmem:[%s446 + $0x38] sm:$0xf]
      %v463 = vunpack.c.l.b16 %v447
      %v464 = vunpack.c.l.b16 %v448
      %v465 = vunpack.c.l.b16 %v449
      %v466 = vunpack.c.l.b16 %v450
      %v467 = vunpack.c.l.b16 %v451
      %v468 = vunpack.c.l.b16 %v452
      %v469 = vunpack.c.l.b16 %v453
      %v470 = vunpack.c.l.b16 %v454
      %v471 = vpack.c.b16 %v464, %v463
      %v472 = vpack.c.b16 %v466, %v465
      %v473 = vpack.c.b16 %v468, %v467
      %v474 = vpack.c.b16 %v470, %v469
      %479 = vst [vmem:[#allocation2 + $0x18] sm:$0xff] %v471
      %480 = vst [vmem:[#allocation2 + $0x60] sm:$0xff] %v472
      %481 = vst [vmem:[#allocation2 + $0xa8] sm:$0xff] %v473
      %482 = vst [vmem:[#allocation2 + $0xf0] sm:$0xff] %v474
      %s483 = sadd.s32 %s215, 54
      %s484 = smul.addr %s483, 4
      %s485 = scalar_lea.vmem %s195, %s484
      %v486 = vld [vmem:[%s485] sm:$0xf]
      %v487 = vld [vmem:[%s485 + $0x8] sm:$0xf]
      %v488 = vld [vmem:[%s485 + $0x10] sm:$0xf]
      %v489 = vld [vmem:[%s485 + $0x18] sm:$0xf]
      %v490 = vld [vmem:[%s485 + $0x20] sm:$0xf]
      %v491 = vld [vmem:[%s485 + $0x28] sm:$0xf]
      %v492 = vld [vmem:[%s485 + $0x30] sm:$0xf]
      %v493 = vld [vmem:[%s485 + $0x38] sm:$0xf]
      %v502 = vunpack.c.l.b16 %v486
      %v503 = vunpack.c.l.b16 %v487
      %v504 = vunpack.c.l.b16 %v488
      %v505 = vunpack.c.l.b16 %v489
      %v506 = vunpack.c.l.b16 %v490
      %v507 = vunpack.c.l.b16 %v491
      %v508 = vunpack.c.l.b16 %v492
      %v509 = vunpack.c.l.b16 %v493
      %v510 = vpack.c.b16 %v503, %v502
      %v511 = vpack.c.b16 %v505, %v504
      %v512 = vpack.c.b16 %v507, %v506
      %v513 = vpack.c.b16 %v509, %v508
      %518 = vst [vmem:[#allocation2 + $0x20] sm:$0xff] %v510
      %519 = vst [vmem:[#allocation2 + $0x68] sm:$0xff] %v511
      %520 = vst [vmem:[#allocation2 + $0xb0] sm:$0xff] %v512
      %521 = vst [vmem:[#allocation2 + $0xf8] sm:$0xff] %v513
      %v522 = vld [vmem:[%s446] sm:$0xf]
      %v523 = vld [vmem:[%s446 + $0x4] sm:$0x1]
      %v524 = vld [vmem:[%s446 + $0x8] sm:$0xf]
      %v525 = vld [vmem:[%s446 + $0xc] sm:$0x1]
      %v526 = vld [vmem:[%s446 + $0x10] sm:$0xf]
      %v527 = vld [vmem:[%s446 + $0x14] sm:$0x1]
      %v528 = vld [vmem:[%s446 + $0x18] sm:$0xf]
      %v529 = vld [vmem:[%s446 + $0x1c] sm:$0x1]
      %v530 = vld [vmem:[%s446 + $0x20] sm:$0xf]
      %v531 = vld [vmem:[%s446 + $0x24] sm:$0x1]
      %v532 = vld [vmem:[%s446 + $0x28] sm:$0xf]
      %v533 = vld [vmem:[%s446 + $0x2c] sm:$0x1]
      %v534 = vld [vmem:[%s446 + $0x30] sm:$0xf]
      %v535 = vld [vmem:[%s446 + $0x34] sm:$0x1]
      %v536 = vld [vmem:[%s446 + $0x38] sm:$0xf]
      %v537 = vld [vmem:[%s446 + $0x3c] sm:$0x1]
      %v539 = vshrl.u32 %v522, 16
      %v541 = vrot.slane %v539, 4
      %v542 = vshll.u32 %v522, 16
      %v544 = vrot.slane %v542, 5
      %v545 = vor.u32 %v541, %v544
      %v546 = vrot.slane %v545, 4
      %v548 = vshll.u32 %v523, 16
      %v550 = vrot.slane %v548, 5
      %v551 = vsel %vm311, %v546, %v550
      %v553 = vshrl.u32 %v524, 16
      %v555 = vrot.slane %v553, 4
      %v556 = vshll.u32 %v524, 16
      %v558 = vrot.slane %v556, 5
      %v559 = vor.u32 %v555, %v558
      %v560 = vrot.slane %v559, 4
      %v562 = vshll.u32 %v525, 16
      %v564 = vrot.slane %v562, 5
      %v565 = vsel %vm311, %v560, %v564
      %v567 = vshrl.u32 %v526, 16
      %v569 = vrot.slane %v567, 4
      %v570 = vshll.u32 %v526, 16
      %v572 = vrot.slane %v570, 5
      %v573 = vor.u32 %v569, %v572
      %v574 = vrot.slane %v573, 4
      %v576 = vshll.u32 %v527, 16
      %v578 = vrot.slane %v576, 5
      %v579 = vsel %vm311, %v574, %v578
      %v581 = vshrl.u32 %v528, 16
      %v583 = vrot.slane %v581, 4
      %v584 = vshll.u32 %v528, 16
      %v586 = vrot.slane %v584, 5
      %v587 = vor.u32 %v583, %v586
      %v588 = vrot.slane %v587, 4
      %v590 = vshll.u32 %v529, 16
      %v592 = vrot.slane %v590, 5
      %v593 = vsel %vm311, %v588, %v592
      %v595 = vshrl.u32 %v530, 16
      %v597 = vrot.slane %v595, 4
      %v598 = vshll.u32 %v530, 16
      %v600 = vrot.slane %v598, 5
      %v601 = vor.u32 %v597, %v600
      %v602 = vrot.slane %v601, 4
      %v604 = vshll.u32 %v531, 16
      %v606 = vrot.slane %v604, 5
      %v607 = vsel %vm311, %v602, %v606
      %v609 = vshrl.u32 %v532, 16
      %v611 = vrot.slane %v609, 4
      %v612 = vshll.u32 %v532, 16
      %v614 = vrot.slane %v612, 5
      %v615 = vor.u32 %v611, %v614
      %v616 = vrot.slane %v615, 4
      %v618 = vshll.u32 %v533, 16
      %v620 = vrot.slane %v618, 5
      %v621 = vsel %vm311, %v616, %v620
      %v623 = vshrl.u32 %v534, 16
      %v625 = vrot.slane %v623, 4
      %v626 = vshll.u32 %v534, 16
      %v628 = vrot.slane %v626, 5
      %v629 = vor.u32 %v625, %v628
      %v630 = vrot.slane %v629, 4
      %v632 = vshll.u32 %v535, 16
      %v634 = vrot.slane %v632, 5
      %v635 = vsel %vm311, %v630, %v634
      %v637 = vshrl.u32 %v536, 16
      %v639 = vrot.slane %v637, 4
      %v640 = vshll.u32 %v536, 16
      %v642 = vrot.slane %v640, 5
      %v643 = vor.u32 %v639, %v642
      %v644 = vrot.slane %v643, 4
      %v646 = vshll.u32 %v537, 16
      %v648 = vrot.slane %v646, 5
      %v649 = vsel %vm311, %v644, %v648
      %v650 = vunpack.c.l.b16 %v551
      %v651 = vunpack.c.l.b16 %v565
      %v652 = vunpack.c.l.b16 %v579
      %v653 = vunpack.c.l.b16 %v593
      %v654 = vunpack.c.l.b16 %v607
      %v655 = vunpack.c.l.b16 %v621
      %v656 = vunpack.c.l.b16 %v635
      %v657 = vunpack.c.l.b16 %v649
      %v658 = vpack.c.b16 %v651, %v650
      %v659 = vpack.c.b16 %v653, %v652
      %v660 = vpack.c.b16 %v655, %v654
      %v661 = vpack.c.b16 %v657, %v656
      %666 = vst [vmem:[#allocation2 + $0x28] sm:$0xff] %v658
      %667 = vst [vmem:[#allocation2 + $0x70] sm:$0xff] %v659
      %668 = vst [vmem:[#allocation2 + $0xb8] sm:$0xff] %v660
      %669 = vst [vmem:[#allocation2 + $0x100] sm:$0xff] %v661
      %s670 = sadd.s32 %s214, 1
      %s671 = smul.u32 %s670, 2
      %s672 = smul.addr %s671, 4
      %s673 = scalar_lea.vmem %s195, %s672
      %v674 = vld [vmem:[%s673] sm:$0xf]
      %v675 = vld [vmem:[%s673 + $0x8] sm:$0xf]
      %v676 = vld [vmem:[%s673 + $0x10] sm:$0xf]
      %v677 = vld [vmem:[%s673 + $0x18] sm:$0xf]
      %v678 = vld [vmem:[%s673 + $0x20] sm:$0xf]
      %v679 = vld [vmem:[%s673 + $0x28] sm:$0xf]
      %v680 = vld [vmem:[%s673 + $0x30] sm:$0xf]
      %v681 = vld [vmem:[%s673 + $0x38] sm:$0xf]
      %v690 = vunpack.c.l.b16 %v674
      %v691 = vunpack.c.l.b16 %v675
      %v692 = vunpack.c.l.b16 %v676
      %v693 = vunpack.c.l.b16 %v677
      %v694 = vunpack.c.l.b16 %v678
      %v695 = vunpack.c.l.b16 %v679
      %v696 = vunpack.c.l.b16 %v680
      %v697 = vunpack.c.l.b16 %v681
      %v698 = vpack.c.b16 %v691, %v690
      %v699 = vpack.c.b16 %v693, %v692
      %v700 = vpack.c.b16 %v695, %v694
      %v701 = vpack.c.b16 %v697, %v696
      %706 = vst [vmem:[#allocation2 + $0x30] sm:$0xff] %v698
      %707 = vst [vmem:[#allocation2 + $0x78] sm:$0xff] %v699
      %708 = vst [vmem:[#allocation2 + $0xc0] sm:$0xff] %v700
      %709 = vst [vmem:[#allocation2 + $0x108] sm:$0xff] %v701
      %s710 = sadd.s32 %s671, 18
      %s711 = smul.addr %s710, 4
      %s712 = scalar_lea.vmem %s195, %s711
      %v713 = vld [vmem:[%s712] sm:$0xf]
      %v714 = vld [vmem:[%s712 + $0x8] sm:$0xf]
      %v715 = vld [vmem:[%s712 + $0x10] sm:$0xf]
      %v716 = vld [vmem:[%s712 + $0x18] sm:$0xf]
      %v717 = vld [vmem:[%s712 + $0x20] sm:$0xf]
      %v718 = vld [vmem:[%s712 + $0x28] sm:$0xf]
      %v719 = vld [vmem:[%s712 + $0x30] sm:$0xf]
      %v720 = vld [vmem:[%s712 + $0x38] sm:$0xf]
      %v729 = vunpack.c.l.b16 %v713
      %v730 = vunpack.c.l.b16 %v714
      %v731 = vunpack.c.l.b16 %v715
      %v732 = vunpack.c.l.b16 %v716
      %v733 = vunpack.c.l.b16 %v717
      %v734 = vunpack.c.l.b16 %v718
      %v735 = vunpack.c.l.b16 %v719
      %v736 = vunpack.c.l.b16 %v720
      %v737 = vpack.c.b16 %v730, %v729
      %v738 = vpack.c.b16 %v732, %v731
      %v739 = vpack.c.b16 %v734, %v733
      %v740 = vpack.c.b16 %v736, %v735
      %745 = vst [vmem:[#allocation2 + $0x38] sm:$0xff] %v737
      %746 = vst [vmem:[#allocation2 + $0x80] sm:$0xff] %v738
      %747 = vst [vmem:[#allocation2 + $0xc8] sm:$0xff] %v739
      %748 = vst [vmem:[#allocation2 + $0x110] sm:$0xff] %v740
      %v749 = vld [vmem:[%s673] sm:$0xf]
      %v750 = vld [vmem:[%s673 + $0x4] sm:$0x1]
      %v751 = vld [vmem:[%s673 + $0x8] sm:$0xf]
      %v752 = vld [vmem:[%s673 + $0xc] sm:$0x1]
      %v753 = vld [vmem:[%s673 + $0x10] sm:$0xf]
      %v754 = vld [vmem:[%s673 + $0x14] sm:$0x1]
      %v755 = vld [vmem:[%s673 + $0x18] sm:$0xf]
      %v756 = vld [vmem:[%s673 + $0x1c] sm:$0x1]
      %v757 = vld [vmem:[%s673 + $0x20] sm:$0xf]
      %v758 = vld [vmem:[%s673 + $0x24] sm:$0x1]
      %v759 = vld [vmem:[%s673 + $0x28] sm:$0xf]
      %v760 = vld [vmem:[%s673 + $0x2c] sm:$0x1]
      %v761 = vld [vmem:[%s673 + $0x30] sm:$0xf]
      %v762 = vld [vmem:[%s673 + $0x34] sm:$0x1]
      %v763 = vld [vmem:[%s673 + $0x38] sm:$0xf]
      %v764 = vld [vmem:[%s673 + $0x3c] sm:$0x1]
      %v766 = vshrl.u32 %v749, 16
      %v768 = vrot.slane %v766, 4
      %v769 = vshll.u32 %v749, 16
      %v771 = vrot.slane %v769, 5
      %v772 = vor.u32 %v768, %v771
      %v773 = vrot.slane %v772, 4
      %v775 = vshll.u32 %v750, 16
      %v777 = vrot.slane %v775, 5
      %v778 = vsel %vm311, %v773, %v777
      %v780 = vshrl.u32 %v751, 16
      %v782 = vrot.slane %v780, 4
      %v783 = vshll.u32 %v751, 16
      %v785 = vrot.slane %v783, 5
      %v786 = vor.u32 %v782, %v785
      %v787 = vrot.slane %v786, 4
      %v789 = vshll.u32 %v752, 16
      %v791 = vrot.slane %v789, 5
      %v792 = vsel %vm311, %v787, %v791
      %v794 = vshrl.u32 %v753, 16
      %v796 = vrot.slane %v794, 4
      %v797 = vshll.u32 %v753, 16
      %v799 = vrot.slane %v797, 5
      %v800 = vor.u32 %v796, %v799
      %v801 = vrot.slane %v800, 4
      %v803 = vshll.u32 %v754, 16
      %v805 = vrot.slane %v803, 5
      %v806 = vsel %vm311, %v801, %v805
      %v808 = vshrl.u32 %v755, 16
      %v810 = vrot.slane %v808, 4
      %v811 = vshll.u32 %v755, 16
      %v813 = vrot.slane %v811, 5
      %v814 = vor.u32 %v810, %v813
      %v815 = vrot.slane %v814, 4
      %v817 = vshll.u32 %v756, 16
      %v819 = vrot.slane %v817, 5
      %v820 = vsel %vm311, %v815, %v819
      %v822 = vshrl.u32 %v757, 16
      %v824 = vrot.slane %v822, 4
      %v825 = vshll.u32 %v757, 16
      %v827 = vrot.slane %v825, 5
      %v828 = vor.u32 %v824, %v827
      %v829 = vrot.slane %v828, 4
      %v831 = vshll.u32 %v758, 16
      %v833 = vrot.slane %v831, 5
      %v834 = vsel %vm311, %v829, %v833
      %v836 = vshrl.u32 %v759, 16
      %v838 = vrot.slane %v836, 4
      %v839 = vshll.u32 %v759, 16
      %v841 = vrot.slane %v839, 5
      %v842 = vor.u32 %v838, %v841
      %v843 = vrot.slane %v842, 4
      %v845 = vshll.u32 %v760, 16
      %v847 = vrot.slane %v845, 5
      %v848 = vsel %vm311, %v843, %v847
      %v850 = vshrl.u32 %v761, 16
      %v852 = vrot.slane %v850, 4
      %v853 = vshll.u32 %v761, 16
      %v855 = vrot.slane %v853, 5
      %v856 = vor.u32 %v852, %v855
      %v857 = vrot.slane %v856, 4
      %v859 = vshll.u32 %v762, 16
      %v861 = vrot.slane %v859, 5
      %v862 = vsel %vm311, %v857, %v861
      %v864 = vshrl.u32 %v763, 16
      %v866 = vrot.slane %v864, 4
      %v867 = vshll.u32 %v763, 16
      %v869 = vrot.slane %v867, 5
      %v870 = vor.u32 %v866, %v869
      %v871 = vrot.slane %v870, 4
      %v873 = vshll.u32 %v764, 16
      %v875 = vrot.slane %v873, 5
      %v876 = vsel %vm311, %v871, %v875
      %v877 = vunpack.c.l.b16 %v778
      %v878 = vunpack.c.l.b16 %v792
      %v879 = vunpack.c.l.b16 %v806
      %v880 = vunpack.c.l.b16 %v820
      %v881 = vunpack.c.l.b16 %v834
      %v882 = vunpack.c.l.b16 %v848
      %v883 = vunpack.c.l.b16 %v862
      %v884 = vunpack.c.l.b16 %v876
      %v885 = vpack.c.b16 %v878, %v877
      %v886 = vpack.c.b16 %v880, %v879
      %v887 = vpack.c.b16 %v882, %v881
      %v888 = vpack.c.b16 %v884, %v883
      %893 = vst [vmem:[#allocation2 + $0x40] sm:$0xff] %v885
      %894 = vst [vmem:[#allocation2 + $0x88] sm:$0xff] %v886
      %895 = vst [vmem:[#allocation2 + $0xd0] sm:$0xff] %v887
      %896 = vst [vmem:[#allocation2 + $0x118] sm:$0xff] %v888
      %v897 = vld [vmem:[#allocation2] sm:$0xff]
      %v898 = vld [vmem:[#allocation2 + $0x8] sm:$0xff]
      %v899 = vld [vmem:[#allocation2 + $0x10] sm:$0xff]
      %v900 = vld [vmem:[#allocation2 + $0x18] sm:$0xff]
      %v901 = vld [vmem:[#allocation2 + $0x20] sm:$0xff]
      %v902 = vld [vmem:[#allocation2 + $0x28] sm:$0xff]
      %v903 = vld [vmem:[#allocation2 + $0x30] sm:$0xff]
      %v904 = vld [vmem:[#allocation2 + $0x38] sm:$0xff]
      %v905 = vld [vmem:[#allocation2 + $0x40] sm:$0xff]
      %v906 = vld [vmem:[#allocation2 + $0x48] sm:$0xff]
      %v907 = vld [vmem:[#allocation2 + $0x50] sm:$0xff]
      %v908 = vld [vmem:[#allocation2 + $0x58] sm:$0xff]
      %v909 = vld [vmem:[#allocation2 + $0x60] sm:$0xff]
      %v910 = vld [vmem:[#allocation2 + $0x68] sm:$0xff]
      %v911 = vld [vmem:[#allocation2 + $0x70] sm:$0xff]
      %v912 = vld [vmem:[#allocation2 + $0x78] sm:$0xff]
      %v913 = vld [vmem:[#allocation2 + $0x80] sm:$0xff]
      %v914 = vld [vmem:[#allocation2 + $0x88] sm:$0xff]
      %v915 = vld [vmem:[#allocation2 + $0x90] sm:$0xff]
      %v916 = vld [vmem:[#allocation2 + $0x98] sm:$0xff]
      %v917 = vld [vmem:[#allocation2 + $0xa0] sm:$0xff]
      %v918 = vld [vmem:[#allocation2 + $0xa8] sm:$0xff]
      %v919 = vld [vmem:[#allocation2 + $0xb0] sm:$0xff]
      %v920 = vld [vmem:[#allocation2 + $0xb8] sm:$0xff]
      %v921 = vld [vmem:[#allocation2 + $0xc0] sm:$0xff]
      %v922 = vld [vmem:[#allocation2 + $0xc8] sm:$0xff]
      %v923 = vld [vmem:[#allocation2 + $0xd0] sm:$0xff]
      %v924 = vld [vmem:[#allocation2 + $0xd8] sm:$0xff]
      %v925 = vld [vmem:[#allocation2 + $0xe0] sm:$0xff]
      %v926 = vld [vmem:[#allocation2 + $0xe8] sm:$0xff]
      %v927 = vld [vmem:[#allocation2 + $0xf0] sm:$0xff]
      %v928 = vld [vmem:[#allocation2 + $0xf8] sm:$0xff]
      %v929 = vld [vmem:[#allocation2 + $0x100] sm:$0xff]
      %v930 = vld [vmem:[#allocation2 + $0x108] sm:$0xff]
      %v931 = vld [vmem:[#allocation2 + $0x110] sm:$0xff]
      %v932 = vld [vmem:[#allocation2 + $0x118] sm:$0xff]
      %v933 = vld [vmem:[%s1] sm:$0xf]
      %v934 = vld [vmem:[%s1 + $0x4] sm:$0xf]
      %v935 = vld [vmem:[%s1 + $0x8] sm:$0xf]
      %v936 = vld [vmem:[%s1 + $0xc] sm:$0xf]
      %v937 = vld [vmem:[%s1 + $0x10] sm:$0xf]
      %v938 = vld [vmem:[%s1 + $0x14] sm:$0xf]
      %v939 = vld [vmem:[%s1 + $0x18] sm:$0xf]
      %v940 = vld [vmem:[%s1 + $0x1c] sm:$0xf]
      %v941 = vld [vmem:[%s1 + $0x20] sm:$0xf]
      %v942 = vld [vmem:[%s1 + $0x24] sm:$0xf]
      %v943 = vld [vmem:[%s1 + $0x28] sm:$0xf]
      %v944 = vld [vmem:[%s1 + $0x2c] sm:$0xf]
      %v945 = vld [vmem:[%s1 + $0x30] sm:$0xf]
      %v946 = vld [vmem:[%s1 + $0x34] sm:$0xf]
      %v947 = vld [vmem:[%s1 + $0x38] sm:$0xf]
      %v948 = vld [vmem:[%s1 + $0x3c] sm:$0xf]
      %v949 = vld [vmem:[%s1 + $0x40] sm:$0xf]
      %v950 = vld [vmem:[%s1 + $0x44] sm:$0xf]
      %v951 = vld [vmem:[%s1 + $0x48] sm:$0xf]
      %v952 = vld [vmem:[%s1 + $0x4c] sm:$0xf]
      %v953 = vld [vmem:[%s1 + $0x50] sm:$0xf]
      %v954 = vld [vmem:[%s1 + $0x54] sm:$0xf]
      %v955 = vld [vmem:[%s1 + $0x58] sm:$0xf]
      %v956 = vld [vmem:[%s1 + $0x5c] sm:$0xf]
      %v957 = vld [vmem:[%s1 + $0x60] sm:$0xf]
      %v958 = vld [vmem:[%s1 + $0x64] sm:$0xf]
      %v959 = vld [vmem:[%s1 + $0x68] sm:$0xf]
      %v960 = vld [vmem:[%s1 + $0x6c] sm:$0xf]
      %v961 = vld [vmem:[%s1 + $0x70] sm:$0xf]
      %v962 = vld [vmem:[%s1 + $0x74] sm:$0xf]
      %v963 = vld [vmem:[%s1 + $0x78] sm:$0xf]
      %v964 = vld [vmem:[%s1 + $0x7c] sm:$0xf]
      %v965 = vld [vmem:[%s1 + $0x80] sm:$0xf]
      %v966 = vld [vmem:[%s1 + $0x84] sm:$0xf]
      %v967 = vld [vmem:[%s1 + $0x88] sm:$0xf]
      %v968 = vld [vmem:[%s1 + $0x8c] sm:$0xf]
      %v969 = vld [vmem:[%s1 + $0x90] sm:$0xf]
      %v970 = vld [vmem:[%s1 + $0x94] sm:$0xf]
      %v971 = vld [vmem:[%s1 + $0x98] sm:$0xf]
      %v972 = vld [vmem:[%s1 + $0x9c] sm:$0xf]
      %v973 = vld [vmem:[%s1 + $0xa0] sm:$0xf]
      %v974 = vld [vmem:[%s1 + $0xa4] sm:$0xf]
      %v975 = vld [vmem:[%s1 + $0xa8] sm:$0xf]
      %v976 = vld [vmem:[%s1 + $0xac] sm:$0xf]
      %v977 = vld [vmem:[%s1 + $0xb0] sm:$0xf]
      %v978 = vld [vmem:[%s1 + $0xb4] sm:$0xf]
      %v979 = vld [vmem:[%s1 + $0xb8] sm:$0xf]
      %v980 = vld [vmem:[%s1 + $0xbc] sm:$0xf]
      %v981 = vld [vmem:[%s1 + $0xc0] sm:$0xf]
      %v982 = vld [vmem:[%s1 + $0xc4] sm:$0xf]
      %v983 = vld [vmem:[%s1 + $0xc8] sm:$0xf]
      %v984 = vld [vmem:[%s1 + $0xcc] sm:$0xf]
      %v985 = vld [vmem:[%s1 + $0xd0] sm:$0xf]
      %v986 = vld [vmem:[%s1 + $0xd4] sm:$0xf]
      %v987 = vld [vmem:[%s1 + $0xd8] sm:$0xf]
      %v988 = vld [vmem:[%s1 + $0xdc] sm:$0xf]
      %v989 = vld [vmem:[%s1 + $0xe0] sm:$0xf]
      %v990 = vld [vmem:[%s1 + $0xe4] sm:$0xf]
      %v991 = vld [vmem:[%s1 + $0xe8] sm:$0xf]
      %v992 = vld [vmem:[%s1 + $0xec] sm:$0xf]
      %v993 = vld [vmem:[%s1 + $0xf0] sm:$0xf]
      %v994 = vld [vmem:[%s1 + $0xf4] sm:$0xf]
      %v995 = vld [vmem:[%s1 + $0xf8] sm:$0xf]
      %v996 = vld [vmem:[%s1 + $0xfc] sm:$0xf]
      %v997 = vld [vmem:[%s1 + $0x100] sm:$0xf]
      %v998 = vld [vmem:[%s1 + $0x104] sm:$0xf]
      %v999 = vld [vmem:[%s1 + $0x108] sm:$0xf]
      %v1000 = vld [vmem:[%s1 + $0x10c] sm:$0xf]
      %v1001 = vld [vmem:[%s1 + $0x110] sm:$0xf]
      %v1002 = vld [vmem:[%s1 + $0x114] sm:$0xf]
      %v1003 = vld [vmem:[%s1 + $0x118] sm:$0xf]
      %v1004 = vld [vmem:[%s1 + $0x11c] sm:$0xf]
      %v1005 = vld [vmem:[%s1 + $0x120] sm:$0xf]
      %v1006 = vld [vmem:[%s1 + $0x124] sm:$0xf]
      %v1007 = vld [vmem:[%s1 + $0x128] sm:$0xf]
      %v1008 = vld [vmem:[%s1 + $0x12c] sm:$0xf]
      %v1009 = vld [vmem:[%s1 + $0x130] sm:$0xf]
      %v1010 = vld [vmem:[%s1 + $0x134] sm:$0xf]
      %v1011 = vld [vmem:[%s1 + $0x138] sm:$0xf]
      %v1012 = vld [vmem:[%s1 + $0x13c] sm:$0xf]
      %v1013 = vld [vmem:[%s1 + $0x140] sm:$0xf]
      %v1014 = vld [vmem:[%s1 + $0x144] sm:$0xf]
      %v1015 = vld [vmem:[%s1 + $0x148] sm:$0xf]
      %v1016 = vld [vmem:[%s1 + $0x14c] sm:$0xf]
      %v1017 = vld [vmem:[%s1 + $0x150] sm:$0xf]
      %v1018 = vld [vmem:[%s1 + $0x154] sm:$0xf]
      %v1019 = vld [vmem:[%s1 + $0x158] sm:$0xf]
      %v1020 = vld [vmem:[%s1 + $0x15c] sm:$0xf]
      %v1021 = vld [vmem:[%s1 + $0x160] sm:$0xf]
      %v1022 = vld [vmem:[%s1 + $0x164] sm:$0xf]
      %v1023 = vld [vmem:[%s1 + $0x168] sm:$0xf]
      %v1024 = vld [vmem:[%s1 + $0x16c] sm:$0xf]
      %v1025 = vld [vmem:[%s1 + $0x170] sm:$0xf]
      %v1026 = vld [vmem:[%s1 + $0x174] sm:$0xf]
      %v1027 = vld [vmem:[%s1 + $0x178] sm:$0xf]
      %v1028 = vld [vmem:[%s1 + $0x17c] sm:$0xf]
      %v1029 = vld [vmem:[%s1 + $0x180] sm:$0xf]
      %v1030 = vld [vmem:[%s1 + $0x184] sm:$0xf]
      %v1031 = vld [vmem:[%s1 + $0x188] sm:$0xf]
      %v1032 = vld [vmem:[%s1 + $0x18c] sm:$0xf]
      %v1033 = vld [vmem:[%s1 + $0x190] sm:$0xf]
      %v1034 = vld [vmem:[%s1 + $0x194] sm:$0xf]
      %v1035 = vld [vmem:[%s1 + $0x198] sm:$0xf]
      %v1036 = vld [vmem:[%s1 + $0x19c] sm:$0xf]
      %v1037 = vld [vmem:[%s1 + $0x1a0] sm:$0xf]
      %v1038 = vld [vmem:[%s1 + $0x1a4] sm:$0xf]
      %v1039 = vld [vmem:[%s1 + $0x1a8] sm:$0xf]
      %v1040 = vld [vmem:[%s1 + $0x1ac] sm:$0xf]
      %v1041 = vld [vmem:[%s1 + $0x1b0] sm:$0xf]
      %v1042 = vld [vmem:[%s1 + $0x1b4] sm:$0xf]
      %v1043 = vld [vmem:[%s1 + $0x1b8] sm:$0xf]
      %v1044 = vld [vmem:[%s1 + $0x1bc] sm:$0xf]
      %v1045 = vld [vmem:[%s1 + $0x1c0] sm:$0xf]
      %v1046 = vld [vmem:[%s1 + $0x1c4] sm:$0xf]
      %v1047 = vld [vmem:[%s1 + $0x1c8] sm:$0xf]
      %v1048 = vld [vmem:[%s1 + $0x1cc] sm:$0xf]
      %v1049 = vld [vmem:[%s1 + $0x1d0] sm:$0xf]
      %v1050 = vld [vmem:[%s1 + $0x1d4] sm:$0xf]
      %v1051 = vld [vmem:[%s1 + $0x1d8] sm:$0xf]
      %v1052 = vld [vmem:[%s1 + $0x1dc] sm:$0xf]
      %v1053 = vld [vmem:[%s1 + $0x1e0] sm:$0xf]
      %v1054 = vld [vmem:[%s1 + $0x1e4] sm:$0xf]
      %v1055 = vld [vmem:[%s1 + $0x1e8] sm:$0xf]
      %v1056 = vld [vmem:[%s1 + $0x1ec] sm:$0xf]
      %v1057 = vld [vmem:[%s1 + $0x1f0] sm:$0xf]
      %v1058 = vld [vmem:[%s1 + $0x1f4] sm:$0xf]
      %v1059 = vld [vmem:[%s1 + $0x1f8] sm:$0xf]
      %v1060 = vld [vmem:[%s1 + $0x1fc] sm:$0xf]
      %v1061 = vld [vmem:[%s1 + $0x200] sm:$0xf]
      %v1062 = vld [vmem:[%s1 + $0x204] sm:$0xf]
      %v1063 = vld [vmem:[%s1 + $0x208] sm:$0xf]
      %v1064 = vld [vmem:[%s1 + $0x20c] sm:$0xf]
      %v1065 = vld [vmem:[%s1 + $0x210] sm:$0xf]
      %v1066 = vld [vmem:[%s1 + $0x214] sm:$0xf]
      %v1067 = vld [vmem:[%s1 + $0x218] sm:$0xf]
      %v1068 = vld [vmem:[%s1 + $0x21c] sm:$0xf]
      %v1069 = vld [vmem:[%s1 + $0x220] sm:$0xf]
      %v1070 = vld [vmem:[%s1 + $0x224] sm:$0xf]
      %v1071 = vld [vmem:[%s1 + $0x228] sm:$0xf]
      %v1072 = vld [vmem:[%s1 + $0x22c] sm:$0xf]
      %v1073 = vld [vmem:[%s1 + $0x230] sm:$0xf]
      %v1074 = vld [vmem:[%s1 + $0x234] sm:$0xf]
      %v1075 = vld [vmem:[%s1 + $0x238] sm:$0xf]
      %v1076 = vld [vmem:[%s1 + $0x23c] sm:$0xf]
      %v1221 = vunpack.c.l.b16 %v933
      %v1222 = vunpack.c.l.b16 %v934
      %v1223 = vunpack.c.l.b16 %v935
      %v1224 = vunpack.c.l.b16 %v936
      %v1225 = vunpack.c.l.b16 %v937
      %v1226 = vunpack.c.l.b16 %v938
      %v1227 = vunpack.c.l.b16 %v939
      %v1228 = vunpack.c.l.b16 %v940
      %v1229 = vunpack.c.l.b16 %v941
      %v1230 = vunpack.c.l.b16 %v942
      %v1231 = vunpack.c.l.b16 %v943
      %v1232 = vunpack.c.l.b16 %v944
      %v1233 = vunpack.c.l.b16 %v945
      %v1234 = vunpack.c.l.b16 %v946
      %v1235 = vunpack.c.l.b16 %v947
      %v1236 = vunpack.c.l.b16 %v948
      %v1237 = vunpack.c.l.b16 %v949
      %v1238 = vunpack.c.l.b16 %v950
      %v1239 = vunpack.c.l.b16 %v951
      %v1240 = vunpack.c.l.b16 %v952
      %v1241 = vunpack.c.l.b16 %v953
      %v1242 = vunpack.c.l.b16 %v954
      %v1243 = vunpack.c.l.b16 %v955
      %v1244 = vunpack.c.l.b16 %v956
      %v1245 = vunpack.c.l.b16 %v957
      %v1246 = vunpack.c.l.b16 %v958
      %v1247 = vunpack.c.l.b16 %v959
      %v1248 = vunpack.c.l.b16 %v960
      %v1249 = vunpack.c.l.b16 %v961
      %v1250 = vunpack.c.l.b16 %v962
      %v1251 = vunpack.c.l.b16 %v963
      %v1252 = vunpack.c.l.b16 %v964
      %v1253 = vunpack.c.l.b16 %v965
      %v1254 = vunpack.c.l.b16 %v966
      %v1255 = vunpack.c.l.b16 %v967
      %v1256 = vunpack.c.l.b16 %v968
      %v1257 = vunpack.c.l.b16 %v969
      %v1258 = vunpack.c.l.b16 %v970
      %v1259 = vunpack.c.l.b16 %v971
      %v1260 = vunpack.c.l.b16 %v972
      %v1261 = vunpack.c.l.b16 %v973
      %v1262 = vunpack.c.l.b16 %v974
      %v1263 = vunpack.c.l.b16 %v975
      %v1264 = vunpack.c.l.b16 %v976
      %v1265 = vunpack.c.l.b16 %v977
      %v1266 = vunpack.c.l.b16 %v978
      %v1267 = vunpack.c.l.b16 %v979
      %v1268 = vunpack.c.l.b16 %v980
      %v1269 = vunpack.c.l.b16 %v981
      %v1270 = vunpack.c.l.b16 %v982
      %v1271 = vunpack.c.l.b16 %v983
      %v1272 = vunpack.c.l.b16 %v984
      %v1273 = vunpack.c.l.b16 %v985
      %v1274 = vunpack.c.l.b16 %v986
      %v1275 = vunpack.c.l.b16 %v987
      %v1276 = vunpack.c.l.b16 %v988
      %v1277 = vunpack.c.l.b16 %v989
      %v1278 = vunpack.c.l.b16 %v990
      %v1279 = vunpack.c.l.b16 %v991
      %v1280 = vunpack.c.l.b16 %v992
      %v1281 = vunpack.c.l.b16 %v993
      %v1282 = vunpack.c.l.b16 %v994
      %v1283 = vunpack.c.l.b16 %v995
      %v1284 = vunpack.c.l.b16 %v996
      %v1285 = vunpack.c.l.b16 %v997
      %v1286 = vunpack.c.l.b16 %v998
      %v1287 = vunpack.c.l.b16 %v999
      %v1288 = vunpack.c.l.b16 %v1000
      %v1289 = vunpack.c.l.b16 %v1001
      %v1290 = vunpack.c.l.b16 %v1002
      %v1291 = vunpack.c.l.b16 %v1003
      %v1292 = vunpack.c.l.b16 %v1004
      %v1293 = vunpack.c.l.b16 %v1005
      %v1294 = vunpack.c.l.b16 %v1006
      %v1295 = vunpack.c.l.b16 %v1007
      %v1296 = vunpack.c.l.b16 %v1008
      %v1297 = vunpack.c.l.b16 %v1009
      %v1298 = vunpack.c.l.b16 %v1010
      %v1299 = vunpack.c.l.b16 %v1011
      %v1300 = vunpack.c.l.b16 %v1012
      %v1301 = vunpack.c.l.b16 %v1013
      %v1302 = vunpack.c.l.b16 %v1014
      %v1303 = vunpack.c.l.b16 %v1015
      %v1304 = vunpack.c.l.b16 %v1016
      %v1305 = vunpack.c.l.b16 %v1017
      %v1306 = vunpack.c.l.b16 %v1018
      %v1307 = vunpack.c.l.b16 %v1019
      %v1308 = vunpack.c.l.b16 %v1020
      %v1309 = vunpack.c.l.b16 %v1021
      %v1310 = vunpack.c.l.b16 %v1022
      %v1311 = vunpack.c.l.b16 %v1023
      %v1312 = vunpack.c.l.b16 %v1024
      %v1313 = vunpack.c.l.b16 %v1025
      %v1314 = vunpack.c.l.b16 %v1026
      %v1315 = vunpack.c.l.b16 %v1027
      %v1316 = vunpack.c.l.b16 %v1028
      %v1317 = vunpack.c.l.b16 %v1029
      %v1318 = vunpack.c.l.b16 %v1030
      %v1319 = vunpack.c.l.b16 %v1031
      %v1320 = vunpack.c.l.b16 %v1032
      %v1321 = vunpack.c.l.b16 %v1033
      %v1322 = vunpack.c.l.b16 %v1034
      %v1323 = vunpack.c.l.b16 %v1035
      %v1324 = vunpack.c.l.b16 %v1036
      %v1325 = vunpack.c.l.b16 %v1037
      %v1326 = vunpack.c.l.b16 %v1038
      %v1327 = vunpack.c.l.b16 %v1039
      %v1328 = vunpack.c.l.b16 %v1040
      %v1329 = vunpack.c.l.b16 %v1041
      %v1330 = vunpack.c.l.b16 %v1042
      %v1331 = vunpack.c.l.b16 %v1043
      %v1332 = vunpack.c.l.b16 %v1044
      %v1333 = vunpack.c.l.b16 %v1045
      %v1334 = vunpack.c.l.b16 %v1046
      %v1335 = vunpack.c.l.b16 %v1047
      %v1336 = vunpack.c.l.b16 %v1048
      %v1337 = vunpack.c.l.b16 %v1049
      %v1338 = vunpack.c.l.b16 %v1050
      %v1339 = vunpack.c.l.b16 %v1051
      %v1340 = vunpack.c.l.b16 %v1052
      %v1341 = vunpack.c.l.b16 %v1053
      %v1342 = vunpack.c.l.b16 %v1054
      %v1343 = vunpack.c.l.b16 %v1055
      %v1344 = vunpack.c.l.b16 %v1056
      %v1345 = vunpack.c.l.b16 %v1057
      %v1346 = vunpack.c.l.b16 %v1058
      %v1347 = vunpack.c.l.b16 %v1059
      %v1348 = vunpack.c.l.b16 %v1060
      %v1349 = vunpack.c.l.b16 %v1061
      %v1350 = vunpack.c.l.b16 %v1062
      %v1351 = vunpack.c.l.b16 %v1063
      %v1352 = vunpack.c.l.b16 %v1064
      %v1353 = vunpack.c.l.b16 %v1065
      %v1354 = vunpack.c.l.b16 %v1066
      %v1355 = vunpack.c.l.b16 %v1067
      %v1356 = vunpack.c.l.b16 %v1068
      %v1357 = vunpack.c.l.b16 %v1069
      %v1358 = vunpack.c.l.b16 %v1070
      %v1359 = vunpack.c.l.b16 %v1071
      %v1360 = vunpack.c.l.b16 %v1072
      %v1361 = vunpack.c.l.b16 %v1073
      %v1362 = vunpack.c.l.b16 %v1074
      %v1363 = vunpack.c.l.b16 %v1075
      %v1364 = vunpack.c.l.b16 %v1076
      %v1365 = vpack.c.b16 %v1222, %v1221
      %v1366 = vpack.c.b16 %v1224, %v1223
      %v1367 = vpack.c.b16 %v1226, %v1225
      %v1368 = vpack.c.b16 %v1228, %v1227
      %v1369 = vpack.c.b16 %v1230, %v1229
      %v1370 = vpack.c.b16 %v1232, %v1231
      %v1371 = vpack.c.b16 %v1234, %v1233
      %v1372 = vpack.c.b16 %v1236, %v1235
      %v1373 = vpack.c.b16 %v1238, %v1237
      %v1374 = vpack.c.b16 %v1240, %v1239
      %v1375 = vpack.c.b16 %v1242, %v1241
      %v1376 = vpack.c.b16 %v1244, %v1243
      %v1377 = vpack.c.b16 %v1246, %v1245
      %v1378 = vpack.c.b16 %v1248, %v1247
      %v1379 = vpack.c.b16 %v1250, %v1249
      %v1380 = vpack.c.b16 %v1252, %v1251
      %v1381 = vpack.c.b16 %v1254, %v1253
      %v1382 = vpack.c.b16 %v1256, %v1255
      %v1383 = vpack.c.b16 %v1258, %v1257
      %v1384 = vpack.c.b16 %v1260, %v1259
      %v1385 = vpack.c.b16 %v1262, %v1261
      %v1386 = vpack.c.b16 %v1264, %v1263
      %v1387 = vpack.c.b16 %v1266, %v1265
      %v1388 = vpack.c.b16 %v1268, %v1267
      %v1389 = vpack.c.b16 %v1270, %v1269
      %v1390 = vpack.c.b16 %v1272, %v1271
      %v1391 = vpack.c.b16 %v1274, %v1273
      %v1392 = vpack.c.b16 %v1276, %v1275
      %v1393 = vpack.c.b16 %v1278, %v1277
      %v1394 = vpack.c.b16 %v1280, %v1279
      %v1395 = vpack.c.b16 %v1282, %v1281
      %v1396 = vpack.c.b16 %v1284, %v1283
      %v1397 = vpack.c.b16 %v1286, %v1285
      %v1398 = vpack.c.b16 %v1288, %v1287
      %v1399 = vpack.c.b16 %v1290, %v1289
      %v1400 = vpack.c.b16 %v1292, %v1291
      %v1401 = vpack.c.b16 %v1294, %v1293
      %v1402 = vpack.c.b16 %v1296, %v1295
      %v1403 = vpack.c.b16 %v1298, %v1297
      %v1404 = vpack.c.b16 %v1300, %v1299
      %v1405 = vpack.c.b16 %v1302, %v1301
      %v1406 = vpack.c.b16 %v1304, %v1303
      %v1407 = vpack.c.b16 %v1306, %v1305
      %v1408 = vpack.c.b16 %v1308, %v1307
      %v1409 = vpack.c.b16 %v1310, %v1309
      %v1410 = vpack.c.b16 %v1312, %v1311
      %v1411 = vpack.c.b16 %v1314, %v1313
      %v1412 = vpack.c.b16 %v1316, %v1315
      %v1413 = vpack.c.b16 %v1318, %v1317
      %v1414 = vpack.c.b16 %v1320, %v1319
      %v1415 = vpack.c.b16 %v1322, %v1321
      %v1416 = vpack.c.b16 %v1324, %v1323
      %v1417 = vpack.c.b16 %v1326, %v1325
      %v1418 = vpack.c.b16 %v1328, %v1327
      %v1419 = vpack.c.b16 %v1330, %v1329
      %v1420 = vpack.c.b16 %v1332, %v1331
      %v1421 = vpack.c.b16 %v1334, %v1333
      %v1422 = vpack.c.b16 %v1336, %v1335
      %v1423 = vpack.c.b16 %v1338, %v1337
      %v1424 = vpack.c.b16 %v1340, %v1339
      %v1425 = vpack.c.b16 %v1342, %v1341
      %v1426 = vpack.c.b16 %v1344, %v1343
      %v1427 = vpack.c.b16 %v1346, %v1345
      %v1428 = vpack.c.b16 %v1348, %v1347
      %v1429 = vpack.c.b16 %v1350, %v1349
      %v1430 = vpack.c.b16 %v1352, %v1351
      %v1431 = vpack.c.b16 %v1354, %v1353
      %v1432 = vpack.c.b16 %v1356, %v1355
      %v1433 = vpack.c.b16 %v1358, %v1357
      %v1434 = vpack.c.b16 %v1360, %v1359
      %v1435 = vpack.c.b16 %v1362, %v1361
      %v1436 = vpack.c.b16 %v1364, %v1363
      %1509 = vmatprep.subr.bf16.mxu0 0
      %1510 = vmatpush1.bf16.msra.mxu0 %v1365
      %1511 = vmatprep.subr.bf16.mxu0 0
      %1512 = vmatpush1.bf16.msra.mxu0 %v1366
      %1513 = vmatprep.subr.bf16.mxu0 0
      %1514 = vmatpush1.bf16.msra.mxu0 %v1367
      %1515 = vmatprep.subr.bf16.mxu0 0
      %1516 = vmatpush1.bf16.msra.mxu0 %v1368
      %1517 = vmatprep.subr.bf16.mxu0 0
      %1518 = vmatpush1.bf16.msra.mxu0 %v1369
      %1519 = vmatprep.subr.bf16.mxu0 0
      %1520 = vmatpush1.bf16.msra.mxu0 %v1370
      %1521 = vmatprep.subr.bf16.mxu0 0
      %1522 = vmatpush1.bf16.msra.mxu0 %v1371
      %1523 = vmatprep.subr.bf16.mxu0 0
      %1524 = vmatpush1.bf16.msra.mxu0 %v1372
      %1525 = vmatprep.subr.bf16.mxu0 0
      %1526 = vmatpush1.bf16.msra.mxu0 %v1373
      %1527 = vmatprep.subr.bf16.mxu0 0
      %1528 = vmatpush1.bf16.msra.mxu0 %v1374
      %1529 = vmatprep.subr.bf16.mxu0 0
      %1530 = vmatpush1.bf16.msra.mxu0 %v1375
      %1531 = vmatprep.subr.bf16.mxu0 0
      %1532 = vmatpush1.bf16.msra.mxu0 %v1376
      %1533 = vmatprep.subr.bf16.mxu0 0
      %1534 = vmatpush1.bf16.msra.mxu0 %v1377
      %1535 = vmatprep.subr.bf16.mxu0 0
      %1536 = vmatpush1.bf16.msra.mxu0 %v1378
      %1537 = vmatprep.subr.bf16.mxu0 0
      %1538 = vmatpush1.bf16.msra.mxu0 %v1379
      %1539 = vmatprep.subr.bf16.mxu0 0
      %1540 = vmatpush1.bf16.msra.mxu0 %v1380
      %1541 = vmatprep.mubr.bf16.mxu0 %v898
      %1542 = vmatmul.mubr.bf16.gmra.mrb[0].mxu0 %v897
      %v1543 = vpop.f32.mrb[0].mxu0
      %v1544 = vadd.f32 0.0, %v1543
      %v1545 = vpop.f32.mrb[0].mxu0
      %v1546 = vpop.f32.mrb[0].mxu0
      %v1547 = vadd.f32 0.0, %v1546
      %v1548 = vpop.f32.mrb[0].mxu0
      %1549 = vmatprep.mubr.bf16.mxu0 %v907
      %1550 = vmatmul.mubr.bf16.gmra.mrb[0].mxu0 %v906
      %v1551 = vpop.f32.mrb[0].mxu0
      %v1552 = vadd.f32 0.0, %v1551
      %v1553 = vpop.f32.mrb[0].mxu0
      %v1554 = vpop.f32.mrb[0].mxu0
      %v1555 = vadd.f32 0.0, %v1554
      %v1556 = vpop.f32.mrb[0].mxu0
      %1557 = vmatprep.mubr.bf16.mxu0 %v916
      %1558 = vmatmul.mubr.bf16.gmra.mrb[0].mxu0 %v915
      %v1559 = vpop.f32.mrb[0].mxu0
      %v1560 = vadd.f32 0.0, %v1559
      %v1561 = vpop.f32.mrb[0].mxu0
      %v1562 = vpop.f32.mrb[0].mxu0
      %v1563 = vadd.f32 0.0, %v1562
      %v1564 = vpop.f32.mrb[0].mxu0
      %1565 = vmatprep.mubr.bf16.mxu0 %v925
      %1566 = vmatmul.mubr.bf16.gmra.mrb[0].mxu0 %v924
      %v1567 = vpop.f32.mrb[0].mxu0
      %v1568 = vadd.f32 0.0, %v1567
      %v1569 = vpop.f32.mrb[0].mxu0
      %v1570 = vpop.f32.mrb[0].mxu0
      %v1571 = vadd.f32 0.0, %v1570
      %v1572 = vpop.f32.mrb[0].mxu0
      %1573 = vdwg.mxu0
      %1574 = vmatprep.subr.bf16.mxu0 0
      %1575 = vmatpush1.bf16.msra.mxu0 %v1381
      %1576 = vmatprep.subr.bf16.mxu0 0
      %1577 = vmatpush1.bf16.msra.mxu0 %v1382
      %1578 = vmatprep.subr.bf16.mxu0 0
      %1579 = vmatpush1.bf16.msra.mxu0 %v1383
      %1580 = vmatprep.subr.bf16.mxu0 0
      %1581 = vmatpush1.bf16.msra.mxu0 %v1384
      %1582 = vmatprep.subr.bf16.mxu0 0
      %1583 = vmatpush1.bf16.msra.mxu0 %v1385
      %1584 = vmatprep.subr.bf16.mxu0 0
      %1585 = vmatpush1.bf16.msra.mxu0 %v1386
      %1586 = vmatprep.subr.bf16.mxu0 0
      %1587 = vmatpush1.bf16.msra.mxu0 %v1387
      %1588 = vmatprep.subr.bf16.mxu0 0
      %1589 = vmatpush1.bf16.msra.mxu0 %v1388
      %1590 = vmatprep.subr.bf16.mxu0 0
      %1591 = vmatpush1.bf16.msra.mxu0 %v1389
      %1592 = vmatprep.subr.bf16.mxu0 0
      %1593 = vmatpush1.bf16.msra.mxu0 %v1390
      %1594 = vmatprep.subr.bf16.mxu0 0
      %1595 = vmatpush1.bf16.msra.mxu0 %v1391
      %1596 = vmatprep.subr.bf16.mxu0 0
      %1597 = vmatpush1.bf16.msra.mxu0 %v1392
      %1598 = vmatprep.subr.bf16.mxu0 0
      %1599 = vmatpush1.bf16.msra.mxu0 %v1393
      %1600 = vmatprep.subr.bf16.mxu0 0
      %1601 = vmatpush1.bf16.msra.mxu0 %v1394
      %1602 = vmatprep.subr.bf16.mxu0 0
      %1603 = vmatpush1.bf16.msra.mxu0 %v1395
      %1604 = vmatprep.subr.bf16.mxu0 0
      %1605 = vmatpush1.bf16.msra.mxu0 %v1396
      %1606 = vmatprep.mubr.bf16.mxu0 %v900
      %1607 = vmatmul.mubr.bf16.gmra.mrb[0].mxu0 %v899
      %v1608 = vpop.f32.mrb[0].mxu0
      %v1609 = vadd.f32 %v1544, %v1608
      %v1610 = vpop.f32.mrb[0].mxu0
      %v1611 = vpop.f32.mrb[0].mxu0
      %v1612 = vadd.f32 %v1547, %v1611
      %v1613 = vpop.f32.mrb[0].mxu0
      %1614 = vmatprep.mubr.bf16.mxu0 %v909
      %1615 = vmatmul.mubr.bf16.gmra.mrb[0].mxu0 %v908
      %v1616 = vpop.f32.mrb[0].mxu0
      %v1617 = vadd.f32 %v1552, %v1616
      %v1618 = vpop.f32.mrb[0].mxu0
      %v1619 = vpop.f32.mrb[0].mxu0
      %v1620 = vadd.f32 %v1555, %v1619
      %v1621 = vpop.f32.mrb[0].mxu0
      %1622 = vmatprep.mubr.bf16.mxu0 %v918
      %1623 = vmatmul.mubr.bf16.gmra.mrb[0].mxu0 %v917
      %v1624 = vpop.f32.mrb[0].mxu0
      %v1625 = vadd.f32 %v1560, %v1624
      %v1626 = vpop.f32.mrb[0].mxu0
      %v1627 = vpop.f32.mrb[0].mxu0
      %v1628 = vadd.f32 %v1563, %v1627
      %v1629 = vpop.f32.mrb[0].mxu0
      %1630 = vmatprep.mubr.bf16.mxu0 %v927
      %1631 = vmatmul.mubr.bf16.gmra.mrb[0].mxu0 %v926
      %v1632 = vpop.f32.mrb[0].mxu0
      %v1633 = vadd.f32 %v1568, %v1632
      %v1634 = vpop.f32.mrb[0].mxu0
      %v1635 = vpop.f32.mrb[0].mxu0
      %v1636 = vadd.f32 %v1571, %v1635
      %v1637 = vpop.f32.mrb[0].mxu0
      %1638 = vdwg.mxu0
      %1639 = vmatprep.subr.bf16.mxu0 0
      %1640 = vmatpush1.bf16.msra.mxu0 %v1397
      %1641 = vmatprep.subr.bf16.mxu0 0
      %1642 = vmatpush1.bf16.msra.mxu0 %v1398
      %1643 = vmatprep.subr.bf16.mxu0 0
      %1644 = vmatpush1.bf16.msra.mxu0 %v1399
      %1645 = vmatprep.subr.bf16.mxu0 0
      %1646 = vmatpush1.bf16.msra.mxu0 %v1400
      %1647 = vmatprep.subr.bf16.mxu0 0
      %1648 = vmatpush1.bf16.msra.mxu0 %v1401
      %1649 = vmatprep.subr.bf16.mxu0 0
      %1650 = vmatpush1.bf16.msra.mxu0 %v1402
      %1651 = vmatprep.subr.bf16.mxu0 0
      %1652 = vmatpush1.bf16.msra.mxu0 %v1403
      %1653 = vmatprep.subr.bf16.mxu0 0
      %1654 = vmatpush1.bf16.msra.mxu0 %v1404
      %1655 = vmatprep.subr.bf16.mxu0 0
      %1656 = vmatpush1.bf16.msra.mxu0 %v1405
      %1657 = vmatprep.subr.bf16.mxu0 0
      %1658 = vmatpush1.bf16.msra.mxu0 %v1406
      %1659 = vmatprep.subr.bf16.mxu0 0
      %1660 = vmatpush1.bf16.msra.mxu0 %v1407
      %1661 = vmatprep.subr.bf16.mxu0 0
      %1662 = vmatpush1.bf16.msra.mxu0 %v1408
      %1663 = vmatprep.subr.bf16.mxu0 0
      %1664 = vmatpush1.bf16.msra.mxu0 %v1409
      %1665 = vmatprep.subr.bf16.mxu0 0
      %1666 = vmatpush1.bf16.msra.mxu0 %v1410
      %1667 = vmatprep.subr.bf16.mxu0 0
      %1668 = vmatpush1.bf16.msra.mxu0 %v1411
      %1669 = vmatprep.subr.bf16.mxu0 0
      %1670 = vmatpush1.bf16.msra.mxu0 %v1412
      %1671 = vmatprep.mubr.bf16.mxu0 %v902
      %1672 = vmatmul.mubr.bf16.gmra.mrb[0].mxu0 %v901
      %v1673 = vpop.f32.mrb[0].mxu0
      %v1674 = vadd.f32 %v1609, %v1673
      %v1675 = vpop.f32.mrb[0].mxu0
      %v1676 = vpop.f32.mrb[0].mxu0
      %v1677 = vadd.f32 %v1612, %v1676
      %v1678 = vpop.f32.mrb[0].mxu0
      %1679 = vmatprep.mubr.bf16.mxu0 %v911
      %1680 = vmatmul.mubr.bf16.gmra.mrb[0].mxu0 %v910
      %v1681 = vpop.f32.mrb[0].mxu0
      %v1682 = vadd.f32 %v1617, %v1681
      %v1683 = vpop.f32.mrb[0].mxu0
      %v1684 = vpop.f32.mrb[0].mxu0
      %v1685 = vadd.f32 %v1620, %v1684
      %v1686 = vpop.f32.mrb[0].mxu0
      %1687 = vmatprep.mubr.bf16.mxu0 %v920
      %1688 = vmatmul.mubr.bf16.gmra.mrb[0].mxu0 %v919
      %v1689 = vpop.f32.mrb[0].mxu0
      %v1690 = vadd.f32 %v1625, %v1689
      %v1691 = vpop.f32.mrb[0].mxu0
      %v1692 = vpop.f32.mrb[0].mxu0
      %v1693 = vadd.f32 %v1628, %v1692
      %v1694 = vpop.f32.mrb[0].mxu0
      %1695 = vmatprep.mubr.bf16.mxu0 %v929
      %1696 = vmatmul.mubr.bf16.gmra.mrb[0].mxu0 %v928
      %v1697 = vpop.f32.mrb[0].mxu0
      %v1698 = vadd.f32 %v1633, %v1697
      %v1699 = vpop.f32.mrb[0].mxu0
      %v1700 = vpop.f32.mrb[0].mxu0
      %v1701 = vadd.f32 %v1636, %v1700
      %v1702 = vpop.f32.mrb[0].mxu0
      %1703 = vdwg.mxu0
      %1704 = vmatprep.subr.bf16.mxu0 0
      %1705 = vmatpush1.bf16.msra.mxu0 %v1413
      %1706 = vmatprep.subr.bf16.mxu0 0
      %1707 = vmatpush1.bf16.msra.mxu0 %v1414
      %1708 = vmatprep.subr.bf16.mxu0 0
      %1709 = vmatpush1.bf16.msra.mxu0 %v1415
      %1710 = vmatprep.subr.bf16.mxu0 0
      %1711 = vmatpush1.bf16.msra.mxu0 %v1416
      %1712 = vmatprep.subr.bf16.mxu0 0
      %1713 = vmatpush1.bf16.msra.mxu0 %v1417
      %1714 = vmatprep.subr.bf16.mxu0 0
      %1715 = vmatpush1.bf16.msra.mxu0 %v1418
      %1716 = vmatprep.subr.bf16.mxu0 0
      %1717 = vmatpush1.bf16.msra.mxu0 %v1419
      %1718 = vmatprep.subr.bf16.mxu0 0
      %1719 = vmatpush1.bf16.msra.mxu0 %v1420
      %1720 = vmatprep.subr.bf16.mxu0 0
      %1721 = vmatpush1.bf16.msra.mxu0 %v1421
      %1722 = vmatprep.subr.bf16.mxu0 0
      %1723 = vmatpush1.bf16.msra.mxu0 %v1422
      %1724 = vmatprep.subr.bf16.mxu0 0
      %1725 = vmatpush1.bf16.msra.mxu0 %v1423
      %1726 = vmatprep.subr.bf16.mxu0 0
      %1727 = vmatpush1.bf16.msra.mxu0 %v1424
      %1728 = vmatprep.subr.bf16.mxu0 0
      %1729 = vmatpush1.bf16.msra.mxu0 %v1425
      %1730 = vmatprep.subr.bf16.mxu0 0
      %1731 = vmatpush1.bf16.msra.mxu0 %v1426
      %1732 = vmatprep.subr.bf16.mxu0 0
      %1733 = vmatpush1.bf16.msra.mxu0 %v1427
      %1734 = vmatprep.subr.bf16.mxu0 0
      %1735 = vmatpush1.bf16.msra.mxu0 %v1428
      %1736 = vmatprep.mubr.bf16.mxu0 %v904
      %1737 = vmatmul.mubr.bf16.gmra.mrb[0].mxu0 %v903
      %v1738 = vpop.f32.mrb[0].mxu0
      %v1739 = vadd.f32 %v1674, %v1738
      %v1740 = vpop.f32.mrb[0].mxu0
      %v1741 = vpop.f32.mrb[0].mxu0
      %v1742 = vadd.f32 %v1677, %v1741
      %v1743 = vpop.f32.mrb[0].mxu0
      %1744 = vmatprep.mubr.bf16.mxu0 %v913
      %1745 = vmatmul.mubr.bf16.gmra.mrb[0].mxu0 %v912
      %v1746 = vpop.f32.mrb[0].mxu0
      %v1747 = vadd.f32 %v1682, %v1746
      %v1748 = vpop.f32.mrb[0].mxu0
      %v1749 = vpop.f32.mrb[0].mxu0
      %v1750 = vadd.f32 %v1685, %v1749
      %v1751 = vpop.f32.mrb[0].mxu0
      %1752 = vmatprep.mubr.bf16.mxu0 %v922
      %1753 = vmatmul.mubr.bf16.gmra.mrb[0].mxu0 %v921
      %v1754 = vpop.f32.mrb[0].mxu0
      %v1755 = vadd.f32 %v1690, %v1754
      %v1756 = vpop.f32.mrb[0].mxu0
      %v1757 = vpop.f32.mrb[0].mxu0
      %v1758 = vadd.f32 %v1693, %v1757
      %v1759 = vpop.f32.mrb[0].mxu0
      %1760 = vmatprep.mubr.bf16.mxu0 %v931
      %1761 = vmatmul.mubr.bf16.gmra.mrb[0].mxu0 %v930
      %v1762 = vpop.f32.mrb[0].mxu0
      %v1763 = vadd.f32 %v1698, %v1762
      %v1764 = vpop.f32.mrb[0].mxu0
      %v1765 = vpop.f32.mrb[0].mxu0
      %v1766 = vadd.f32 %v1701, %v1765
      %v1767 = vpop.f32.mrb[0].mxu0
      %1768 = vdwg.mxu0
      %1769 = vmatprep.subr.bf16.mxu0 0
      %1770 = vmatpush1.bf16.msra.mxu0 %v1429
      %1771 = vmatprep.subr.bf16.mxu0 0
      %1772 = vmatpush1.bf16.msra.mxu0 %v1430
      %1773 = vmatprep.subr.bf16.mxu0 0
      %1774 = vmatpush1.bf16.msra.mxu0 %v1431
      %1775 = vmatprep.subr.bf16.mxu0 0
      %1776 = vmatpush1.bf16.msra.mxu0 %v1432
      %1777 = vmatprep.subr.bf16.mxu0 0
      %1778 = vmatpush1.bf16.msra.mxu0 %v1433
      %1779 = vmatprep.subr.bf16.mxu0 0
      %1780 = vmatpush1.bf16.msra.mxu0 %v1434
      %1781 = vmatprep.subr.bf16.mxu0 0
      %1782 = vmatpush1.bf16.msra.mxu0 %v1435
      %1783 = vmatprep.subr.bf16.mxu0 0
      %1784 = vmatpush1.bf16.msra.mxu0 %v1436
      %1785 = vmatprep.subr.bf16.mxu0 0
      %1786 = vmatpush1.bf16.msra.mxu0 0
      %1787 = vmatprep.subr.bf16.mxu0 0
      %1788 = vmatpush1.bf16.msra.mxu0 0
      %1789 = vmatprep.subr.bf16.mxu0 0
      %1790 = vmatpush1.bf16.msra.mxu0 0
      %1791 = vmatprep.subr.bf16.mxu0 0
      %1792 = vmatpush1.bf16.msra.mxu0 0
      %1793 = vmatprep.subr.bf16.mxu0 0
      %1794 = vmatpush1.bf16.msra.mxu0 0
      %1795 = vmatprep.subr.bf16.mxu0 0
      %1796 = vmatpush1.bf16.msra.mxu0 0
      %1797 = vmatprep.subr.bf16.mxu0 0
      %1798 = vmatpush1.bf16.msra.mxu0 0
      %1799 = vmatprep.subr.bf16.mxu0 0
      %1800 = vmatpush1.bf16.msra.mxu0 0
      %1801 = vmatprep.mubr.bf16.mxu0 0
      %1802 = vmatmul.mubr.bf16.gmra.mrb[0].mxu0 %v905
      %v1803 = vpop.f32.mrb[0].mxu0
      %v1804 = vadd.f32 %v1739, %v1803
      %v1805 = vpop.f32.mrb[0].mxu0
      %v1806 = vpop.f32.mrb[0].mxu0
      %v1807 = vadd.f32 %v1742, %v1806
      %v1808 = vpop.f32.mrb[0].mxu0
      %1809 = vmatprep.mubr.bf16.mxu0 0
      %1810 = vmatmul.mubr.bf16.gmra.mrb[0].mxu0 %v914
      %v1811 = vpop.f32.mrb[0].mxu0
      %v1812 = vadd.f32 %v1747, %v1811
      %v1813 = vpop.f32.mrb[0].mxu0
      %v1814 = vpop.f32.mrb[0].mxu0
      %v1815 = vadd.f32 %v1750, %v1814
      %v1816 = vpop.f32.mrb[0].mxu0
      %1817 = vmatprep.mubr.bf16.mxu0 0
      %1818 = vmatmul.mubr.bf16.gmra.mrb[0].mxu0 %v923
      %v1819 = vpop.f32.mrb[0].mxu0
      %v1820 = vadd.f32 %v1755, %v1819
      %v1821 = vpop.f32.mrb[0].mxu0
      %v1822 = vpop.f32.mrb[0].mxu0
      %v1823 = vadd.f32 %v1758, %v1822
      %v1824 = vpop.f32.mrb[0].mxu0
      %1825 = vmatprep.mubr.bf16.mxu0 0
      %1826 = vmatmul.mubr.bf16.gmra.mrb[0].mxu0 %v932
      %v1827 = vpop.f32.mrb[0].mxu0
      %v1828 = vadd.f32 %v1763, %v1827
      %v1829 = vpop.f32.mrb[0].mxu0
      %v1830 = vpop.f32.mrb[0].mxu0
      %v1831 = vadd.f32 %v1766, %v1830
      %v1832 = vpop.f32.mrb[0].mxu0
      %1833 = vdwg.mxu0
      %v1834 = vpack.c.bf16 %v1807, %v1804
      %v1835 = vpack.c.bf16 %v1815, %v1812
      %v1836 = vpack.c.bf16 %v1823, %v1820
      %v1837 = vpack.c.bf16 %v1831, %v1828
      %v1842 = vunpack.c.l.b16 %v1834
      %v1843 = vunpack.c.h.b16 %v1834
      %v1844 = vunpack.c.l.b16 %v1835
      %v1845 = vunpack.c.h.b16 %v1835
      %v1846 = vunpack.c.l.b16 %v1836
      %v1847 = vunpack.c.h.b16 %v1836
      %v1848 = vunpack.c.l.b16 %v1837
      %v1849 = vunpack.c.h.b16 %v1837
      %v1850 = vpack.c.b16 %v1842, %v1842
      %v1851 = vpack.c.b16 %v1843, %v1843
      %v1852 = vpack.c.b16 %v1844, %v1844
      %v1853 = vpack.c.b16 %v1845, %v1845
      %v1854 = vpack.c.b16 %v1846, %v1846
      %v1855 = vpack.c.b16 %v1847, %v1847
      %v1856 = vpack.c.b16 %v1848, %v1848
      %v1857 = vpack.c.b16 %v1849, %v1849
      %1866 = vst [vmem:[%s204] sm:$0xf] %v1850
      %1867 = vst [vmem:[%s204 + $0x4] sm:$0xf] %v1851
      %1868 = vst [vmem:[%s204 + $0x8] sm:$0xf] %v1852
      %1869 = vst [vmem:[%s204 + $0xc] sm:$0xf] %v1853
      %1870 = vst [vmem:[%s204 + $0x10] sm:$0xf] %v1854
      %1871 = vst [vmem:[%s204 + $0x14] sm:$0xf] %v1855
      %1872 = vst [vmem:[%s204 + $0x18] sm:$0xf] %v1856
      %1873 = vst [vmem:[%s204 + $0x1c] sm:$0xf] %v1857
      %v1874 = vadd.f32 %v1804, %v1807
      %v1875 = vadd.f32 %v1874, %v1812
      %v1876 = vadd.f32 %v1875, %v1815
      %v1877 = vadd.f32 %v1876, %v1820
      %v1878 = vadd.f32 %v1877, %v1823
      %v1879 = vadd.f32 %v1878, %v1828
      %v1880 = vadd.f32 %v1879, %v1831
      %v1881 = vrot.slane %v1880, 4
      %v1882 = vadd.f32 %v1880, %v1881
      %v1883 = vrot.slane %v1882, 2
      %v1884 = vadd.f32 %v1882, %v1883
      %v1885 = vrot.slane %v1884, 1
      %v1886 = vadd.f32 %v1884, %v1885
      %v1887 = vmul.f32 %v1804, %v1804
      %v1888 = vmul.f32 %v1807, %v1807
      %v1889 = vmul.f32 %v1812, %v1812
      %v1890 = vmul.f32 %v1815, %v1815
      %v1891 = vmul.f32 %v1820, %v1820
      %v1892 = vmul.f32 %v1823, %v1823
      %v1893 = vmul.f32 %v1828, %v1828
      %v1894 = vmul.f32 %v1831, %v1831
      %v1895 = vadd.f32 %v1887, %v1888
      %v1896 = vadd.f32 %v1895, %v1889
      %v1897 = vadd.f32 %v1896, %v1890
      %v1898 = vadd.f32 %v1897, %v1891
      %v1899 = vadd.f32 %v1898, %v1892
      %v1900 = vadd.f32 %v1899, %v1893
      %v1901 = vadd.f32 %v1900, %v1894
      %v1902 = vrot.slane %v1901, 4
      %v1903 = vadd.f32 %v1901, %v1902
      %v1904 = vrot.slane %v1903, 2
      %v1905 = vadd.f32 %v1903, %v1904
      %v1906 = vrot.slane %v1905, 1
      %v1907 = vadd.f32 %v1905, %v1906
      %vm1908 = vcmask 1040384
      %v1909 = vsel %vm1908, %v1886, %v1907
      %1910 = vst [vmem:[%s212] sm:$0x3] %v1909
      %s1911 = smul.u32 8, %s20
      %p1912 = scmp.lt.s32.totalorder %s19, 1
      %s1913 = scalar_select %p1912, %s19, 1
      %p1914 = scmp.lt.s32.totalorder %s1911, 7
      %s1915 = scalar_select %p1914, %s1911, 7
      %s1916 = smul.addr %s1913, 8
      %s1917 = sadd.s32 %s1915, %s1916
      %s1918 = smul.addr %s1917, 4
      %s1919 = scalar_lea.vmem %s2, %s1918
      %p1920 = scmp.lt.s32.totalorder %s19, 1
      %s1921 = scalar_select %p1920, %s19, 1
      %p1922 = scmp.lt.s32.totalorder %s20, 0
      %s1923 = scalar_select %p1922, %s20, 0
      %s1924 = sadd.s32 %s1923, %s1921
      %s1925 = smul.addr %s1924, 2
      %s1926 = scalar_lea.vmem %s3, %s1925
      // Predicated region
      $region29: #{basic_block_forward.4} parent=27 // pred_check
        %p1927 = pneg %p94
      $region30: #{basic_block_forward.4} parent=27 // pred_check_branch
        %1929 = sbr.rel (%p1927) target = $region32
      $region31: #{basic_block_forward.4} parent=27 // pred_region
        %s1930 = smul.u32 8, %s20
      $region32: #{basic_block_forward.4} parent=27 // pred_fallthru
        _
      // Predicated region
      $region33: #{basic_block_forward.4} parent=27 // pred_check
        %p1931 = pneg %p122
      $region34: #{basic_block_forward.4} parent=27 // pred_check_branch
        %1933 = sbr.rel (%p1931) target = $region36
      $region35: #{basic_block_forward.4} parent=27 // pred_region
        _
      $region36: #{basic_block_forward.4} parent=27 // pred_fallthru
        _
    $region28: #{basic_block_forward.4} parent=5 // pred_fallthru
      _
    %p1934 = scmp.le.s32.totalorder 2, %s10
    // Predicated region
    $region37: #{basic_block_forward.4} parent=5 // pred_check
      %p1935 = pneg %p1934
    $region38: #{basic_block_forward.4} parent=5 // pred_check_branch
      %1937 = sbr.rel (%p1935) target = $region40
    $region39: #{basic_block_forward.4} parent=5 // pred_region
      %s1938 = ssub.s32 %s10, 2
      // Predicated region
      $region41: #{basic_block_forward.4} parent=39 // pred_check
        %p1939 = pneg %p100
      $region42: #{basic_block_forward.4} parent=39 // pred_check_branch
        %1941 = sbr.rel (%p1939) target = $region44
      $region43: #{basic_block_forward.4} parent=39 // pred_region
        %s1942 = smul.u32 8, %s22
        %p1943 = scmp.lt.s32.totalorder %s21, 1
        %s1944 = scalar_select %p1943, %s21, 1
        %p1945 = scmp.lt.s32.totalorder %s1942, 7
        %s1946 = scalar_select %p1945, %s1942, 7
        %s1947 = smul.addr %s1944, 8
        %s1948 = sadd.s32 %s1946, %s1947
        %s1949 = smul.addr %s1948, 4
        %s1950 = scalar_lea.vmem %s2, %s1949
      $region44: #{basic_block_forward.4} parent=39 // pred_fallthru
        _
      // Predicated region
      $region45: #{basic_block_forward.4} parent=39 // pred_check
        %p1951 = pneg %p128
      $region46: #{basic_block_forward.4} parent=39 // pred_check_branch
        %1953 = sbr.rel (%p1951) target = $region48
      $region47: #{basic_block_forward.4} parent=39 // pred_region
        %p1954 = scmp.lt.s32.totalorder %s21, 1
        %s1955 = scalar_select %p1954, %s21, 1
        %p1956 = scmp.lt.s32.totalorder %s22, 0
        %s1957 = scalar_select %p1956, %s22, 0
        %s1958 = sadd.s32 %s1957, %s1955
        %s1959 = smul.addr %s1958, 2
        %s1960 = scalar_lea.vmem %s3, %s1959
      $region48: #{basic_block_forward.4} parent=39 // pred_fallthru
        _
    $region40: #{basic_block_forward.4} parent=5 // pred_fallthru
      _
  $region6: #{basic_block_forward.4} parent=0 // loop_footer
    %s14 = sadd.s32 1, %s10
  $region7: #{basic_block_forward.4} parent=0 // loop_footer_branch
    %9 = sbr.rel target = $region3
  $region8: #{basic_block_forward.4} parent=0 // loop_exit
    _

// kernel: basic_block_forward.5
$region0: #{basic_block_forward.5}
  #allocation0 [shape = 'u32[]', space=smem, size = 0x4, offset = 0x4, fixed_abs, tag = 'smem constant byte address 0x4 - core index']
  #allocation1 [shape = 'u32[144,128]{1,0:T(1,128)}', space=vmem, size = 0x12000, scoped, tag = 'internal scratch']
  #allocation2 [shape = 'bf16[10,10,128]{2,1,0:T(8,128)(2,1)}', space=vmem, size = 0xa000, scoped, tag = 'scratch operand']
  #allocation3 [shape = 'bf16[64,1152]{1,0:T(16,128)(2,1)}', space=vmem, size = 0x24000, scoped, tag = 'scratch operand']
  %s0 = inlined_call_operand.vmem [shape: bf16[2,10,10,128], index: 0, kind: input, shape index: {}]
  %s1 = inlined_call_operand.vmem [shape: f32[1,128], index: 1, kind: input, shape index: {}]
  %s2 = inlined_call_operand.vmem [shape: f32[1,128], index: 2, kind: input, shape index: {}]
  %s3 = inlined_call_operand.vmem [shape: bf16[1152,128], index: 3, kind: input, shape index: {}]
  %s4 = inlined_call_operand.vmem [shape: bf16[2,64,128], index: 4, kind: output, shape index: {0}]
  %s5 = inlined_call_operand.vmem [shape: f32[2,1,2,128], index: 5, kind: output, shape index: {1}]
  %6 = xla_tuple %s4, %s5
  %s7 = sld [smem:[#allocation0]]
  $region61: #{basic_block_forward.5} parent=0
    _
  %s9 = ssub.s32 1, %s7
  %s10 = scalar_select 0, %s9, %s7
  loop: start=0, step=1, limit=4
  $region2: #{basic_block_forward.5} parent=0 // loop_pre_header
    _
  $region3: #{basic_block_forward.5} parent=0 // loop_header
    %s12 = sphi 0, %s16
    %p13 = scmp.ge.s32.totalorder %s12, 4
    %s19 = sphi 0, %s31
    %s20 = sphi 0, %s27
    %s21 = sphi 0, %s19
    %s22 = sphi 0, %s20
    %s23 = sphi 0, %s21
    %s24 = sphi 0, %s22
    %s34 = sphi 0, %s36
    %s37 = sphi 0, %s34
    %s38 = sphi 0, %s37
    %s54 = sphi 0, %s38
    %s58 = sphi 0, %s58
    %s60 = sphi 0, %s58
    %s61 = sphi 0, %s60
    %s75 = sphi 0, %s61
    %s79 = sphi 0, %s79
    %s81 = sphi 0, %s79
    %s82 = sphi 0, %s81
    %s96 = sphi 0, %s82
    %s100 = sphi 0, %s100
    %s102 = sphi 0, %s100
    %s103 = sphi 0, %s102
    %s117 = sphi 0, %s103
    %s125 = sphi 0, %s127
    %s128 = sphi 0, %s125
    %s129 = sphi 0, %s128
    %s145 = sphi 0, %s129
    %s153 = sphi 0, %s155
    %s156 = sphi 0, %s153
    %s157 = sphi 0, %s156
    %s173 = sphi 0, %s157
  $region4: #{basic_block_forward.5} parent=0 // loop_header_branch
    %15 = sbr.rel (%p13) target = $region8
  $region5: #{basic_block_forward.5} parent=0 // loop_body
    %s17 = ssub.s32 %s12, 1
    %s18 = ssub.s32 %s12, 2
    %s25 = sadd.s32 1, %s20
    %p26 = scmp.ge.s32.totalorder %s25, 1
    %s27 = scalar_select %p26, 0, %s25
    %s28 = sadd.s32 1, %s19
    %s29 = scalar_select %p26, %s28, %s19
    %p30 = scmp.ge.s32.totalorder %s29, 2
    %s31 = scalar_select %p30, 0, %s29
    %s32 = ssub.s32 %s19, %s31
    %p33 = scmp.eq.s32.totalorder %s32, 0
    %s35 = sadd.s32 %s34, 1
    %s36 = scalar_select %p33, %s34, %s35
    %p39 = pneg %p33
    %p40 = scmp.eq.s32.totalorder %s12, 1
    %p41 = por %p39, %p40
    %p42 = scmp.ne.s32.totalorder %s34, %s37
    %p43 = scmp.eq.s32.totalorder %s12, 0
    %p44 = por %p42, %p43
    %p45 = scmp.ne.s32.totalorder %s34, %s37
    %p46 = scmp.eq.s32.totalorder %s17, 1
    %p47 = por %p45, %p46
    %p48 = scmp.ne.s32.totalorder %s37, %s38
    %p49 = scmp.eq.s32.totalorder %s17, 0
    %p50 = por %p48, %p49
    %p51 = scmp.ne.s32.totalorder %s37, %s38
    %p52 = scmp.eq.s32.totalorder %s18, 1
    %p53 = por %p51, %p52
    %p55 = scmp.ne.s32.totalorder %s38, %s54
    %p56 = scmp.eq.s32.totalorder %s18, 0
    %p57 = por %p55, %p56
    %s59 = sadd.s32 %s58, 1
    %p62 = scmp.eq.s32.totalorder %s12, 1
    %p63 = scmp.ne.s32.totalorder %s58, %s60
    %p64 = scmp.eq.s32.totalorder %s12, 0
    %p65 = por %p63, %p64
    %p66 = scmp.ne.s32.totalorder %s58, %s60
    %p67 = scmp.eq.s32.totalorder %s17, 1
    %p68 = por %p66, %p67
    %p69 = scmp.ne.s32.totalorder %s60, %s61
    %p70 = scmp.eq.s32.totalorder %s17, 0
    %p71 = por %p69, %p70
    %p72 = scmp.ne.s32.totalorder %s60, %s61
    %p73 = scmp.eq.s32.totalorder %s18, 1
    %p74 = por %p72, %p73
    %p76 = scmp.ne.s32.totalorder %s61, %s75
    %p77 = scmp.eq.s32.totalorder %s18, 0
    %p78 = por %p76, %p77
    %s80 = sadd.s32 %s79, 1
    %p83 = scmp.eq.s32.totalorder %s12, 1
    %p84 = scmp.ne.s32.totalorder %s79, %s81
    %p85 = scmp.eq.s32.totalorder %s12, 0
    %p86 = por %p84, %p85
    %p87 = scmp.ne.s32.totalorder %s79, %s81
    %p88 = scmp.eq.s32.totalorder %s17, 1
    %p89 = por %p87, %p88
    %p90 = scmp.ne.s32.totalorder %s81, %s82
    %p91 = scmp.eq.s32.totalorder %s17, 0
    %p92 = por %p90, %p91
    %p93 = scmp.ne.s32.totalorder %s81, %s82
    %p94 = scmp.eq.s32.totalorder %s18, 1
    %p95 = por %p93, %p94
    %p97 = scmp.ne.s32.totalorder %s82, %s96
    %p98 = scmp.eq.s32.totalorder %s18, 0
    %p99 = por %p97, %p98
    %s101 = sadd.s32 %s100, 1
    %p104 = scmp.eq.s32.totalorder %s12, 1
    %p105 = scmp.ne.s32.totalorder %s100, %s102
    %p106 = scmp.eq.s32.totalorder %s12, 0
    %p107 = por %p105, %p106
    %p108 = scmp.ne.s32.totalorder %s100, %s102
    %p109 = scmp.eq.s32.totalorder %s17, 1
    %p110 = por %p108, %p109
    %p111 = scmp.ne.s32.totalorder %s102, %s103
    %p112 = scmp.eq.s32.totalorder %s17, 0
    %p113 = por %p111, %p112
    %p114 = scmp.ne.s32.totalorder %s102, %s103
    %p115 = scmp.eq.s32.totalorder %s18, 1
    %p116 = por %p114, %p115
    %p118 = scmp.ne.s32.totalorder %s103, %s117
    %p119 = scmp.eq.s32.totalorder %s18, 0
    %p120 = por %p118, %p119
    %s121 = ssub.s32 %s19, %s31
    %s122 = ssub.s32 %s20, %s27
    %s123 = sor.u32 %s121, %s122
    %p124 = scmp.eq.s32.totalorder %s123, 0
    %s126 = sadd.s32 %s125, 1
    %s127 = scalar_select %p124, %s125, %s126
    %p130 = pneg %p124
    %p131 = scmp.eq.s32.totalorder %s12, 1
    %p132 = por %p130, %p131
    %p133 = scmp.ne.s32.totalorder %s125, %s128
    %p134 = scmp.eq.s32.totalorder %s12, 0
    %p135 = por %p133, %p134
    %p136 = scmp.ne.s32.totalorder %s125, %s128
    %p137 = scmp.eq.s32.totalorder %s17, 1
    %p138 = por %p136, %p137
    %p139 = scmp.ne.s32.totalorder %s128, %s129
    %p140 = scmp.eq.s32.totalorder %s17, 0
    %p141 = por %p139, %p140
    %p142 = scmp.ne.s32.totalorder %s128, %s129
    %p143 = scmp.eq.s32.totalorder %s18, 1
    %p144 = por %p142, %p143
    %p146 = scmp.ne.s32.totalorder %s129, %s145
    %p147 = scmp.eq.s32.totalorder %s18, 0
    %p148 = por %p146, %p147
    %s149 = ssub.s32 %s19, %s31
    %s150 = ssub.s32 %s20, %s27
    %s151 = sor.u32 %s149, %s150
    %p152 = scmp.eq.s32.totalorder %s151, 0
    %s154 = sadd.s32 %s153, 1
    %s155 = scalar_select %p152, %s153, %s154
    %p158 = pneg %p152
    %p159 = scmp.eq.s32.totalorder %s12, 1
    %p160 = por %p158, %p159
    %p161 = scmp.ne.s32.totalorder %s153, %s156
    %p162 = scmp.eq.s32.totalorder %s12, 0
    %p163 = por %p161, %p162
    %p164 = scmp.ne.s32.totalorder %s153, %s156
    %p165 = scmp.eq.s32.totalorder %s17, 1
    %p166 = por %p164, %p165
    %p167 = scmp.ne.s32.totalorder %s156, %s157
    %p168 = scmp.eq.s32.totalorder %s17, 0
    %p169 = por %p167, %p168
    %p170 = scmp.ne.s32.totalorder %s156, %s157
    %p171 = scmp.eq.s32.totalorder %s18, 1
    %p172 = por %p170, %p171
    %p174 = scmp.ne.s32.totalorder %s157, %s173
    %p175 = scmp.eq.s32.totalorder %s18, 0
    %p176 = por %p174, %p175
    %p177 = scmp.le.s32.totalorder 1, %s12
    %p178 = scmp.lt.s32.totalorder %s12, 3
    %p179 = pnand %p177, %p178
    %p180 = pneg %p179
    // Predicated region
    $region9: #{basic_block_forward.5} parent=5 // pred_check
      _
    $region10: #{basic_block_forward.5} parent=5 // pred_check_branch
      %182 = sbr.rel (%p179) target = $region12
    $region11: #{basic_block_forward.5} parent=5 // pred_region
      %s183 = ssub.s32 %s12, 1
      // Predicated region
      $region13: #{basic_block_forward.5} parent=11 // pred_check
        %p184 = pneg %p71
      $region14: #{basic_block_forward.5} parent=11 // pred_check_branch
        %186 = sbr.rel (%p184) target = $region16
      $region15: #{basic_block_forward.5} parent=11 // pred_region
        _
      $region16: #{basic_block_forward.5} parent=11 // pred_fallthru
        _
      // Predicated region
      $region17: #{basic_block_forward.5} parent=11 // pred_check
        %p187 = pneg %p92
      $region18: #{basic_block_forward.5} parent=11 // pred_check_branch
        %189 = sbr.rel (%p187) target = $region20
      $region19: #{basic_block_forward.5} parent=11 // pred_region
        _
      $region20: #{basic_block_forward.5} parent=11 // pred_fallthru
        _
      // Predicated region
      $region21: #{basic_block_forward.5} parent=11 // pred_check
        %p190 = pneg %p113
      $region22: #{basic_block_forward.5} parent=11 // pred_check_branch
        %192 = sbr.rel (%p190) target = $region24
      $region23: #{basic_block_forward.5} parent=11 // pred_region
        _
      $region24: #{basic_block_forward.5} parent=11 // pred_fallthru
        _
    $region12: #{basic_block_forward.5} parent=5 // pred_fallthru
      _
    %p193 = scmp.lt.s32.totalorder %s12, 2
    // Predicated region
    $region25: #{basic_block_forward.5} parent=5 // pred_check
      %p194 = pneg %p193
    $region26: #{basic_block_forward.5} parent=5 // pred_check_branch
      %196 = sbr.rel (%p194) target = $region28
    $region27: #{basic_block_forward.5} parent=5 // pred_region
      // Predicated region
      $region29: #{basic_block_forward.5} parent=27 // pred_check
        %p197 = pneg %p44
      $region30: #{basic_block_forward.5} parent=27 // pred_check_branch
        %199 = sbr.rel (%p197) target = $region32
      $region31: #{basic_block_forward.5} parent=27 // pred_region
        %p200 = scmp.lt.s32.totalorder %s19, 1
        %s201 = scalar_select %p200, %s19, 1
        %s202 = smul.addr %s201, 20
        %s203 = smul.addr %s202, 4
        %s204 = scalar_lea.vmem %s0, %s203
      $region32: #{basic_block_forward.5} parent=27 // pred_fallthru
        _
    $region28: #{basic_block_forward.5} parent=5 // pred_fallthru
      _
    %p205 = scmp.le.s32.totalorder 1, %s12
    %p206 = scmp.lt.s32.totalorder %s12, 3
    %p207 = pnand %p205, %p206
    %p208 = pneg %p207
    // Predicated region
    $region33: #{basic_block_forward.5} parent=5 // pred_check
      _
    $region34: #{basic_block_forward.5} parent=5 // pred_check_branch
      %210 = sbr.rel (%p207) target = $region36
    $region35: #{basic_block_forward.5} parent=5 // pred_region
      %s211 = ssub.s32 %s12, 1
      %p212 = scmp.lt.s32.totalorder %s21, 1
      %s213 = scalar_select %p212, %s21, 1
      %s214 = smul.addr %s213, 20
      %s215 = smul.addr %s214, 4
      %s216 = scalar_lea.vmem %s0, %s215
      %p217 = pneg %p50
      %p218 = pneg %p47
      %p219 = pneg %p71
      %p220 = pneg %p68
      %p221 = pneg %p92
      %p222 = pneg %p89
      %p223 = pneg %p113
      %p224 = pneg %p110
      %p225 = pneg %p141
      %p226 = pneg %p138
      %s227 = smul.u32 8, %s22
      %p228 = scmp.lt.s32.totalorder %s21, 1
      %s229 = scalar_select %p228, %s21, 1
      %p230 = scmp.lt.s32.totalorder %s227, 7
      %s231 = scalar_select %p230, %s227, 7
      %s232 = smul.addr %s229, 8
      %s233 = sadd.s32 %s231, %s232
      %s234 = smul.addr %s233, 4
      %s235 = scalar_lea.vmem %s4, %s234
      %p236 = pneg %p169
      %p237 = pneg %p166
      %p238 = scmp.lt.s32.totalorder %s21, 1
      %s239 = scalar_select %p238, %s21, 1
      %p240 = scmp.lt.s32.totalorder %s22, 0
      %s241 = scalar_select %p240, %s22, 0
      %s242 = sadd.s32 %s241, %s239
      %s243 = smul.addr %s242, 2
      %s244 = scalar_lea.vmem %s5, %s243
      %p245 = scmp.lt.s32.totalorder %s21, 1
      %s246 = scalar_select %p245, %s21, 1
      %s247 = smul.addr %s246, 20
      %s248 = smul.addr %s247, 4
      %s249 = scalar_lea.vmem %s0, %s248
      %s250 = smul.u32 8, %s22
      %p251 = scmp.lt.s32.totalorder %s21, 1
      %s252 = scalar_select %p251, %s21, 1
      %p253 = scmp.lt.s32.totalorder %s250, 7
      %s254 = scalar_select %p253, %s250, 7
      %s255 = smul.addr %s252, 8
      %s256 = sadd.s32 %s254, %s255
      %s257 = smul.addr %s256, 4
      %s258 = scalar_lea.vmem %s4, %s257
      %s259 = smul.u32 8, %s22
      %p260 = scmp.lt.s32.totalorder %s21, 1
      %s261 = scalar_select %p260, %s21, 1
      %p262 = scmp.lt.s32.totalorder %s22, 0
      %s263 = scalar_select %p262, %s22, 0
      %s264 = sadd.s32 %s263, %s261
      %s265 = smul.addr %s264, 2
      %s266 = scalar_lea.vmem %s5, %s265
      %p268 = scmp.eq.s32.totalorder %s22, 0
      // Predicated region
      $region37: #{basic_block_forward.5} parent=35 // pred_check
        %p269 = pneg %p268
      $region38: #{basic_block_forward.5} parent=35 // pred_check_branch
        %271 = sbr.rel (%p269) target = $region40
      $region39: #{basic_block_forward.5} parent=35 // pred_region
        %v272 = vld [vmem:[%s249] sm:$0xf]
        %v273 = vld [vmem:[%s249 + $0x4] sm:$0x1]
        %v274 = vld [vmem:[%s249 + $0x8] sm:$0xf]
        %v275 = vld [vmem:[%s249 + $0xc] sm:$0x1]
        %v276 = vld [vmem:[%s249 + $0x10] sm:$0xf]
        %v277 = vld [vmem:[%s249 + $0x14] sm:$0x1]
        %v278 = vld [vmem:[%s249 + $0x18] sm:$0xf]
        %v279 = vld [vmem:[%s249 + $0x1c] sm:$0x1]
        %v280 = vld [vmem:[%s249 + $0x20] sm:$0xf]
        %v281 = vld [vmem:[%s249 + $0x24] sm:$0x1]
        %v282 = vld [vmem:[%s249 + $0x28] sm:$0xf]
        %v283 = vld [vmem:[%s249 + $0x2c] sm:$0x1]
        %v284 = vld [vmem:[%s249 + $0x30] sm:$0xf]
        %v285 = vld [vmem:[%s249 + $0x34] sm:$0x1]
        %v286 = vld [vmem:[%s249 + $0x38] sm:$0xf]
        %v287 = vld [vmem:[%s249 + $0x3c] sm:$0x1]
        %v288 = vld [vmem:[%s249 + $0x40] sm:$0xf]
        %v289 = vld [vmem:[%s249 + $0x44] sm:$0x1]
        %v290 = vld [vmem:[%s249 + $0x48] sm:$0xf]
        %v291 = vld [vmem:[%s249 + $0x4c] sm:$0x1]
        %v292 = vunpack.c.l.bf16 %v272
        %v293 = vunpack.c.l.bf16 %v273
        %v294 = vunpack.c.l.bf16 %v274
        %v295 = vunpack.c.l.bf16 %v275
        %v296 = vunpack.c.l.bf16 %v276
        %v297 = vunpack.c.l.bf16 %v277
        %v298 = vunpack.c.l.bf16 %v278
        %v299 = vunpack.c.l.bf16 %v279
        %v300 = vunpack.c.l.bf16 %v280
        %v301 = vunpack.c.l.bf16 %v281
        %v302 = vunpack.c.l.bf16 %v282
        %v303 = vunpack.c.l.bf16 %v283
        %v304 = vunpack.c.l.bf16 %v284
        %v305 = vunpack.c.l.bf16 %v285
        %v306 = vunpack.c.l.bf16 %v286
        %v307 = vunpack.c.l.bf16 %v287
        %v308 = vunpack.c.l.bf16 %v288
        %v309 = vunpack.c.l.bf16 %v289
        %v310 = vunpack.c.l.bf16 %v290
        %v311 = vunpack.c.l.bf16 %v291
        %v312 = vld [vmem:[%s1] sm:$0x1]
        %v314 = vlaneseq
        %v315 = vshrl.u32 %v314, 7
        %v316 = vsub.s32 0, %v315
        %v317 = vrot.slane %v312, %v316
        %v319 = vmul.f32 %v292, %v317
        %v320 = vmul.f32 %v293, %v317
        %v321 = vmul.f32 %v294, %v317
        %v322 = vmul.f32 %v295, %v317
        %v323 = vmul.f32 %v296, %v317
        %v324 = vmul.f32 %v297, %v317
        %v325 = vmul.f32 %v298, %v317
        %v326 = vmul.f32 %v299, %v317
        %v327 = vmul.f32 %v300, %v317
        %v328 = vmul.f32 %v301, %v317
        %v329 = vmul.f32 %v302, %v317
        %v330 = vmul.f32 %v303, %v317
        %v331 = vmul.f32 %v304, %v317
        %v332 = vmul.f32 %v305, %v317
        %v333 = vmul.f32 %v306, %v317
        %v334 = vmul.f32 %v307, %v317
        %v335 = vmul.f32 %v308, %v317
        %v336 = vmul.f32 %v309, %v317
        %v337 = vmul.f32 %v310, %v317
        %v338 = vmul.f32 %v311, %v317
        %v339 = vld [vmem:[%s2] sm:$0x1]
        %v341 = vlaneseq
        %v342 = vshrl.u32 %v341, 7
        %v343 = vsub.s32 0, %v342
        %v344 = vrot.slane %v339, %v343
        %v346 = vadd.f32 %v319, %v344
        %v347 = vadd.f32 %v320, %v344
        %v348 = vadd.f32 %v321, %v344
        %v349 = vadd.f32 %v322, %v344
        %v350 = vadd.f32 %v323, %v344
        %v351 = vadd.f32 %v324, %v344
        %v352 = vadd.f32 %v325, %v344
        %v353 = vadd.f32 %v326, %v344
        %v354 = vadd.f32 %v327, %v344
        %v355 = vadd.f32 %v328, %v344
        %v356 = vadd.f32 %v329, %v344
        %v357 = vadd.f32 %v330, %v344
        %v358 = vadd.f32 %v331, %v344
        %v359 = vadd.f32 %v332, %v344
        %v360 = vadd.f32 %v333, %v344
        %v361 = vadd.f32 %v334, %v344
        %v362 = vadd.f32 %v335, %v344
        %v363 = vadd.f32 %v336, %v344
        %v364 = vadd.f32 %v337, %v344
        %v365 = vadd.f32 %v338, %v344
        %v366 = vmax.f32 %v346, 0.0
        %v367 = vmax.f32 %v347, 0.0
        %v368 = vmax.f32 %v348, 0.0
        %v369 = vmax.f32 %v349, 0.0
        %v370 = vmax.f32 %v350, 0.0
        %v371 = vmax.f32 %v351, 0.0
        %v372 = vmax.f32 %v352, 0.0
        %v373 = vmax.f32 %v353, 0.0
        %v374 = vmax.f32 %v354, 0.0
        %v375 = vmax.f32 %v355, 0.0
        %v376 = vmax.f32 %v356, 0.0
        %v377 = vmax.f32 %v357, 0.0
        %v378 = vmax.f32 %v358, 0.0
        %v379 = vmax.f32 %v359, 0.0
        %v380 = vmax.f32 %v360, 0.0
        %v381 = vmax.f32 %v361, 0.0
        %v382 = vmax.f32 %v362, 0.0
        %v383 = vmax.f32 %v363, 0.0
        %v384 = vmax.f32 %v364, 0.0
        %v385 = vmax.f32 %v365, 0.0
        %v386 = vlaneseq
        %v387 = vshrl.u32 %v386, 7
        %v388 = vadd.s32 %v387, 8
        %vm389 = vcmp.eq.s32.totalorder %v387, 0
        %vm390 = vcmp.eq.s32.totalorder %v388, 0
        %vm391 = vmor 1, %vm389
        %vm392 = vmor 1, %vm390
        %vm393 = vmor 0, %vm389
        %vm394 = vmor 0, %vm390
        %vm395 = vcmp.eq.s32.totalorder %v387, 9
        %vm396 = vcmp.eq.s32.totalorder %v388, 9
        %vm397 = vmor %vm391, %vm395
        %vm398 = vmor %vm392, %vm396
        %vm399 = vmor %vm393, %vm395
        %vm400 = vmor %vm394, %vm396
        %v401 = vsel %vm397, 0.0, %v366
        %v402 = vsel %vm398, 0.0, %v367
        %v403 = vsel %vm399, 0.0, %v368
        %v404 = vsel %vm400, 0.0, %v369
        %v405 = vsel %vm399, 0.0, %v370
        %v406 = vsel %vm400, 0.0, %v371
        %v407 = vsel %vm399, 0.0, %v372
        %v408 = vsel %vm400, 0.0, %v373
        %v409 = vsel %vm399, 0.0, %v374
        %v410 = vsel %vm400, 0.0, %v375
        %v411 = vsel %vm399, 0.0, %v376
        %v412 = vsel %vm400, 0.0, %v377
        %v413 = vsel %vm399, 0.0, %v378
        %v414 = vsel %vm400, 0.0, %v379
        %v415 = vsel %vm399, 0.0, %v380
        %v416 = vsel %vm400, 0.0, %v381
        %v417 = vsel %vm399, 0.0, %v382
        %v418 = vsel %vm400, 0.0, %v383
        %v419 = vsel %vm397, 0.0, %v384
        %v420 = vsel %vm398, 0.0, %v385
        %v421 = vpack.c.bf16 %v402, %v401
        %v422 = vpack.c.bf16 %v404, %v403
        %v423 = vpack.c.bf16 %v406, %v405
        %v424 = vpack.c.bf16 %v408, %v407
        %v425 = vpack.c.bf16 %v410, %v409
        %v426 = vpack.c.bf16 %v412, %v411
        %v427 = vpack.c.bf16 %v414, %v413
        %v428 = vpack.c.bf16 %v416, %v415
        %v429 = vpack.c.bf16 %v418, %v417
        %v430 = vpack.c.bf16 %v420, %v419
        %v441 = vunpack.c.l.b16 %v421
        %v442 = vunpack.c.h.b16 %v421
        %v443 = vunpack.c.l.b16 %v422
        %v444 = vunpack.c.h.b16 %v422
        %v445 = vunpack.c.l.b16 %v423
        %v446 = vunpack.c.h.b16 %v423
        %v447 = vunpack.c.l.b16 %v424
        %v448 = vunpack.c.h.b16 %v424
        %v449 = vunpack.c.l.b16 %v425
        %v450 = vunpack.c.h.b16 %v425
        %v451 = vunpack.c.l.b16 %v426
        %v452 = vunpack.c.h.b16 %v426
        %v453 = vunpack.c.l.b16 %v427
        %v454 = vunpack.c.h.b16 %v427
        %v455 = vunpack.c.l.b16 %v428
        %v456 = vunpack.c.h.b16 %v428
        %v457 = vunpack.c.l.b16 %v429
        %v458 = vunpack.c.h.b16 %v429
        %v459 = vunpack.c.l.b16 %v430
        %v460 = vunpack.c.h.b16 %v430
        %v461 = vpack.c.b16 %v441, %v441
        %v462 = vpack.c.b16 %v442, %v442
        %v463 = vpack.c.b16 %v443, %v443
        %v464 = vpack.c.b16 %v444, %v444
        %v465 = vpack.c.b16 %v445, %v445
        %v466 = vpack.c.b16 %v446, %v446
        %v467 = vpack.c.b16 %v447, %v447
        %v468 = vpack.c.b16 %v448, %v448
        %v469 = vpack.c.b16 %v449, %v449
        %v470 = vpack.c.b16 %v450, %v450
        %v471 = vpack.c.b16 %v451, %v451
        %v472 = vpack.c.b16 %v452, %v452
        %v473 = vpack.c.b16 %v453, %v453
        %v474 = vpack.c.b16 %v454, %v454
        %v475 = vpack.c.b16 %v455, %v455
        %v476 = vpack.c.b16 %v456, %v456
        %v477 = vpack.c.b16 %v457, %v457
        %v478 = vpack.c.b16 %v458, %v458
        %v479 = vpack.c.b16 %v459, %v459
        %v480 = vpack.c.b16 %v460, %v460
        %501 = vst [vmem:[#allocation2] sm:$0xf] %v461
        %502 = vst [vmem:[#allocation2 + $0x4] sm:$0x1] %v462
        %503 = vst [vmem:[#allocation2 + $0x8] sm:$0xf] %v463
        %504 = vst [vmem:[#allocation2 + $0xc] sm:$0x1] %v464
        %505 = vst [vmem:[#allocation2 + $0x10] sm:$0xf] %v465
        %506 = vst [vmem:[#allocation2 + $0x14] sm:$0x1] %v466
        %507 = vst [vmem:[#allocation2 + $0x18] sm:$0xf] %v467
        %508 = vst [vmem:[#allocation2 + $0x1c] sm:$0x1] %v468
        %509 = vst [vmem:[#allocation2 + $0x20] sm:$0xf] %v469
        %510 = vst [vmem:[#allocation2 + $0x24] sm:$0x1] %v470
        %511 = vst [vmem:[#allocation2 + $0x28] sm:$0xf] %v471
        %512 = vst [vmem:[#allocation2 + $0x2c] sm:$0x1] %v472
        %513 = vst [vmem:[#allocation2 + $0x30] sm:$0xf] %v473
        %514 = vst [vmem:[#allocation2 + $0x34] sm:$0x1] %v474
        %515 = vst [vmem:[#allocation2 + $0x38] sm:$0xf] %v475
        %516 = vst [vmem:[#allocation2 + $0x3c] sm:$0x1] %v476
        %517 = vst [vmem:[#allocation2 + $0x40] sm:$0xf] %v477
        %518 = vst [vmem:[#allocation2 + $0x44] sm:$0x1] %v478
        %519 = vst [vmem:[#allocation2 + $0x48] sm:$0xf] %v479
        %520 = vst [vmem:[#allocation2 + $0x4c] sm:$0x1] %v480
      $region40: #{basic_block_forward.5} parent=35 // pred_fallthru
        _
      %s521 = smul.u32 %s22, 8
      %s522 = smul.u32 %s521, 2
      %s523 = smul.addr %s522, 4
      %s524 = scalar_lea.vmem [#allocation2], %s523
      %v525 = vld [vmem:[%s524] sm:$0xf]
      %v526 = vld [vmem:[%s524 + $0x8] sm:$0xf]
      %v527 = vld [vmem:[%s524 + $0x10] sm:$0xf]
      %v528 = vld [vmem:[%s524 + $0x18] sm:$0xf]
      %v529 = vld [vmem:[%s524 + $0x20] sm:$0xf]
      %v530 = vld [vmem:[%s524 + $0x28] sm:$0xf]
      %v531 = vld [vmem:[%s524 + $0x30] sm:$0xf]
      %v532 = vld [vmem:[%s524 + $0x38] sm:$0xf]
      %v541 = vunpack.c.l.b16 %v525
      %v542 = vunpack.c.l.b16 %v526
      %v543 = vunpack.c.l.b16 %v527
      %v544 = vunpack.c.l.b16 %v528
      %v545 = vunpack.c.l.b16 %v529
      %v546 = vunpack.c.l.b16 %v530
      %v547 = vunpack.c.l.b16 %v531
      %v548 = vunpack.c.l.b16 %v532
      %v549 = vpack.c.b16 %v542, %v541
      %v550 = vpack.c.b16 %v544, %v543
      %v551 = vpack.c.b16 %v546, %v545
      %v552 = vpack.c.b16 %v548, %v547
      %557 = vst [vmem:[#allocation3] sm:$0xff] %v549
      %558 = vst [vmem:[#allocation3 + $0x48] sm:$0xff] %v550
      %559 = vst [vmem:[#allocation3 + $0x90] sm:$0xff] %v551
      %560 = vst [vmem:[#allocation3 + $0xd8] sm:$0xff] %v552
      %v561 = vld [vmem:[%s524] sm:$0xf]
      %v562 = vld [vmem:[%s524 + $0x4] sm:$0x1]
      %v563 = vld [vmem:[%s524 + $0x8] sm:$0xf]
      %v564 = vld [vmem:[%s524 + $0xc] sm:$0x1]
      %v565 = vld [vmem:[%s524 + $0x10] sm:$0xf]
      %v566 = vld [vmem:[%s524 + $0x14] sm:$0x1]
      %v567 = vld [vmem:[%s524 + $0x18] sm:$0xf]
      %v568 = vld [vmem:[%s524 + $0x1c] sm:$0x1]
      %v569 = vld [vmem:[%s524 + $0x20] sm:$0xf]
      %v570 = vld [vmem:[%s524 + $0x24] sm:$0x1]
      %v571 = vld [vmem:[%s524 + $0x28] sm:$0xf]
      %v572 = vld [vmem:[%s524 + $0x2c] sm:$0x1]
      %v573 = vld [vmem:[%s524 + $0x30] sm:$0xf]
      %v574 = vld [vmem:[%s524 + $0x34] sm:$0x1]
      %v575 = vld [vmem:[%s524 + $0x38] sm:$0xf]
      %v576 = vld [vmem:[%s524 + $0x3c] sm:$0x1]
      %vm577 = vsmask.f32 3328
      %vm578 = vsmask.f32 7440
      %vm579 = vmor %vm577, %vm578
      %v581 = vshrl.u32 %v561, 16
      %v583 = vrot.slane %v581, 4
      %v584 = vshll.u32 %v561, 16
      %v586 = vrot.slane %v584, 5
      %v587 = vor.u32 %v583, %v586
      %v588 = vrot.slane %v587, 4
      %v590 = vshll.u32 %v562, 16
      %v592 = vrot.slane %v590, 5
      %v593 = vsel %vm579, %v588, %v592
      %v595 = vshrl.u32 %v563, 16
      %v597 = vrot.slane %v595, 4
      %v598 = vshll.u32 %v563, 16
      %v600 = vrot.slane %v598, 5
      %v601 = vor.u32 %v597, %v600
      %v602 = vrot.slane %v601, 4
      %v604 = vshll.u32 %v564, 16
      %v606 = vrot.slane %v604, 5
      %v607 = vsel %vm579, %v602, %v606
      %v609 = vshrl.u32 %v565, 16
      %v611 = vrot.slane %v609, 4
      %v612 = vshll.u32 %v565, 16
      %v614 = vrot.slane %v612, 5
      %v615 = vor.u32 %v611, %v614
      %v616 = vrot.slane %v615, 4
      %v618 = vshll.u32 %v566, 16
      %v620 = vrot.slane %v618, 5
      %v621 = vsel %vm579, %v616, %v620
      %v623 = vshrl.u32 %v567, 16
      %v625 = vrot.slane %v623, 4
      %v626 = vshll.u32 %v567, 16
      %v628 = vrot.slane %v626, 5
      %v629 = vor.u32 %v625, %v628
      %v630 = vrot.slane %v629, 4
      %v632 = vshll.u32 %v568, 16
      %v634 = vrot.slane %v632, 5
      %v635 = vsel %vm579, %v630, %v634
      %v637 = vshrl.u32 %v569, 16
      %v639 = vrot.slane %v637, 4
      %v640 = vshll.u32 %v569, 16
      %v642 = vrot.slane %v640, 5
      %v643 = vor.u32 %v639, %v642
      %v644 = vrot.slane %v643, 4
      %v646 = vshll.u32 %v570, 16
      %v648 = vrot.slane %v646, 5
      %v649 = vsel %vm579, %v644, %v648
      %v651 = vshrl.u32 %v571, 16
      %v653 = vrot.slane %v651, 4
      %v654 = vshll.u32 %v571, 16
      %v656 = vrot.slane %v654, 5
      %v657 = vor.u32 %v653, %v656
      %v658 = vrot.slane %v657, 4
      %v660 = vshll.u32 %v572, 16
      %v662 = vrot.slane %v660, 5
      %v663 = vsel %vm579, %v658, %v662
      %v665 = vshrl.u32 %v573, 16
      %v667 = vrot.slane %v665, 4
      %v668 = vshll.u32 %v573, 16
      %v670 = vrot.slane %v668, 5
      %v671 = vor.u32 %v667, %v670
      %v672 = vrot.slane %v671, 4
      %v674 = vshll.u32 %v574, 16
      %v676 = vrot.slane %v674, 5
      %v677 = vsel %vm579, %v672, %v676
      %v679 = vshrl.u32 %v575, 16
      %v681 = vrot.slane %v679, 4
      %v682 = vshll.u32 %v575, 16
      %v684 = vrot.slane %v682, 5
      %v685 = vor.u32 %v681, %v684
      %v686 = vrot.slane %v685, 4
      %v688 = vshll.u32 %v576, 16
      %v690 = vrot.slane %v688, 5
      %v691 = vsel %vm579, %v686, %v690
      %v692 = vunpack.c.l.b16 %v593
      %v693 = vunpack.c.l.b16 %v607
      %v694 = vunpack.c.l.b16 %v621
      %v695 = vunpack.c.l.b16 %v635
      %v696 = vunpack.c.l.b16 %v649
      %v697 = vunpack.c.l.b16 %v663
      %v698 = vunpack.c.l.b16 %v677
      %v699 = vunpack.c.l.b16 %v691
      %v700 = vpack.c.b16 %v693, %v692
      %v701 = vpack.c.b16 %v695, %v694
      %v702 = vpack.c.b16 %v697, %v696
      %v703 = vpack.c.b16 %v699, %v698
      %708 = vst [vmem:[#allocation3 + $0x8] sm:$0xff] %v700
      %709 = vst [vmem:[#allocation3 + $0x50] sm:$0xff] %v701
      %710 = vst [vmem:[#allocation3 + $0x98] sm:$0xff] %v702
      %711 = vst [vmem:[#allocation3 + $0xe0] sm:$0xff] %v703
      %v712 = vld [vmem:[%s524] sm:$0xe]
      %v713 = vld [vmem:[%s524 + $0x4] sm:$0x1]
      %v714 = vld [vmem:[%s524 + $0x8] sm:$0xe]
      %v715 = vld [vmem:[%s524 + $0xc] sm:$0x1]
      %v716 = vld [vmem:[%s524 + $0x10] sm:$0xe]
      %v717 = vld [vmem:[%s524 + $0x14] sm:$0x1]
      %v718 = vld [vmem:[%s524 + $0x18] sm:$0xe]
      %v719 = vld [vmem:[%s524 + $0x1c] sm:$0x1]
      %v720 = vld [vmem:[%s524 + $0x20] sm:$0xe]
      %v721 = vld [vmem:[%s524 + $0x24] sm:$0x1]
      %v722 = vld [vmem:[%s524 + $0x28] sm:$0xe]
      %v723 = vld [vmem:[%s524 + $0x2c] sm:$0x1]
      %v724 = vld [vmem:[%s524 + $0x30] sm:$0xe]
      %v725 = vld [vmem:[%s524 + $0x34] sm:$0x1]
      %v726 = vld [vmem:[%s524 + $0x38] sm:$0xe]
      %v727 = vld [vmem:[%s524 + $0x3c] sm:$0x1]
      %vm744 = vcmask 1042432
      %vm745 = vcmask 1046532
      %vm746 = vmor %vm744, %vm745
      %v747 = vrot.slane %v712, 5
      %v748 = vrot.slane %v747, 4
      %v749 = vrot.slane %v713, 5
      %v750 = vsel %vm746, %v748, %v749
      %v751 = vrot.slane %v714, 5
      %v752 = vrot.slane %v751, 4
      %v753 = vrot.slane %v715, 5
      %v754 = vsel %vm746, %v752, %v753
      %v755 = vrot.slane %v716, 5
      %v756 = vrot.slane %v755, 4
      %v757 = vrot.slane %v717, 5
      %v758 = vsel %vm746, %v756, %v757
      %v759 = vrot.slane %v718, 5
      %v760 = vrot.slane %v759, 4
      %v761 = vrot.slane %v719, 5
      %v762 = vsel %vm746, %v760, %v761
      %v763 = vrot.slane %v720, 5
      %v764 = vrot.slane %v763, 4
      %v765 = vrot.slane %v721, 5
      %v766 = vsel %vm746, %v764, %v765
      %v767 = vrot.slane %v722, 5
      %v768 = vrot.slane %v767, 4
      %v769 = vrot.slane %v723, 5
      %v770 = vsel %vm746, %v768, %v769
      %v771 = vrot.slane %v724, 5
      %v772 = vrot.slane %v771, 4
      %v773 = vrot.slane %v725, 5
      %v774 = vsel %vm746, %v772, %v773
      %v775 = vrot.slane %v726, 5
      %v776 = vrot.slane %v775, 4
      %v777 = vrot.slane %v727, 5
      %v778 = vsel %vm746, %v776, %v777
      %v779 = vunpack.c.l.b16 %v750
      %v780 = vunpack.c.l.b16 %v754
      %v781 = vunpack.c.l.b16 %v758
      %v782 = vunpack.c.l.b16 %v762
      %v783 = vunpack.c.l.b16 %v766
      %v784 = vunpack.c.l.b16 %v770
      %v785 = vunpack.c.l.b16 %v774
      %v786 = vunpack.c.l.b16 %v778
      %v787 = vpack.c.b16 %v780, %v779
      %v788 = vpack.c.b16 %v782, %v781
      %v789 = vpack.c.b16 %v784, %v783
      %v790 = vpack.c.b16 %v786, %v785
      %795 = vst [vmem:[#allocation3 + $0x10] sm:$0xff] %v787
      %796 = vst [vmem:[#allocation3 + $0x58] sm:$0xff] %v788
      %797 = vst [vmem:[#allocation3 + $0xa0] sm:$0xff] %v789
      %798 = vst [vmem:[#allocation3 + $0xe8] sm:$0xff] %v790
      %s799 = sadd.s32 %s521, 1
      %s800 = smul.u32 %s799, 2
      %s801 = smul.addr %s800, 4
      %s802 = scalar_lea.vmem [#allocation2], %s801
      %v803 = vld [vmem:[%s802] sm:$0xf]
      %v804 = vld [vmem:[%s802 + $0x8] sm:$0xf]
      %v805 = vld [vmem:[%s802 + $0x10] sm:$0xf]
      %v806 = vld [vmem:[%s802 + $0x18] sm:$0xf]
      %v807 = vld [vmem:[%s802 + $0x20] sm:$0xf]
      %v808 = vld [vmem:[%s802 + $0x28] sm:$0xf]
      %v809 = vld [vmem:[%s802 + $0x30] sm:$0xf]
      %v810 = vld [vmem:[%s802 + $0x38] sm:$0xf]
      %v819 = vunpack.c.l.b16 %v803
      %v820 = vunpack.c.l.b16 %v804
      %v821 = vunpack.c.l.b16 %v805
      %v822 = vunpack.c.l.b16 %v806
      %v823 = vunpack.c.l.b16 %v807
      %v824 = vunpack.c.l.b16 %v808
      %v825 = vunpack.c.l.b16 %v809
      %v826 = vunpack.c.l.b16 %v810
      %v827 = vpack.c.b16 %v820, %v819
      %v828 = vpack.c.b16 %v822, %v821
      %v829 = vpack.c.b16 %v824, %v823
      %v830 = vpack.c.b16 %v826, %v825
      %835 = vst [vmem:[#allocation3 + $0x18] sm:$0xff] %v827
      %836 = vst [vmem:[#allocation3 + $0x60] sm:$0xff] %v828
      %837 = vst [vmem:[#allocation3 + $0xa8] sm:$0xff] %v829
      %838 = vst [vmem:[#allocation3 + $0xf0] sm:$0xff] %v830
      %v839 = vld [vmem:[%s802] sm:$0xf]
      %v840 = vld [vmem:[%s802 + $0x4] sm:$0x1]
      %v841 = vld [vmem:[%s802 + $0x8] sm:$0xf]
      %v842 = vld [vmem:[%s802 + $0xc] sm:$0x1]
      %v843 = vld [vmem:[%s802 + $0x10] sm:$0xf]
      %v844 = vld [vmem:[%s802 + $0x14] sm:$0x1]
      %v845 = vld [vmem:[%s802 + $0x18] sm:$0xf]
      %v846 = vld [vmem:[%s802 + $0x1c] sm:$0x1]
      %v847 = vld [vmem:[%s802 + $0x20] sm:$0xf]
      %v848 = vld [vmem:[%s802 + $0x24] sm:$0x1]
      %v849 = vld [vmem:[%s802 + $0x28] sm:$0xf]
      %v850 = vld [vmem:[%s802 + $0x2c] sm:$0x1]
      %v851 = vld [vmem:[%s802 + $0x30] sm:$0xf]
      %v852 = vld [vmem:[%s802 + $0x34] sm:$0x1]
      %v853 = vld [vmem:[%s802 + $0x38] sm:$0xf]
      %v854 = vld [vmem:[%s802 + $0x3c] sm:$0x1]
      %v856 = vshrl.u32 %v839, 16
      %v858 = vrot.slane %v856, 4
      %v859 = vshll.u32 %v839, 16
      %v861 = vrot.slane %v859, 5
      %v862 = vor.u32 %v858, %v861
      %v863 = vrot.slane %v862, 4
      %v865 = vshll.u32 %v840, 16
      %v867 = vrot.slane %v865, 5
      %v868 = vsel %vm579, %v863, %v867
      %v870 = vshrl.u32 %v841, 16
      %v872 = vrot.slane %v870, 4
      %v873 = vshll.u32 %v841, 16
      %v875 = vrot.slane %v873, 5
      %v876 = vor.u32 %v872, %v875
      %v877 = vrot.slane %v876, 4
      %v879 = vshll.u32 %v842, 16
      %v881 = vrot.slane %v879, 5
      %v882 = vsel %vm579, %v877, %v881
      %v884 = vshrl.u32 %v843, 16
      %v886 = vrot.slane %v884, 4
      %v887 = vshll.u32 %v843, 16
      %v889 = vrot.slane %v887, 5
      %v890 = vor.u32 %v886, %v889
      %v891 = vrot.slane %v890, 4
      %v893 = vshll.u32 %v844, 16
      %v895 = vrot.slane %v893, 5
      %v896 = vsel %vm579, %v891, %v895
      %v898 = vshrl.u32 %v845, 16
      %v900 = vrot.slane %v898, 4
      %v901 = vshll.u32 %v845, 16
      %v903 = vrot.slane %v901, 5
      %v904 = vor.u32 %v900, %v903
      %v905 = vrot.slane %v904, 4
      %v907 = vshll.u32 %v846, 16
      %v909 = vrot.slane %v907, 5
      %v910 = vsel %vm579, %v905, %v909
      %v912 = vshrl.u32 %v847, 16
      %v914 = vrot.slane %v912, 4
      %v915 = vshll.u32 %v847, 16
      %v917 = vrot.slane %v915, 5
      %v918 = vor.u32 %v914, %v917
      %v919 = vrot.slane %v918, 4
      %v921 = vshll.u32 %v848, 16
      %v923 = vrot.slane %v921, 5
      %v924 = vsel %vm579, %v919, %v923
      %v926 = vshrl.u32 %v849, 16
      %v928 = vrot.slane %v926, 4
      %v929 = vshll.u32 %v849, 16
      %v931 = vrot.slane %v929, 5
      %v932 = vor.u32 %v928, %v931
      %v933 = vrot.slane %v932, 4
      %v935 = vshll.u32 %v850, 16
      %v937 = vrot.slane %v935, 5
      %v938 = vsel %vm579, %v933, %v937
      %v940 = vshrl.u32 %v851, 16
      %v942 = vrot.slane %v940, 4
      %v943 = vshll.u32 %v851, 16
      %v945 = vrot.slane %v943, 5
      %v946 = vor.u32 %v942, %v945
      %v947 = vrot.slane %v946, 4
      %v949 = vshll.u32 %v852, 16
      %v951 = vrot.slane %v949, 5
      %v952 = vsel %vm579, %v947, %v951
      %v954 = vshrl.u32 %v853, 16
      %v956 = vrot.slane %v954, 4
      %v957 = vshll.u32 %v853, 16
      %v959 = vrot.slane %v957, 5
      %v960 = vor.u32 %v956, %v959
      %v961 = vrot.slane %v960, 4
      %v963 = vshll.u32 %v854, 16
      %v965 = vrot.slane %v963, 5
      %v966 = vsel %vm579, %v961, %v965
      %v967 = vunpack.c.l.b16 %v868
      %v968 = vunpack.c.l.b16 %v882
      %v969 = vunpack.c.l.b16 %v896
      %v970 = vunpack.c.l.b16 %v910
      %v971 = vunpack.c.l.b16 %v924
      %v972 = vunpack.c.l.b16 %v938
      %v973 = vunpack.c.l.b16 %v952
      %v974 = vunpack.c.l.b16 %v966
      %v975 = vpack.c.b16 %v968, %v967
      %v976 = vpack.c.b16 %v970, %v969
      %v977 = vpack.c.b16 %v972, %v971
      %v978 = vpack.c.b16 %v974, %v973
      %983 = vst [vmem:[#allocation3 + $0x20] sm:$0xff] %v975
      %984 = vst [vmem:[#allocation3 + $0x68] sm:$0xff] %v976
      %985 = vst [vmem:[#allocation3 + $0xb0] sm:$0xff] %v977
      %986 = vst [vmem:[#allocation3 + $0xf8] sm:$0xff] %v978
      %v987 = vld [vmem:[%s802] sm:$0xe]
      %v988 = vld [vmem:[%s802 + $0x4] sm:$0x1]
      %v989 = vld [vmem:[%s802 + $0x8] sm:$0xe]
      %v990 = vld [vmem:[%s802 + $0xc] sm:$0x1]
      %v991 = vld [vmem:[%s802 + $0x10] sm:$0xe]
      %v992 = vld [vmem:[%s802 + $0x14] sm:$0x1]
      %v993 = vld [vmem:[%s802 + $0x18] sm:$0xe]
      %v994 = vld [vmem:[%s802 + $0x1c] sm:$0x1]
      %v995 = vld [vmem:[%s802 + $0x20] sm:$0xe]
      %v996 = vld [vmem:[%s802 + $0x24] sm:$0x1]
      %v997 = vld [vmem:[%s802 + $0x28] sm:$0xe]
      %v998 = vld [vmem:[%s802 + $0x2c] sm:$0x1]
      %v999 = vld [vmem:[%s802 + $0x30] sm:$0xe]
      %v1000 = vld [vmem:[%s802 + $0x34] sm:$0x1]
      %v1001 = vld [vmem:[%s802 + $0x38] sm:$0xe]
      %v1002 = vld [vmem:[%s802 + $0x3c] sm:$0x1]
      %v1019 = vrot.slane %v987, 5
      %v1020 = vrot.slane %v1019, 4
      %v1021 = vrot.slane %v988, 5
      %v1022 = vsel %vm746, %v1020, %v1021
      %v1023 = vrot.slane %v989, 5
      %v1024 = vrot.slane %v1023, 4
      %v1025 = vrot.slane %v990, 5
      %v1026 = vsel %vm746, %v1024, %v1025
      %v1027 = vrot.slane %v991, 5
      %v1028 = vrot.slane %v1027, 4
      %v1029 = vrot.slane %v992, 5
      %v1030 = vsel %vm746, %v1028, %v1029
      %v1031 = vrot.slane %v993, 5
      %v1032 = vrot.slane %v1031, 4
      %v1033 = vrot.slane %v994, 5
      %v1034 = vsel %vm746, %v1032, %v1033
      %v1035 = vrot.slane %v995, 5
      %v1036 = vrot.slane %v1035, 4
      %v1037 = vrot.slane %v996, 5
      %v1038 = vsel %vm746, %v1036, %v1037
      %v1039 = vrot.slane %v997, 5
      %v1040 = vrot.slane %v1039, 4
      %v1041 = vrot.slane %v998, 5
      %v1042 = vsel %vm746, %v1040, %v1041
      %v1043 = vrot.slane %v999, 5
      %v1044 = vrot.slane %v1043, 4
      %v1045 = vrot.slane %v1000, 5
      %v1046 = vsel %vm746, %v1044, %v1045
      %v1047 = vrot.slane %v1001, 5
      %v1048 = vrot.slane %v1047, 4
      %v1049 = vrot.slane %v1002, 5
      %v1050 = vsel %vm746, %v1048, %v1049
      %v1051 = vunpack.c.l.b16 %v1022
      %v1052 = vunpack.c.l.b16 %v1026
      %v1053 = vunpack.c.l.b16 %v1030
      %v1054 = vunpack.c.l.b16 %v1034
      %v1055 = vunpack.c.l.b16 %v1038
      %v1056 = vunpack.c.l.b16 %v1042
      %v1057 = vunpack.c.l.b16 %v1046
      %v1058 = vunpack.c.l.b16 %v1050
      %v1059 = vpack.c.b16 %v1052, %v1051
      %v1060 = vpack.c.b16 %v1054, %v1053
      %v1061 = vpack.c.b16 %v1056, %v1055
      %v1062 = vpack.c.b16 %v1058, %v1057
      %1067 = vst [vmem:[#allocation3 + $0x28] sm:$0xff] %v1059
      %1068 = vst [vmem:[#allocation3 + $0x70] sm:$0xff] %v1060
      %1069 = vst [vmem:[#allocation3 + $0xb8] sm:$0xff] %v1061
      %1070 = vst [vmem:[#allocation3 + $0x100] sm:$0xff] %v1062
      %s1071 = sadd.s32 %s521, 2
      %s1072 = smul.u32 %s1071, 2
      %s1073 = smul.addr %s1072, 4
      %s1074 = scalar_lea.vmem [#allocation2], %s1073
      %v1075 = vld [vmem:[%s1074] sm:$0xf]
      %v1076 = vld [vmem:[%s1074 + $0x8] sm:$0xf]
      %v1077 = vld [vmem:[%s1074 + $0x10] sm:$0xf]
      %v1078 = vld [vmem:[%s1074 + $0x18] sm:$0xf]
      %v1079 = vld [vmem:[%s1074 + $0x20] sm:$0xf]
      %v1080 = vld [vmem:[%s1074 + $0x28] sm:$0xf]
      %v1081 = vld [vmem:[%s1074 + $0x30] sm:$0xf]
      %v1082 = vld [vmem:[%s1074 + $0x38] sm:$0xf]
      %v1091 = vunpack.c.l.b16 %v1075
      %v1092 = vunpack.c.l.b16 %v1076
      %v1093 = vunpack.c.l.b16 %v1077
      %v1094 = vunpack.c.l.b16 %v1078
      %v1095 = vunpack.c.l.b16 %v1079
      %v1096 = vunpack.c.l.b16 %v1080
      %v1097 = vunpack.c.l.b16 %v1081
      %v1098 = vunpack.c.l.b16 %v1082
      %v1099 = vpack.c.b16 %v1092, %v1091
      %v1100 = vpack.c.b16 %v1094, %v1093
      %v1101 = vpack.c.b16 %v1096, %v1095
      %v1102 = vpack.c.b16 %v1098, %v1097
      %1107 = vst [vmem:[#allocation3 + $0x30] sm:$0xff] %v1099
      %1108 = vst [vmem:[#allocation3 + $0x78] sm:$0xff] %v1100
      %1109 = vst [vmem:[#allocation3 + $0xc0] sm:$0xff] %v1101
      %1110 = vst [vmem:[#allocation3 + $0x108] sm:$0xff] %v1102
      %v1111 = vld [vmem:[%s1074] sm:$0xf]
      %v1112 = vld [vmem:[%s1074 + $0x4] sm:$0x1]
      %v1113 = vld [vmem:[%s1074 + $0x8] sm:$0xf]
      %v1114 = vld [vmem:[%s1074 + $0xc] sm:$0x1]
      %v1115 = vld [vmem:[%s1074 + $0x10] sm:$0xf]
      %v1116 = vld [vmem:[%s1074 + $0x14] sm:$0x1]
      %v1117 = vld [vmem:[%s1074 + $0x18] sm:$0xf]
      %v1118 = vld [vmem:[%s1074 + $0x1c] sm:$0x1]
      %v1119 = vld [vmem:[%s1074 + $0x20] sm:$0xf]
      %v1120 = vld [vmem:[%s1074 + $0x24] sm:$0x1]
      %v1121 = vld [vmem:[%s1074 + $0x28] sm:$0xf]
      %v1122 = vld [vmem:[%s1074 + $0x2c] sm:$0x1]
      %v1123 = vld [vmem:[%s1074 + $0x30] sm:$0xf]
      %v1124 = vld [vmem:[%s1074 + $0x34] sm:$0x1]
      %v1125 = vld [vmem:[%s1074 + $0x38] sm:$0xf]
      %v1126 = vld [vmem:[%s1074 + $0x3c] sm:$0x1]
      %v1128 = vshrl.u32 %v1111, 16
      %v1130 = vrot.slane %v1128, 4
      %v1131 = vshll.u32 %v1111, 16
      %v1133 = vrot.slane %v1131, 5
      %v1134 = vor.u32 %v1130, %v1133
      %v1135 = vrot.slane %v1134, 4
      %v1137 = vshll.u32 %v1112, 16
      %v1139 = vrot.slane %v1137, 5
      %v1140 = vsel %vm579, %v1135, %v1139
      %v1142 = vshrl.u32 %v1113, 16
      %v1144 = vrot.slane %v1142, 4
      %v1145 = vshll.u32 %v1113, 16
      %v1147 = vrot.slane %v1145, 5
      %v1148 = vor.u32 %v1144, %v1147
      %v1149 = vrot.slane %v1148, 4
      %v1151 = vshll.u32 %v1114, 16
      %v1153 = vrot.slane %v1151, 5
      %v1154 = vsel %vm579, %v1149, %v1153
      %v1156 = vshrl.u32 %v1115, 16
      %v1158 = vrot.slane %v1156, 4
      %v1159 = vshll.u32 %v1115, 16
      %v1161 = vrot.slane %v1159, 5
      %v1162 = vor.u32 %v1158, %v1161
      %v1163 = vrot.slane %v1162, 4
      %v1165 = vshll.u32 %v1116, 16
      %v1167 = vrot.slane %v1165, 5
      %v1168 = vsel %vm579, %v1163, %v1167
      %v1170 = vshrl.u32 %v1117, 16
      %v1172 = vrot.slane %v1170, 4
      %v1173 = vshll.u32 %v1117, 16
      %v1175 = vrot.slane %v1173, 5
      %v1176 = vor.u32 %v1172, %v1175
      %v1177 = vrot.slane %v1176, 4
      %v1179 = vshll.u32 %v1118, 16
      %v1181 = vrot.slane %v1179, 5
      %v1182 = vsel %vm579, %v1177, %v1181
      %v1184 = vshrl.u32 %v1119, 16
      %v1186 = vrot.slane %v1184, 4
      %v1187 = vshll.u32 %v1119, 16
      %v1189 = vrot.slane %v1187, 5
      %v1190 = vor.u32 %v1186, %v1189
      %v1191 = vrot.slane %v1190, 4
      %v1193 = vshll.u32 %v1120, 16
      %v1195 = vrot.slane %v1193, 5
      %v1196 = vsel %vm579, %v1191, %v1195
      %v1198 = vshrl.u32 %v1121, 16
      %v1200 = vrot.slane %v1198, 4
      %v1201 = vshll.u32 %v1121, 16
      %v1203 = vrot.slane %v1201, 5
      %v1204 = vor.u32 %v1200, %v1203
      %v1205 = vrot.slane %v1204, 4
      %v1207 = vshll.u32 %v1122, 16
      %v1209 = vrot.slane %v1207, 5
      %v1210 = vsel %vm579, %v1205, %v1209
      %v1212 = vshrl.u32 %v1123, 16
      %v1214 = vrot.slane %v1212, 4
      %v1215 = vshll.u32 %v1123, 16
      %v1217 = vrot.slane %v1215, 5
      %v1218 = vor.u32 %v1214, %v1217
      %v1219 = vrot.slane %v1218, 4
      %v1221 = vshll.u32 %v1124, 16
      %v1223 = vrot.slane %v1221, 5
      %v1224 = vsel %vm579, %v1219, %v1223
      %v1226 = vshrl.u32 %v1125, 16
      %v1228 = vrot.slane %v1226, 4
      %v1229 = vshll.u32 %v1125, 16
      %v1231 = vrot.slane %v1229, 5
      %v1232 = vor.u32 %v1228, %v1231
      %v1233 = vrot.slane %v1232, 4
      %v1235 = vshll.u32 %v1126, 16
      %v1237 = vrot.slane %v1235, 5
      %v1238 = vsel %vm579, %v1233, %v1237
      %v1239 = vunpack.c.l.b16 %v1140
      %v1240 = vunpack.c.l.b16 %v1154
      %v1241 = vunpack.c.l.b16 %v1168
      %v1242 = vunpack.c.l.b16 %v1182
      %v1243 = vunpack.c.l.b16 %v1196
      %v1244 = vunpack.c.l.b16 %v1210
      %v1245 = vunpack.c.l.b16 %v1224
      %v1246 = vunpack.c.l.b16 %v1238
      %v1247 = vpack.c.b16 %v1240, %v1239
      %v1248 = vpack.c.b16 %v1242, %v1241
      %v1249 = vpack.c.b16 %v1244, %v1243
      %v1250 = vpack.c.b16 %v1246, %v1245
      %1255 = vst [vmem:[#allocation3 + $0x38] sm:$0xff] %v1247
      %1256 = vst [vmem:[#allocation3 + $0x80] sm:$0xff] %v1248
      %1257 = vst [vmem:[#allocation3 + $0xc8] sm:$0xff] %v1249
      %1258 = vst [vmem:[#allocation3 + $0x110] sm:$0xff] %v1250
      %v1259 = vld [vmem:[%s1074] sm:$0xe]
      %v1260 = vld [vmem:[%s1074 + $0x4] sm:$0x1]
      %v1261 = vld [vmem:[%s1074 + $0x8] sm:$0xe]
      %v1262 = vld [vmem:[%s1074 + $0xc] sm:$0x1]
      %v1263 = vld [vmem:[%s1074 + $0x10] sm:$0xe]
      %v1264 = vld [vmem:[%s1074 + $0x14] sm:$0x1]
      %v1265 = vld [vmem:[%s1074 + $0x18] sm:$0xe]
      %v1266 = vld [vmem:[%s1074 + $0x1c] sm:$0x1]
      %v1267 = vld [vmem:[%s1074 + $0x20] sm:$0xe]
      %v1268 = vld [vmem:[%s1074 + $0x24] sm:$0x1]
      %v1269 = vld [vmem:[%s1074 + $0x28] sm:$0xe]
      %v1270 = vld [vmem:[%s1074 + $0x2c] sm:$0x1]
      %v1271 = vld [vmem:[%s1074 + $0x30] sm:$0xe]
      %v1272 = vld [vmem:[%s1074 + $0x34] sm:$0x1]
      %v1273 = vld [vmem:[%s1074 + $0x38] sm:$0xe]
      %v1274 = vld [vmem:[%s1074 + $0x3c] sm:$0x1]
      %v1291 = vrot.slane %v1259, 5
      %v1292 = vrot.slane %v1291, 4
      %v1293 = vrot.slane %v1260, 5
      %v1294 = vsel %vm746, %v1292, %v1293
      %v1295 = vrot.slane %v1261, 5
      %v1296 = vrot.slane %v1295, 4
      %v1297 = vrot.slane %v1262, 5
      %v1298 = vsel %vm746, %v1296, %v1297
      %v1299 = vrot.slane %v1263, 5
      %v1300 = vrot.slane %v1299, 4
      %v1301 = vrot.slane %v1264, 5
      %v1302 = vsel %vm746, %v1300, %v1301
      %v1303 = vrot.slane %v1265, 5
      %v1304 = vrot.slane %v1303, 4
      %v1305 = vrot.slane %v1266, 5
      %v1306 = vsel %vm746, %v1304, %v1305
      %v1307 = vrot.slane %v1267, 5
      %v1308 = vrot.slane %v1307, 4
      %v1309 = vrot.slane %v1268, 5
      %v1310 = vsel %vm746, %v1308, %v1309
      %v1311 = vrot.slane %v1269, 5
      %v1312 = vrot.slane %v1311, 4
      %v1313 = vrot.slane %v1270, 5
      %v1314 = vsel %vm746, %v1312, %v1313
      %v1315 = vrot.slane %v1271, 5
      %v1316 = vrot.slane %v1315, 4
      %v1317 = vrot.slane %v1272, 5
      %v1318 = vsel %vm746, %v1316, %v1317
      %v1319 = vrot.slane %v1273, 5
      %v1320 = vrot.slane %v1319, 4
      %v1321 = vrot.slane %v1274, 5
      %v1322 = vsel %vm746, %v1320, %v1321
      %v1323 = vunpack.c.l.b16 %v1294
      %v1324 = vunpack.c.l.b16 %v1298
      %v1325 = vunpack.c.l.b16 %v1302
      %v1326 = vunpack.c.l.b16 %v1306
      %v1327 = vunpack.c.l.b16 %v1310
      %v1328 = vunpack.c.l.b16 %v1314
      %v1329 = vunpack.c.l.b16 %v1318
      %v1330 = vunpack.c.l.b16 %v1322
      %v1331 = vpack.c.b16 %v1324, %v1323
      %v1332 = vpack.c.b16 %v1326, %v1325
      %v1333 = vpack.c.b16 %v1328, %v1327
      %v1334 = vpack.c.b16 %v1330, %v1329
      %1339 = vst [vmem:[#allocation3 + $0x40] sm:$0xff] %v1331
      %1340 = vst [vmem:[#allocation3 + $0x88] sm:$0xff] %v1332
      %1341 = vst [vmem:[#allocation3 + $0xd0] sm:$0xff] %v1333
      %1342 = vst [vmem:[#allocation3 + $0x118] sm:$0xff] %v1334
      %v1343 = vld [vmem:[#allocation3] sm:$0xff]
      %v1344 = vld [vmem:[#allocation3 + $0x8] sm:$0xff]
      %v1345 = vld [vmem:[#allocation3 + $0x10] sm:$0xff]
      %v1346 = vld [vmem:[#allocation3 + $0x18] sm:$0xff]
      %v1347 = vld [vmem:[#allocation3 + $0x20] sm:$0xff]
      %v1348 = vld [vmem:[#allocation3 + $0x28] sm:$0xff]
      %v1349 = vld [vmem:[#allocation3 + $0x30] sm:$0xff]
      %v1350 = vld [vmem:[#allocation3 + $0x38] sm:$0xff]
      %v1351 = vld [vmem:[#allocation3 + $0x40] sm:$0xff]
      %v1352 = vld [vmem:[#allocation3 + $0x48] sm:$0xff]
      %v1353 = vld [vmem:[#allocation3 + $0x50] sm:$0xff]
      %v1354 = vld [vmem:[#allocation3 + $0x58] sm:$0xff]
      %v1355 = vld [vmem:[#allocation3 + $0x60] sm:$0xff]
      %v1356 = vld [vmem:[#allocation3 + $0x68] sm:$0xff]
      %v1357 = vld [vmem:[#allocation3 + $0x70] sm:$0xff]
      %v1358 = vld [vmem:[#allocation3 + $0x78] sm:$0xff]
      %v1359 = vld [vmem:[#allocation3 + $0x80] sm:$0xff]
      %v1360 = vld [vmem:[#allocation3 + $0x88] sm:$0xff]
      %v1361 = vld [vmem:[#allocation3 + $0x90] sm:$0xff]
      %v1362 = vld [vmem:[#allocation3 + $0x98] sm:$0xff]
      %v1363 = vld [vmem:[#allocation3 + $0xa0] sm:$0xff]
      %v1364 = vld [vmem:[#allocation3 + $0xa8] sm:$0xff]
      %v1365 = vld [vmem:[#allocation3 + $0xb0] sm:$0xff]
      %v1366 = vld [vmem:[#allocation3 + $0xb8] sm:$0xff]
      %v1367 = vld [vmem:[#allocation3 + $0xc0] sm:$0xff]
      %v1368 = vld [vmem:[#allocation3 + $0xc8] sm:$0xff]
      %v1369 = vld [vmem:[#allocation3 + $0xd0] sm:$0xff]
      %v1370 = vld [vmem:[#allocation3 + $0xd8] sm:$0xff]
      %v1371 = vld [vmem:[#allocation3 + $0xe0] sm:$0xff]
      %v1372 = vld [vmem:[#allocation3 + $0xe8] sm:$0xff]
      %v1373 = vld [vmem:[#allocation3 + $0xf0] sm:$0xff]
      %v1374 = vld [vmem:[#allocation3 + $0xf8] sm:$0xff]
      %v1375 = vld [vmem:[#allocation3 + $0x100] sm:$0xff]
      %v1376 = vld [vmem:[#allocation3 + $0x108] sm:$0xff]
      %v1377 = vld [vmem:[#allocation3 + $0x110] sm:$0xff]
      %v1378 = vld [vmem:[#allocation3 + $0x118] sm:$0xff]
      %v1379 = vld [vmem:[%s3] sm:$0xf]
      %v1380 = vld [vmem:[%s3 + $0x4] sm:$0xf]
      %v1381 = vld [vmem:[%s3 + $0x8] sm:$0xf]
      %v1382 = vld [vmem:[%s3 + $0xc] sm:$0xf]
      %v1383 = vld [vmem:[%s3 + $0x10] sm:$0xf]
      %v1384 = vld [vmem:[%s3 + $0x14] sm:$0xf]
      %v1385 = vld [vmem:[%s3 + $0x18] sm:$0xf]
      %v1386 = vld [vmem:[%s3 + $0x1c] sm:$0xf]
      %v1387 = vld [vmem:[%s3 + $0x20] sm:$0xf]
      %v1388 = vld [vmem:[%s3 + $0x24] sm:$0xf]
      %v1389 = vld [vmem:[%s3 + $0x28] sm:$0xf]
      %v1390 = vld [vmem:[%s3 + $0x2c] sm:$0xf]
      %v1391 = vld [vmem:[%s3 + $0x30] sm:$0xf]
      %v1392 = vld [vmem:[%s3 + $0x34] sm:$0xf]
      %v1393 = vld [vmem:[%s3 + $0x38] sm:$0xf]
      %v1394 = vld [vmem:[%s3 + $0x3c] sm:$0xf]
      %v1395 = vld [vmem:[%s3 + $0x40] sm:$0xf]
      %v1396 = vld [vmem:[%s3 + $0x44] sm:$0xf]
      %v1397 = vld [vmem:[%s3 + $0x48] sm:$0xf]
      %v1398 = vld [vmem:[%s3 + $0x4c] sm:$0xf]
      %v1399 = vld [vmem:[%s3 + $0x50] sm:$0xf]
      %v1400 = vld [vmem:[%s3 + $0x54] sm:$0xf]
      %v1401 = vld [vmem:[%s3 + $0x58] sm:$0xf]
      %v1402 = vld [vmem:[%s3 + $0x5c] sm:$0xf]
      %v1403 = vld [vmem:[%s3 + $0x60] sm:$0xf]
      %v1404 = vld [vmem:[%s3 + $0x64] sm:$0xf]
      %v1405 = vld [vmem:[%s3 + $0x68] sm:$0xf]
      %v1406 = vld [vmem:[%s3 + $0x6c] sm:$0xf]
      %v1407 = vld [vmem:[%s3 + $0x70] sm:$0xf]
      %v1408 = vld [vmem:[%s3 + $0x74] sm:$0xf]
      %v1409 = vld [vmem:[%s3 + $0x78] sm:$0xf]
      %v1410 = vld [vmem:[%s3 + $0x7c] sm:$0xf]
      %v1411 = vld [vmem:[%s3 + $0x80] sm:$0xf]
      %v1412 = vld [vmem:[%s3 + $0x84] sm:$0xf]
      %v1413 = vld [vmem:[%s3 + $0x88] sm:$0xf]
      %v1414 = vld [vmem:[%s3 + $0x8c] sm:$0xf]
      %v1415 = vld [vmem:[%s3 + $0x90] sm:$0xf]
      %v1416 = vld [vmem:[%s3 + $0x94] sm:$0xf]
      %v1417 = vld [vmem:[%s3 + $0x98] sm:$0xf]
      %v1418 = vld [vmem:[%s3 + $0x9c] sm:$0xf]
      %v1419 = vld [vmem:[%s3 + $0xa0] sm:$0xf]
      %v1420 = vld [vmem:[%s3 + $0xa4] sm:$0xf]
      %v1421 = vld [vmem:[%s3 + $0xa8] sm:$0xf]
      %v1422 = vld [vmem:[%s3 + $0xac] sm:$0xf]
      %v1423 = vld [vmem:[%s3 + $0xb0] sm:$0xf]
      %v1424 = vld [vmem:[%s3 + $0xb4] sm:$0xf]
      %v1425 = vld [vmem:[%s3 + $0xb8] sm:$0xf]
      %v1426 = vld [vmem:[%s3 + $0xbc] sm:$0xf]
      %v1427 = vld [vmem:[%s3 + $0xc0] sm:$0xf]
      %v1428 = vld [vmem:[%s3 + $0xc4] sm:$0xf]
      %v1429 = vld [vmem:[%s3 + $0xc8] sm:$0xf]
      %v1430 = vld [vmem:[%s3 + $0xcc] sm:$0xf]
      %v1431 = vld [vmem:[%s3 + $0xd0] sm:$0xf]
      %v1432 = vld [vmem:[%s3 + $0xd4] sm:$0xf]
      %v1433 = vld [vmem:[%s3 + $0xd8] sm:$0xf]
      %v1434 = vld [vmem:[%s3 + $0xdc] sm:$0xf]
      %v1435 = vld [vmem:[%s3 + $0xe0] sm:$0xf]
      %v1436 = vld [vmem:[%s3 + $0xe4] sm:$0xf]
      %v1437 = vld [vmem:[%s3 + $0xe8] sm:$0xf]
      %v1438 = vld [vmem:[%s3 + $0xec] sm:$0xf]
      %v1439 = vld [vmem:[%s3 + $0xf0] sm:$0xf]
      %v1440 = vld [vmem:[%s3 + $0xf4] sm:$0xf]
      %v1441 = vld [vmem:[%s3 + $0xf8] sm:$0xf]
      %v1442 = vld [vmem:[%s3 + $0xfc] sm:$0xf]
      %v1443 = vld [vmem:[%s3 + $0x100] sm:$0xf]
      %v1444 = vld [vmem:[%s3 + $0x104] sm:$0xf]
      %v1445 = vld [vmem:[%s3 + $0x108] sm:$0xf]
      %v1446 = vld [vmem:[%s3 + $0x10c] sm:$0xf]
      %v1447 = vld [vmem:[%s3 + $0x110] sm:$0xf]
      %v1448 = vld [vmem:[%s3 + $0x114] sm:$0xf]
      %v1449 = vld [vmem:[%s3 + $0x118] sm:$0xf]
      %v1450 = vld [vmem:[%s3 + $0x11c] sm:$0xf]
      %v1451 = vld [vmem:[%s3 + $0x120] sm:$0xf]
      %v1452 = vld [vmem:[%s3 + $0x124] sm:$0xf]
      %v1453 = vld [vmem:[%s3 + $0x128] sm:$0xf]
      %v1454 = vld [vmem:[%s3 + $0x12c] sm:$0xf]
      %v1455 = vld [vmem:[%s3 + $0x130] sm:$0xf]
      %v1456 = vld [vmem:[%s3 + $0x134] sm:$0xf]
      %v1457 = vld [vmem:[%s3 + $0x138] sm:$0xf]
      %v1458 = vld [vmem:[%s3 + $0x13c] sm:$0xf]
      %v1459 = vld [vmem:[%s3 + $0x140] sm:$0xf]
      %v1460 = vld [vmem:[%s3 + $0x144] sm:$0xf]
      %v1461 = vld [vmem:[%s3 + $0x148] sm:$0xf]
      %v1462 = vld [vmem:[%s3 + $0x14c] sm:$0xf]
      %v1463 = vld [vmem:[%s3 + $0x150] sm:$0xf]
      %v1464 = vld [vmem:[%s3 + $0x154] sm:$0xf]
      %v1465 = vld [vmem:[%s3 + $0x158] sm:$0xf]
      %v1466 = vld [vmem:[%s3 + $0x15c] sm:$0xf]
      %v1467 = vld [vmem:[%s3 + $0x160] sm:$0xf]
      %v1468 = vld [vmem:[%s3 + $0x164] sm:$0xf]
      %v1469 = vld [vmem:[%s3 + $0x168] sm:$0xf]
      %v1470 = vld [vmem:[%s3 + $0x16c] sm:$0xf]
      %v1471 = vld [vmem:[%s3 + $0x170] sm:$0xf]
      %v1472 = vld [vmem:[%s3 + $0x174] sm:$0xf]
      %v1473 = vld [vmem:[%s3 + $0x178] sm:$0xf]
      %v1474 = vld [vmem:[%s3 + $0x17c] sm:$0xf]
      %v1475 = vld [vmem:[%s3 + $0x180] sm:$0xf]
      %v1476 = vld [vmem:[%s3 + $0x184] sm:$0xf]
      %v1477 = vld [vmem:[%s3 + $0x188] sm:$0xf]
      %v1478 = vld [vmem:[%s3 + $0x18c] sm:$0xf]
      %v1479 = vld [vmem:[%s3 + $0x190] sm:$0xf]
      %v1480 = vld [vmem:[%s3 + $0x194] sm:$0xf]
      %v1481 = vld [vmem:[%s3 + $0x198] sm:$0xf]
      %v1482 = vld [vmem:[%s3 + $0x19c] sm:$0xf]
      %v1483 = vld [vmem:[%s3 + $0x1a0] sm:$0xf]
      %v1484 = vld [vmem:[%s3 + $0x1a4] sm:$0xf]
      %v1485 = vld [vmem:[%s3 + $0x1a8] sm:$0xf]
      %v1486 = vld [vmem:[%s3 + $0x1ac] sm:$0xf]
      %v1487 = vld [vmem:[%s3 + $0x1b0] sm:$0xf]
      %v1488 = vld [vmem:[%s3 + $0x1b4] sm:$0xf]
      %v1489 = vld [vmem:[%s3 + $0x1b8] sm:$0xf]
      %v1490 = vld [vmem:[%s3 + $0x1bc] sm:$0xf]
      %v1491 = vld [vmem:[%s3 + $0x1c0] sm:$0xf]
      %v1492 = vld [vmem:[%s3 + $0x1c4] sm:$0xf]
      %v1493 = vld [vmem:[%s3 + $0x1c8] sm:$0xf]
      %v1494 = vld [vmem:[%s3 + $0x1cc] sm:$0xf]
      %v1495 = vld [vmem:[%s3 + $0x1d0] sm:$0xf]
      %v1496 = vld [vmem:[%s3 + $0x1d4] sm:$0xf]
      %v1497 = vld [vmem:[%s3 + $0x1d8] sm:$0xf]
      %v1498 = vld [vmem:[%s3 + $0x1dc] sm:$0xf]
      %v1499 = vld [vmem:[%s3 + $0x1e0] sm:$0xf]
      %v1500 = vld [vmem:[%s3 + $0x1e4] sm:$0xf]
      %v1501 = vld [vmem:[%s3 + $0x1e8] sm:$0xf]
      %v1502 = vld [vmem:[%s3 + $0x1ec] sm:$0xf]
      %v1503 = vld [vmem:[%s3 + $0x1f0] sm:$0xf]
      %v1504 = vld [vmem:[%s3 + $0x1f4] sm:$0xf]
      %v1505 = vld [vmem:[%s3 + $0x1f8] sm:$0xf]
      %v1506 = vld [vmem:[%s3 + $0x1fc] sm:$0xf]
      %v1507 = vld [vmem:[%s3 + $0x200] sm:$0xf]
      %v1508 = vld [vmem:[%s3 + $0x204] sm:$0xf]
      %v1509 = vld [vmem:[%s3 + $0x208] sm:$0xf]
      %v1510 = vld [vmem:[%s3 + $0x20c] sm:$0xf]
      %v1511 = vld [vmem:[%s3 + $0x210] sm:$0xf]
      %v1512 = vld [vmem:[%s3 + $0x214] sm:$0xf]
      %v1513 = vld [vmem:[%s3 + $0x218] sm:$0xf]
      %v1514 = vld [vmem:[%s3 + $0x21c] sm:$0xf]
      %v1515 = vld [vmem:[%s3 + $0x220] sm:$0xf]
      %v1516 = vld [vmem:[%s3 + $0x224] sm:$0xf]
      %v1517 = vld [vmem:[%s3 + $0x228] sm:$0xf]
      %v1518 = vld [vmem:[%s3 + $0x22c] sm:$0xf]
      %v1519 = vld [vmem:[%s3 + $0x230] sm:$0xf]
      %v1520 = vld [vmem:[%s3 + $0x234] sm:$0xf]
      %v1521 = vld [vmem:[%s3 + $0x238] sm:$0xf]
      %v1522 = vld [vmem:[%s3 + $0x23c] sm:$0xf]
      %v1667 = vunpack.c.l.b16 %v1379
      %v1668 = vunpack.c.l.b16 %v1380
      %v1669 = vunpack.c.l.b16 %v1381
      %v1670 = vunpack.c.l.b16 %v1382
      %v1671 = vunpack.c.l.b16 %v1383
      %v1672 = vunpack.c.l.b16 %v1384
      %v1673 = vunpack.c.l.b16 %v1385
      %v1674 = vunpack.c.l.b16 %v1386
      %v1675 = vunpack.c.l.b16 %v1387
      %v1676 = vunpack.c.l.b16 %v1388
      %v1677 = vunpack.c.l.b16 %v1389
      %v1678 = vunpack.c.l.b16 %v1390
      %v1679 = vunpack.c.l.b16 %v1391
      %v1680 = vunpack.c.l.b16 %v1392
      %v1681 = vunpack.c.l.b16 %v1393
      %v1682 = vunpack.c.l.b16 %v1394
      %v1683 = vunpack.c.l.b16 %v1395
      %v1684 = vunpack.c.l.b16 %v1396
      %v1685 = vunpack.c.l.b16 %v1397
      %v1686 = vunpack.c.l.b16 %v1398
      %v1687 = vunpack.c.l.b16 %v1399
      %v1688 = vunpack.c.l.b16 %v1400
      %v1689 = vunpack.c.l.b16 %v1401
      %v1690 = vunpack.c.l.b16 %v1402
      %v1691 = vunpack.c.l.b16 %v1403
      %v1692 = vunpack.c.l.b16 %v1404
      %v1693 = vunpack.c.l.b16 %v1405
      %v1694 = vunpack.c.l.b16 %v1406
      %v1695 = vunpack.c.l.b16 %v1407
      %v1696 = vunpack.c.l.b16 %v1408
      %v1697 = vunpack.c.l.b16 %v1409
      %v1698 = vunpack.c.l.b16 %v1410
      %v1699 = vunpack.c.l.b16 %v1411
      %v1700 = vunpack.c.l.b16 %v1412
      %v1701 = vunpack.c.l.b16 %v1413
      %v1702 = vunpack.c.l.b16 %v1414
      %v1703 = vunpack.c.l.b16 %v1415
      %v1704 = vunpack.c.l.b16 %v1416
      %v1705 = vunpack.c.l.b16 %v1417
      %v1706 = vunpack.c.l.b16 %v1418
      %v1707 = vunpack.c.l.b16 %v1419
      %v1708 = vunpack.c.l.b16 %v1420
      %v1709 = vunpack.c.l.b16 %v1421
      %v1710 = vunpack.c.l.b16 %v1422
      %v1711 = vunpack.c.l.b16 %v1423
      %v1712 = vunpack.c.l.b16 %v1424
      %v1713 = vunpack.c.l.b16 %v1425
      %v1714 = vunpack.c.l.b16 %v1426
      %v1715 = vunpack.c.l.b16 %v1427
      %v1716 = vunpack.c.l.b16 %v1428
      %v1717 = vunpack.c.l.b16 %v1429
      %v1718 = vunpack.c.l.b16 %v1430
      %v1719 = vunpack.c.l.b16 %v1431
      %v1720 = vunpack.c.l.b16 %v1432
      %v1721 = vunpack.c.l.b16 %v1433
      %v1722 = vunpack.c.l.b16 %v1434
      %v1723 = vunpack.c.l.b16 %v1435
      %v1724 = vunpack.c.l.b16 %v1436
      %v1725 = vunpack.c.l.b16 %v1437
      %v1726 = vunpack.c.l.b16 %v1438
      %v1727 = vunpack.c.l.b16 %v1439
      %v1728 = vunpack.c.l.b16 %v1440
      %v1729 = vunpack.c.l.b16 %v1441
      %v1730 = vunpack.c.l.b16 %v1442
      %v1731 = vunpack.c.l.b16 %v1443
      %v1732 = vunpack.c.l.b16 %v1444
      %v1733 = vunpack.c.l.b16 %v1445
      %v1734 = vunpack.c.l.b16 %v1446
      %v1735 = vunpack.c.l.b16 %v1447
      %v1736 = vunpack.c.l.b16 %v1448
      %v1737 = vunpack.c.l.b16 %v1449
      %v1738 = vunpack.c.l.b16 %v1450
      %v1739 = vunpack.c.l.b16 %v1451
      %v1740 = vunpack.c.l.b16 %v1452
      %v1741 = vunpack.c.l.b16 %v1453
      %v1742 = vunpack.c.l.b16 %v1454
      %v1743 = vunpack.c.l.b16 %v1455
      %v1744 = vunpack.c.l.b16 %v1456
      %v1745 = vunpack.c.l.b16 %v1457
      %v1746 = vunpack.c.l.b16 %v1458
      %v1747 = vunpack.c.l.b16 %v1459
      %v1748 = vunpack.c.l.b16 %v1460
      %v1749 = vunpack.c.l.b16 %v1461
      %v1750 = vunpack.c.l.b16 %v1462
      %v1751 = vunpack.c.l.b16 %v1463
      %v1752 = vunpack.c.l.b16 %v1464
      %v1753 = vunpack.c.l.b16 %v1465
      %v1754 = vunpack.c.l.b16 %v1466
      %v1755 = vunpack.c.l.b16 %v1467
      %v1756 = vunpack.c.l.b16 %v1468
      %v1757 = vunpack.c.l.b16 %v1469
      %v1758 = vunpack.c.l.b16 %v1470
      %v1759 = vunpack.c.l.b16 %v1471
      %v1760 = vunpack.c.l.b16 %v1472
      %v1761 = vunpack.c.l.b16 %v1473
      %v1762 = vunpack.c.l.b16 %v1474
      %v1763 = vunpack.c.l.b16 %v1475
      %v1764 = vunpack.c.l.b16 %v1476
      %v1765 = vunpack.c.l.b16 %v1477
      %v1766 = vunpack.c.l.b16 %v1478
      %v1767 = vunpack.c.l.b16 %v1479
      %v1768 = vunpack.c.l.b16 %v1480
      %v1769 = vunpack.c.l.b16 %v1481
      %v1770 = vunpack.c.l.b16 %v1482
      %v1771 = vunpack.c.l.b16 %v1483
      %v1772 = vunpack.c.l.b16 %v1484
      %v1773 = vunpack.c.l.b16 %v1485
      %v1774 = vunpack.c.l.b16 %v1486
      %v1775 = vunpack.c.l.b16 %v1487
      %v1776 = vunpack.c.l.b16 %v1488
      %v1777 = vunpack.c.l.b16 %v1489
      %v1778 = vunpack.c.l.b16 %v1490
      %v1779 = vunpack.c.l.b16 %v1491
      %v1780 = vunpack.c.l.b16 %v1492
      %v1781 = vunpack.c.l.b16 %v1493
      %v1782 = vunpack.c.l.b16 %v1494
      %v1783 = vunpack.c.l.b16 %v1495
      %v1784 = vunpack.c.l.b16 %v1496
      %v1785 = vunpack.c.l.b16 %v1497
      %v1786 = vunpack.c.l.b16 %v1498
      %v1787 = vunpack.c.l.b16 %v1499
      %v1788 = vunpack.c.l.b16 %v1500
      %v1789 = vunpack.c.l.b16 %v1501
      %v1790 = vunpack.c.l.b16 %v1502
      %v1791 = vunpack.c.l.b16 %v1503
      %v1792 = vunpack.c.l.b16 %v1504
      %v1793 = vunpack.c.l.b16 %v1505
      %v1794 = vunpack.c.l.b16 %v1506
      %v1795 = vunpack.c.l.b16 %v1507
      %v1796 = vunpack.c.l.b16 %v1508
      %v1797 = vunpack.c.l.b16 %v1509
      %v1798 = vunpack.c.l.b16 %v1510
      %v1799 = vunpack.c.l.b16 %v1511
      %v1800 = vunpack.c.l.b16 %v1512
      %v1801 = vunpack.c.l.b16 %v1513
      %v1802 = vunpack.c.l.b16 %v1514
      %v1803 = vunpack.c.l.b16 %v1515
      %v1804 = vunpack.c.l.b16 %v1516
      %v1805 = vunpack.c.l.b16 %v1517
      %v1806 = vunpack.c.l.b16 %v1518
      %v1807 = vunpack.c.l.b16 %v1519
      %v1808 = vunpack.c.l.b16 %v1520
      %v1809 = vunpack.c.l.b16 %v1521
      %v1810 = vunpack.c.l.b16 %v1522
      %v1811 = vpack.c.b16 %v1668, %v1667
      %v1812 = vpack.c.b16 %v1670, %v1669
      %v1813 = vpack.c.b16 %v1672, %v1671
      %v1814 = vpack.c.b16 %v1674, %v1673
      %v1815 = vpack.c.b16 %v1676, %v1675
      %v1816 = vpack.c.b16 %v1678, %v1677
      %v1817 = vpack.c.b16 %v1680, %v1679
      %v1818 = vpack.c.b16 %v1682, %v1681
      %v1819 = vpack.c.b16 %v1684, %v1683
      %v1820 = vpack.c.b16 %v1686, %v1685
      %v1821 = vpack.c.b16 %v1688, %v1687
      %v1822 = vpack.c.b16 %v1690, %v1689
      %v1823 = vpack.c.b16 %v1692, %v1691
      %v1824 = vpack.c.b16 %v1694, %v1693
      %v1825 = vpack.c.b16 %v1696, %v1695
      %v1826 = vpack.c.b16 %v1698, %v1697
      %v1827 = vpack.c.b16 %v1700, %v1699
      %v1828 = vpack.c.b16 %v1702, %v1701
      %v1829 = vpack.c.b16 %v1704, %v1703
      %v1830 = vpack.c.b16 %v1706, %v1705
      %v1831 = vpack.c.b16 %v1708, %v1707
      %v1832 = vpack.c.b16 %v1710, %v1709
      %v1833 = vpack.c.b16 %v1712, %v1711
      %v1834 = vpack.c.b16 %v1714, %v1713
      %v1835 = vpack.c.b16 %v1716, %v1715
      %v1836 = vpack.c.b16 %v1718, %v1717
      %v1837 = vpack.c.b16 %v1720, %v1719
      %v1838 = vpack.c.b16 %v1722, %v1721
      %v1839 = vpack.c.b16 %v1724, %v1723
      %v1840 = vpack.c.b16 %v1726, %v1725
      %v1841 = vpack.c.b16 %v1728, %v1727
      %v1842 = vpack.c.b16 %v1730, %v1729
      %v1843 = vpack.c.b16 %v1732, %v1731
      %v1844 = vpack.c.b16 %v1734, %v1733
      %v1845 = vpack.c.b16 %v1736, %v1735
      %v1846 = vpack.c.b16 %v1738, %v1737
      %v1847 = vpack.c.b16 %v1740, %v1739
      %v1848 = vpack.c.b16 %v1742, %v1741
      %v1849 = vpack.c.b16 %v1744, %v1743
      %v1850 = vpack.c.b16 %v1746, %v1745
      %v1851 = vpack.c.b16 %v1748, %v1747
      %v1852 = vpack.c.b16 %v1750, %v1749
      %v1853 = vpack.c.b16 %v1752, %v1751
      %v1854 = vpack.c.b16 %v1754, %v1753
      %v1855 = vpack.c.b16 %v1756, %v1755
      %v1856 = vpack.c.b16 %v1758, %v1757
      %v1857 = vpack.c.b16 %v1760, %v1759
      %v1858 = vpack.c.b16 %v1762, %v1761
      %v1859 = vpack.c.b16 %v1764, %v1763
      %v1860 = vpack.c.b16 %v1766, %v1765
      %v1861 = vpack.c.b16 %v1768, %v1767
      %v1862 = vpack.c.b16 %v1770, %v1769
      %v1863 = vpack.c.b16 %v1772, %v1771
      %v1864 = vpack.c.b16 %v1774, %v1773
      %v1865 = vpack.c.b16 %v1776, %v1775
      %v1866 = vpack.c.b16 %v1778, %v1777
      %v1867 = vpack.c.b16 %v1780, %v1779
      %v1868 = vpack.c.b16 %v1782, %v1781
      %v1869 = vpack.c.b16 %v1784, %v1783
      %v1870 = vpack.c.b16 %v1786, %v1785
      %v1871 = vpack.c.b16 %v1788, %v1787
      %v1872 = vpack.c.b16 %v1790, %v1789
      %v1873 = vpack.c.b16 %v1792, %v1791
      %v1874 = vpack.c.b16 %v1794, %v1793
      %v1875 = vpack.c.b16 %v1796, %v1795
      %v1876 = vpack.c.b16 %v1798, %v1797
      %v1877 = vpack.c.b16 %v1800, %v1799
      %v1878 = vpack.c.b16 %v1802, %v1801
      %v1879 = vpack.c.b16 %v1804, %v1803
      %v1880 = vpack.c.b16 %v1806, %v1805
      %v1881 = vpack.c.b16 %v1808, %v1807
      %v1882 = vpack.c.b16 %v1810, %v1809
      %1955 = vmatprep.subr.bf16.mxu0 0
      %1956 = vmatpush1.bf16.msra.mxu0 %v1811
      %1957 = vmatprep.subr.bf16.mxu0 0
      %1958 = vmatpush1.bf16.msra.mxu0 %v1812
      %1959 = vmatprep.subr.bf16.mxu0 0
      %1960 = vmatpush1.bf16.msra.mxu0 %v1813
      %1961 = vmatprep.subr.bf16.mxu0 0
      %1962 = vmatpush1.bf16.msra.mxu0 %v1814
      %1963 = vmatprep.subr.bf16.mxu0 0
      %1964 = vmatpush1.bf16.msra.mxu0 %v1815
      %1965 = vmatprep.subr.bf16.mxu0 0
      %1966 = vmatpush1.bf16.msra.mxu0 %v1816
      %1967 = vmatprep.subr.bf16.mxu0 0
      %1968 = vmatpush1.bf16.msra.mxu0 %v1817
      %1969 = vmatprep.subr.bf16.mxu0 0
      %1970 = vmatpush1.bf16.msra.mxu0 %v1818
      %1971 = vmatprep.subr.bf16.mxu0 0
      %1972 = vmatpush1.bf16.msra.mxu0 %v1819
      %1973 = vmatprep.subr.bf16.mxu0 0
      %1974 = vmatpush1.bf16.msra.mxu0 %v1820
      %1975 = vmatprep.subr.bf16.mxu0 0
      %1976 = vmatpush1.bf16.msra.mxu0 %v1821
      %1977 = vmatprep.subr.bf16.mxu0 0
      %1978 = vmatpush1.bf16.msra.mxu0 %v1822
      %1979 = vmatprep.subr.bf16.mxu0 0
      %1980 = vmatpush1.bf16.msra.mxu0 %v1823
      %1981 = vmatprep.subr.bf16.mxu0 0
      %1982 = vmatpush1.bf16.msra.mxu0 %v1824
      %1983 = vmatprep.subr.bf16.mxu0 0
      %1984 = vmatpush1.bf16.msra.mxu0 %v1825
      %1985 = vmatprep.subr.bf16.mxu0 0
      %1986 = vmatpush1.bf16.msra.mxu0 %v1826
      %1987 = vmatprep.mubr.bf16.mxu0 %v1344
      %1988 = vmatmul.mubr.bf16.gmra.mrb[0].mxu0 %v1343
      %v1989 = vpop.f32.mrb[0].mxu0
      %v1990 = vadd.f32 0.0, %v1989
      %v1991 = vpop.f32.mrb[0].mxu0
      %v1992 = vpop.f32.mrb[0].mxu0
      %v1993 = vadd.f32 0.0, %v1992
      %v1994 = vpop.f32.mrb[0].mxu0
      %1995 = vmatprep.mubr.bf16.mxu0 %v1353
      %1996 = vmatmul.mubr.bf16.gmra.mrb[0].mxu0 %v1352
      %v1997 = vpop.f32.mrb[0].mxu0
      %v1998 = vadd.f32 0.0, %v1997
      %v1999 = vpop.f32.mrb[0].mxu0
      %v2000 = vpop.f32.mrb[0].mxu0
      %v2001 = vadd.f32 0.0, %v2000
      %v2002 = vpop.f32.mrb[0].mxu0
      %2003 = vmatprep.mubr.bf16.mxu0 %v1362
      %2004 = vmatmul.mubr.bf16.gmra.mrb[0].mxu0 %v1361
      %v2005 = vpop.f32.mrb[0].mxu0
      %v2006 = vadd.f32 0.0, %v2005
      %v2007 = vpop.f32.mrb[0].mxu0
      %v2008 = vpop.f32.mrb[0].mxu0
      %v2009 = vadd.f32 0.0, %v2008
      %v2010 = vpop.f32.mrb[0].mxu0
      %2011 = vmatprep.mubr.bf16.mxu0 %v1371
      %2012 = vmatmul.mubr.bf16.gmra.mrb[0].mxu0 %v1370
      %v2013 = vpop.f32.mrb[0].mxu0
      %v2014 = vadd.f32 0.0, %v2013
      %v2015 = vpop.f32.mrb[0].mxu0
      %v2016 = vpop.f32.mrb[0].mxu0
      %v2017 = vadd.f32 0.0, %v2016
      %v2018 = vpop.f32.mrb[0].mxu0
      %2019 = vdwg.mxu0
      %2020 = vmatprep.subr.bf16.mxu0 0
      %2021 = vmatpush1.bf16.msra.mxu0 %v1827
      %2022 = vmatprep.subr.bf16.mxu0 0
      %2023 = vmatpush1.bf16.msra.mxu0 %v1828
      %2024 = vmatprep.subr.bf16.mxu0 0
      %2025 = vmatpush1.bf16.msra.mxu0 %v1829
      %2026 = vmatprep.subr.bf16.mxu0 0
      %2027 = vmatpush1.bf16.msra.mxu0 %v1830
      %2028 = vmatprep.subr.bf16.mxu0 0
      %2029 = vmatpush1.bf16.msra.mxu0 %v1831
      %2030 = vmatprep.subr.bf16.mxu0 0
      %2031 = vmatpush1.bf16.msra.mxu0 %v1832
      %2032 = vmatprep.subr.bf16.mxu0 0
      %2033 = vmatpush1.bf16.msra.mxu0 %v1833
      %2034 = vmatprep.subr.bf16.mxu0 0
      %2035 = vmatpush1.bf16.msra.mxu0 %v1834
      %2036 = vmatprep.subr.bf16.mxu0 0
      %2037 = vmatpush1.bf16.msra.mxu0 %v1835
      %2038 = vmatprep.subr.bf16.mxu0 0
      %2039 = vmatpush1.bf16.msra.mxu0 %v1836
      %2040 = vmatprep.subr.bf16.mxu0 0
      %2041 = vmatpush1.bf16.msra.mxu0 %v1837
      %2042 = vmatprep.subr.bf16.mxu0 0
      %2043 = vmatpush1.bf16.msra.mxu0 %v1838
      %2044 = vmatprep.subr.bf16.mxu0 0
      %2045 = vmatpush1.bf16.msra.mxu0 %v1839
      %2046 = vmatprep.subr.bf16.mxu0 0
      %2047 = vmatpush1.bf16.msra.mxu0 %v1840
      %2048 = vmatprep.subr.bf16.mxu0 0
      %2049 = vmatpush1.bf16.msra.mxu0 %v1841
      %2050 = vmatprep.subr.bf16.mxu0 0
      %2051 = vmatpush1.bf16.msra.mxu0 %v1842
      %2052 = vmatprep.mubr.bf16.mxu0 %v1346
      %2053 = vmatmul.mubr.bf16.gmra.mrb[0].mxu0 %v1345
      %v2054 = vpop.f32.mrb[0].mxu0
      %v2055 = vadd.f32 %v1990, %v2054
      %v2056 = vpop.f32.mrb[0].mxu0
      %v2057 = vpop.f32.mrb[0].mxu0
      %v2058 = vadd.f32 %v1993, %v2057
      %v2059 = vpop.f32.mrb[0].mxu0
      %2060 = vmatprep.mubr.bf16.mxu0 %v1355
      %2061 = vmatmul.mubr.bf16.gmra.mrb[0].mxu0 %v1354
      %v2062 = vpop.f32.mrb[0].mxu0
      %v2063 = vadd.f32 %v1998, %v2062
      %v2064 = vpop.f32.mrb[0].mxu0
      %v2065 = vpop.f32.mrb[0].mxu0
      %v2066 = vadd.f32 %v2001, %v2065
      %v2067 = vpop.f32.mrb[0].mxu0
      %2068 = vmatprep.mubr.bf16.mxu0 %v1364
      %2069 = vmatmul.mubr.bf16.gmra.mrb[0].mxu0 %v1363
      %v2070 = vpop.f32.mrb[0].mxu0
      %v2071 = vadd.f32 %v2006, %v2070
      %v2072 = vpop.f32.mrb[0].mxu0
      %v2073 = vpop.f32.mrb[0].mxu0
      %v2074 = vadd.f32 %v2009, %v2073
      %v2075 = vpop.f32.mrb[0].mxu0
      %2076 = vmatprep.mubr.bf16.mxu0 %v1373
      %2077 = vmatmul.mubr.bf16.gmra.mrb[0].mxu0 %v1372
      %v2078 = vpop.f32.mrb[0].mxu0
      %v2079 = vadd.f32 %v2014, %v2078
      %v2080 = vpop.f32.mrb[0].mxu0
      %v2081 = vpop.f32.mrb[0].mxu0
      %v2082 = vadd.f32 %v2017, %v2081
      %v2083 = vpop.f32.mrb[0].mxu0
      %2084 = vdwg.mxu0
      %2085 = vmatprep.subr.bf16.mxu0 0
      %2086 = vmatpush1.bf16.msra.mxu0 %v1843
      %2087 = vmatprep.subr.bf16.mxu0 0
      %2088 = vmatpush1.bf16.msra.mxu0 %v1844
      %2089 = vmatprep.subr.bf16.mxu0 0
      %2090 = vmatpush1.bf16.msra.mxu0 %v1845
      %2091 = vmatprep.subr.bf16.mxu0 0
      %2092 = vmatpush1.bf16.msra.mxu0 %v1846
      %2093 = vmatprep.subr.bf16.mxu0 0
      %2094 = vmatpush1.bf16.msra.mxu0 %v1847
      %2095 = vmatprep.subr.bf16.mxu0 0
      %2096 = vmatpush1.bf16.msra.mxu0 %v1848
      %2097 = vmatprep.subr.bf16.mxu0 0
      %2098 = vmatpush1.bf16.msra.mxu0 %v1849
      %2099 = vmatprep.subr.bf16.mxu0 0
      %2100 = vmatpush1.bf16.msra.mxu0 %v1850
      %2101 = vmatprep.subr.bf16.mxu0 0
      %2102 = vmatpush1.bf16.msra.mxu0 %v1851
      %2103 = vmatprep.subr.bf16.mxu0 0
      %2104 = vmatpush1.bf16.msra.mxu0 %v1852
      %2105 = vmatprep.subr.bf16.mxu0 0
      %2106 = vmatpush1.bf16.msra.mxu0 %v1853
      %2107 = vmatprep.subr.bf16.mxu0 0
      %2108 = vmatpush1.bf16.msra.mxu0 %v1854
      %2109 = vmatprep.subr.bf16.mxu0 0
      %2110 = vmatpush1.bf16.msra.mxu0 %v1855
      %2111 = vmatprep.subr.bf16.mxu0 0
      %2112 = vmatpush1.bf16.msra.mxu0 %v1856
      %2113 = vmatprep.subr.bf16.mxu0 0
      %2114 = vmatpush1.bf16.msra.mxu0 %v1857
      %2115 = vmatprep.subr.bf16.mxu0 0
      %2116 = vmatpush1.bf16.msra.mxu0 %v1858
      %2117 = vmatprep.mubr.bf16.mxu0 %v1348
      %2118 = vmatmul.mubr.bf16.gmra.mrb[0].mxu0 %v1347
      %v2119 = vpop.f32.mrb[0].mxu0
      %v2120 = vadd.f32 %v2055, %v2119
      %v2121 = vpop.f32.mrb[0].mxu0
      %v2122 = vpop.f32.mrb[0].mxu0
      %v2123 = vadd.f32 %v2058, %v2122
      %v2124 = vpop.f32.mrb[0].mxu0
      %2125 = vmatprep.mubr.bf16.mxu0 %v1357
      %2126 = vmatmul.mubr.bf16.gmra.mrb[0].mxu0 %v1356
      %v2127 = vpop.f32.mrb[0].mxu0
      %v2128 = vadd.f32 %v2063, %v2127
      %v2129 = vpop.f32.mrb[0].mxu0
      %v2130 = vpop.f32.mrb[0].mxu0
      %v2131 = vadd.f32 %v2066, %v2130
      %v2132 = vpop.f32.mrb[0].mxu0
      %2133 = vmatprep.mubr.bf16.mxu0 %v1366
      %2134 = vmatmul.mubr.bf16.gmra.mrb[0].mxu0 %v1365
      %v2135 = vpop.f32.mrb[0].mxu0
      %v2136 = vadd.f32 %v2071, %v2135
      %v2137 = vpop.f32.mrb[0].mxu0
      %v2138 = vpop.f32.mrb[0].mxu0
      %v2139 = vadd.f32 %v2074, %v2138
      %v2140 = vpop.f32.mrb[0].mxu0
      %2141 = vmatprep.mubr.bf16.mxu0 %v1375
      %2142 = vmatmul.mubr.bf16.gmra.mrb[0].mxu0 %v1374
      %v2143 = vpop.f32.mrb[0].mxu0
      %v2144 = vadd.f32 %v2079, %v2143
      %v2145 = vpop.f32.mrb[0].mxu0
      %v2146 = vpop.f32.mrb[0].mxu0
      %v2147 = vadd.f32 %v2082, %v2146
      %v2148 = vpop.f32.mrb[0].mxu0
      %2149 = vdwg.mxu0
      %2150 = vmatprep.subr.bf16.mxu0 0
      %2151 = vmatpush1.bf16.msra.mxu0 %v1859
      %2152 = vmatprep.subr.bf16.mxu0 0
      %2153 = vmatpush1.bf16.msra.mxu0 %v1860
      %2154 = vmatprep.subr.bf16.mxu0 0
      %2155 = vmatpush1.bf16.msra.mxu0 %v1861
      %2156 = vmatprep.subr.bf16.mxu0 0
      %2157 = vmatpush1.bf16.msra.mxu0 %v1862
      %2158 = vmatprep.subr.bf16.mxu0 0
      %2159 = vmatpush1.bf16.msra.mxu0 %v1863
      %2160 = vmatprep.subr.bf16.mxu0 0
      %2161 = vmatpush1.bf16.msra.mxu0 %v1864
      %2162 = vmatprep.subr.bf16.mxu0 0
      %2163 = vmatpush1.bf16.msra.mxu0 %v1865
      %2164 = vmatprep.subr.bf16.mxu0 0
      %2165 = vmatpush1.bf16.msra.mxu0 %v1866
      %2166 = vmatprep.subr.bf16.mxu0 0
      %2167 = vmatpush1.bf16.msra.mxu0 %v1867
      %2168 = vmatprep.subr.bf16.mxu0 0
      %2169 = vmatpush1.bf16.msra.mxu0 %v1868
      %2170 = vmatprep.subr.bf16.mxu0 0
      %2171 = vmatpush1.bf16.msra.mxu0 %v1869
      %2172 = vmatprep.subr.bf16.mxu0 0
      %2173 = vmatpush1.bf16.msra.mxu0 %v1870
      %2174 = vmatprep.subr.bf16.mxu0 0
      %2175 = vmatpush1.bf16.msra.mxu0 %v1871
      %2176 = vmatprep.subr.bf16.mxu0 0
      %2177 = vmatpush1.bf16.msra.mxu0 %v1872
      %2178 = vmatprep.subr.bf16.mxu0 0
      %2179 = vmatpush1.bf16.msra.mxu0 %v1873
      %2180 = vmatprep.subr.bf16.mxu0 0
      %2181 = vmatpush1.bf16.msra.mxu0 %v1874
      %2182 = vmatprep.mubr.bf16.mxu0 %v1350
      %2183 = vmatmul.mubr.bf16.gmra.mrb[0].mxu0 %v1349
      %v2184 = vpop.f32.mrb[0].mxu0
      %v2185 = vadd.f32 %v2120, %v2184
      %v2186 = vpop.f32.mrb[0].mxu0
      %v2187 = vpop.f32.mrb[0].mxu0
      %v2188 = vadd.f32 %v2123, %v2187
      %v2189 = vpop.f32.mrb[0].mxu0
      %2190 = vmatprep.mubr.bf16.mxu0 %v1359
      %2191 = vmatmul.mubr.bf16.gmra.mrb[0].mxu0 %v1358
      %v2192 = vpop.f32.mrb[0].mxu0
      %v2193 = vadd.f32 %v2128, %v2192
      %v2194 = vpop.f32.mrb[0].mxu0
      %v2195 = vpop.f32.mrb[0].mxu0
      %v2196 = vadd.f32 %v2131, %v2195
      %v2197 = vpop.f32.mrb[0].mxu0
      %2198 = vmatprep.mubr.bf16.mxu0 %v1368
      %2199 = vmatmul.mubr.bf16.gmra.mrb[0].mxu0 %v1367
      %v2200 = vpop.f32.mrb[0].mxu0
      %v2201 = vadd.f32 %v2136, %v2200
      %v2202 = vpop.f32.mrb[0].mxu0
      %v2203 = vpop.f32.mrb[0].mxu0
      %v2204 = vadd.f32 %v2139, %v2203
      %v2205 = vpop.f32.mrb[0].mxu0
      %2206 = vmatprep.mubr.bf16.mxu0 %v1377
      %2207 = vmatmul.mubr.bf16.gmra.mrb[0].mxu0 %v1376
      %v2208 = vpop.f32.mrb[0].mxu0
      %v2209 = vadd.f32 %v2144, %v2208
      %v2210 = vpop.f32.mrb[0].mxu0
      %v2211 = vpop.f32.mrb[0].mxu0
      %v2212 = vadd.f32 %v2147, %v2211
      %v2213 = vpop.f32.mrb[0].mxu0
      %2214 = vdwg.mxu0
      %2215 = vmatprep.subr.bf16.mxu0 0
      %2216 = vmatpush1.bf16.msra.mxu0 %v1875
      %2217 = vmatprep.subr.bf16.mxu0 0
      %2218 = vmatpush1.bf16.msra.mxu0 %v1876
      %2219 = vmatprep.subr.bf16.mxu0 0
      %2220 = vmatpush1.bf16.msra.mxu0 %v1877
      %2221 = vmatprep.subr.bf16.mxu0 0
      %2222 = vmatpush1.bf16.msra.mxu0 %v1878
      %2223 = vmatprep.subr.bf16.mxu0 0
      %2224 = vmatpush1.bf16.msra.mxu0 %v1879
      %2225 = vmatprep.subr.bf16.mxu0 0
      %2226 = vmatpush1.bf16.msra.mxu0 %v1880
      %2227 = vmatprep.subr.bf16.mxu0 0
      %2228 = vmatpush1.bf16.msra.mxu0 %v1881
      %2229 = vmatprep.subr.bf16.mxu0 0
      %2230 = vmatpush1.bf16.msra.mxu0 %v1882
      %2231 = vmatprep.subr.bf16.mxu0 0
      %2232 = vmatpush1.bf16.msra.mxu0 0
      %2233 = vmatprep.subr.bf16.mxu0 0
      %2234 = vmatpush1.bf16.msra.mxu0 0
      %2235 = vmatprep.subr.bf16.mxu0 0
      %2236 = vmatpush1.bf16.msra.mxu0 0
      %2237 = vmatprep.subr.bf16.mxu0 0
      %2238 = vmatpush1.bf16.msra.mxu0 0
      %2239 = vmatprep.subr.bf16.mxu0 0
      %2240 = vmatpush1.bf16.msra.mxu0 0
      %2241 = vmatprep.subr.bf16.mxu0 0
      %2242 = vmatpush1.bf16.msra.mxu0 0
      %2243 = vmatprep.subr.bf16.mxu0 0
      %2244 = vmatpush1.bf16.msra.mxu0 0
      %2245 = vmatprep.subr.bf16.mxu0 0
      %2246 = vmatpush1.bf16.msra.mxu0 0
      %2247 = vmatprep.mubr.bf16.mxu0 0
      %2248 = vmatmul.mubr.bf16.gmra.mrb[0].mxu0 %v1351
      %v2249 = vpop.f32.mrb[0].mxu0
      %v2250 = vadd.f32 %v2185, %v2249
      %v2251 = vpop.f32.mrb[0].mxu0
      %v2252 = vpop.f32.mrb[0].mxu0
      %v2253 = vadd.f32 %v2188, %v2252
      %v2254 = vpop.f32.mrb[0].mxu0
      %2255 = vmatprep.mubr.bf16.mxu0 0
      %2256 = vmatmul.mubr.bf16.gmra.mrb[0].mxu0 %v1360
      %v2257 = vpop.f32.mrb[0].mxu0
      %v2258 = vadd.f32 %v2193, %v2257
      %v2259 = vpop.f32.mrb[0].mxu0
      %v2260 = vpop.f32.mrb[0].mxu0
      %v2261 = vadd.f32 %v2196, %v2260
      %v2262 = vpop.f32.mrb[0].mxu0
      %2263 = vmatprep.mubr.bf16.mxu0 0
      %2264 = vmatmul.mubr.bf16.gmra.mrb[0].mxu0 %v1369
      %v2265 = vpop.f32.mrb[0].mxu0
      %v2266 = vadd.f32 %v2201, %v2265
      %v2267 = vpop.f32.mrb[0].mxu0
      %v2268 = vpop.f32.mrb[0].mxu0
      %v2269 = vadd.f32 %v2204, %v2268
      %v2270 = vpop.f32.mrb[0].mxu0
      %2271 = vmatprep.mubr.bf16.mxu0 0
      %2272 = vmatmul.mubr.bf16.gmra.mrb[0].mxu0 %v1378
      %v2273 = vpop.f32.mrb[0].mxu0
      %v2274 = vadd.f32 %v2209, %v2273
      %v2275 = vpop.f32.mrb[0].mxu0
      %v2276 = vpop.f32.mrb[0].mxu0
      %v2277 = vadd.f32 %v2212, %v2276
      %v2278 = vpop.f32.mrb[0].mxu0
      %2279 = vdwg.mxu0
      %v2280 = vpack.c.bf16 %v2253, %v2250
      %v2281 = vpack.c.bf16 %v2261, %v2258
      %v2282 = vpack.c.bf16 %v2269, %v2266
      %v2283 = vpack.c.bf16 %v2277, %v2274
      %v2288 = vunpack.c.l.b16 %v2280
      %v2289 = vunpack.c.h.b16 %v2280
      %v2290 = vunpack.c.l.b16 %v2281
      %v2291 = vunpack.c.h.b16 %v2281
      %v2292 = vunpack.c.l.b16 %v2282
      %v2293 = vunpack.c.h.b16 %v2282
      %v2294 = vunpack.c.l.b16 %v2283
      %v2295 = vunpack.c.h.b16 %v2283
      %v2296 = vpack.c.b16 %v2288, %v2288
      %v2297 = vpack.c.b16 %v2289, %v2289
      %v2298 = vpack.c.b16 %v2290, %v2290
      %v2299 = vpack.c.b16 %v2291, %v2291
      %v2300 = vpack.c.b16 %v2292, %v2292
      %v2301 = vpack.c.b16 %v2293, %v2293
      %v2302 = vpack.c.b16 %v2294, %v2294
      %v2303 = vpack.c.b16 %v2295, %v2295
      %2312 = vst [vmem:[%s258] sm:$0xf] %v2296
      %2313 = vst [vmem:[%s258 + $0x4] sm:$0xf] %v2297
      %2314 = vst [vmem:[%s258 + $0x8] sm:$0xf] %v2298
      %2315 = vst [vmem:[%s258 + $0xc] sm:$0xf] %v2299
      %2316 = vst [vmem:[%s258 + $0x10] sm:$0xf] %v2300
      %2317 = vst [vmem:[%s258 + $0x14] sm:$0xf] %v2301
      %2318 = vst [vmem:[%s258 + $0x18] sm:$0xf] %v2302
      %2319 = vst [vmem:[%s258 + $0x1c] sm:$0xf] %v2303
      %v2320 = vadd.f32 %v2250, %v2253
      %v2321 = vadd.f32 %v2320, %v2258
      %v2322 = vadd.f32 %v2321, %v2261
      %v2323 = vadd.f32 %v2322, %v2266
      %v2324 = vadd.f32 %v2323, %v2269
      %v2325 = vadd.f32 %v2324, %v2274
      %v2326 = vadd.f32 %v2325, %v2277
      %v2327 = vrot.slane %v2326, 4
      %v2328 = vadd.f32 %v2326, %v2327
      %v2329 = vrot.slane %v2328, 2
      %v2330 = vadd.f32 %v2328, %v2329
      %v2331 = vrot.slane %v2330, 1
      %v2332 = vadd.f32 %v2330, %v2331
      %v2333 = vmul.f32 %v2250, %v2250
      %v2334 = vmul.f32 %v2253, %v2253
      %v2335 = vmul.f32 %v2258, %v2258
      %v2336 = vmul.f32 %v2261, %v2261
      %v2337 = vmul.f32 %v2266, %v2266
      %v2338 = vmul.f32 %v2269, %v2269
      %v2339 = vmul.f32 %v2274, %v2274
      %v2340 = vmul.f32 %v2277, %v2277
      %v2341 = vadd.f32 %v2333, %v2334
      %v2342 = vadd.f32 %v2341, %v2335
      %v2343 = vadd.f32 %v2342, %v2336
      %v2344 = vadd.f32 %v2343, %v2337
      %v2345 = vadd.f32 %v2344, %v2338
      %v2346 = vadd.f32 %v2345, %v2339
      %v2347 = vadd.f32 %v2346, %v2340
      %v2348 = vrot.slane %v2347, 4
      %v2349 = vadd.f32 %v2347, %v2348
      %v2350 = vrot.slane %v2349, 2
      %v2351 = vadd.f32 %v2349, %v2350
      %v2352 = vrot.slane %v2351, 1
      %v2353 = vadd.f32 %v2351, %v2352
      %vm2354 = vcmask 1040384
      %v2355 = vsel %vm2354, %v2332, %v2353
      %2356 = vst [vmem:[%s266] sm:$0x3] %v2355
      %s2357 = smul.u32 8, %s22
      %p2358 = scmp.lt.s32.totalorder %s21, 1
      %s2359 = scalar_select %p2358, %s21, 1
      %p2360 = scmp.lt.s32.totalorder %s2357, 7
      %s2361 = scalar_select %p2360, %s2357, 7
      %s2362 = smul.addr %s2359, 8
      %s2363 = sadd.s32 %s2361, %s2362
      %s2364 = smul.addr %s2363, 4
      %s2365 = scalar_lea.vmem %s4, %s2364
      %p2366 = scmp.lt.s32.totalorder %s21, 1
      %s2367 = scalar_select %p2366, %s21, 1
      %p2368 = scmp.lt.s32.totalorder %s22, 0
      %s2369 = scalar_select %p2368, %s22, 0
      %s2370 = sadd.s32 %s2369, %s2367
      %s2371 = smul.addr %s2370, 2
      %s2372 = scalar_lea.vmem %s5, %s2371
      // Predicated region
      $region41: #{basic_block_forward.5} parent=35 // pred_check
        %p2373 = pneg %p138
      $region42: #{basic_block_forward.5} parent=35 // pred_check_branch
        %2375 = sbr.rel (%p2373) target = $region44
      $region43: #{basic_block_forward.5} parent=35 // pred_region
        %s2376 = smul.u32 8, %s22
      $region44: #{basic_block_forward.5} parent=35 // pred_fallthru
        _
      // Predicated region
      $region45: #{basic_block_forward.5} parent=35 // pred_check
        %p2377 = pneg %p166
      $region46: #{basic_block_forward.5} parent=35 // pred_check_branch
        %2379 = sbr.rel (%p2377) target = $region48
      $region47: #{basic_block_forward.5} parent=35 // pred_region
        _
      $region48: #{basic_block_forward.5} parent=35 // pred_fallthru
        _
    $region36: #{basic_block_forward.5} parent=5 // pred_fallthru
      _
    %p2380 = scmp.le.s32.totalorder 2, %s12
    // Predicated region
    $region49: #{basic_block_forward.5} parent=5 // pred_check
      %p2381 = pneg %p2380
    $region50: #{basic_block_forward.5} parent=5 // pred_check_branch
      %2383 = sbr.rel (%p2381) target = $region52
    $region51: #{basic_block_forward.5} parent=5 // pred_region
      %s2384 = ssub.s32 %s12, 2
      // Predicated region
      $region53: #{basic_block_forward.5} parent=51 // pred_check
        %p2385 = pneg %p144
      $region54: #{basic_block_forward.5} parent=51 // pred_check_branch
        %2387 = sbr.rel (%p2385) target = $region56
      $region55: #{basic_block_forward.5} parent=51 // pred_region
        %s2388 = smul.u32 8, %s24
        %p2389 = scmp.lt.s32.totalorder %s23, 1
        %s2390 = scalar_select %p2389, %s23, 1
        %p2391 = scmp.lt.s32.totalorder %s2388, 7
        %s2392 = scalar_select %p2391, %s2388, 7
        %s2393 = smul.addr %s2390, 8
        %s2394 = sadd.s32 %s2392, %s2393
        %s2395 = smul.addr %s2394, 4
        %s2396 = scalar_lea.vmem %s4, %s2395
      $region56: #{basic_block_forward.5} parent=51 // pred_fallthru
        _
      // Predicated region
      $region57: #{basic_block_forward.5} parent=51 // pred_check
        %p2397 = pneg %p172
      $region58: #{basic_block_forward.5} parent=51 // pred_check_branch
        %2399 = sbr.rel (%p2397) target = $region60
      $region59: #{basic_block_forward.5} parent=51 // pred_region
        %p2400 = scmp.lt.s32.totalorder %s23, 1
        %s2401 = scalar_select %p2400, %s23, 1
        %p2402 = scmp.lt.s32.totalorder %s24, 0
        %s2403 = scalar_select %p2402, %s24, 0
        %s2404 = sadd.s32 %s2403, %s2401
        %s2405 = smul.addr %s2404, 2
        %s2406 = scalar_lea.vmem %s5, %s2405
      $region60: #{basic_block_forward.5} parent=51 // pred_fallthru
        _
    $region52: #{basic_block_forward.5} parent=5 // pred_fallthru
      _
  $region6: #{basic_block_forward.5} parent=0 // loop_footer
    %s16 = sadd.s32 1, %s12
  $region7: #{basic_block_forward.5} parent=0 // loop_footer_branch
    %11 = sbr.rel target = $region3
  $region8: #{basic_block_forward.5} parent=0 // loop_exit
    _

</llo_original>
